<compile_context>
chip_gen: v6e
topology: v6e:2x2x1
jax: 0.10.0
libtpu: 0.0.40
codegen_flags: <defaults>
</compile_context>

<pallas_src>
import functools

import jax
import jax.numpy as jnp
import numpy as np
from jax import lax
from jax.experimental import pallas as pl
from jax.experimental.pallas import tpu as pltpu


# ----------------------------- Pallas kernel --------------------------------
def _lstm_recurrence_kernel(gi_ref, sl_ref, whh_ref, feats_ref, h_sc, c_sc,
                            *, hidden_dim, chunk):
    """One grid step == `chunk` timesteps of the serial LSTM recurrence.

    gi_ref:    (chunk, B, 4H) bf16   precomputed x @ W_ih^T + b for these timesteps
    sl_ref:    (B, 1) int32          per-sample valid sequence lengths
    whh_ref:   (H, 4H) bf16          recurrent weight, transposed
    feats_ref: (B, H) f32            output (= ht), written on the last grid step
    h_sc/c_sc: (B, H) f32 VMEM       state carried across chunks
    """
    step = pl.program_id(0)

    @pl.when(step == 0)
    def _init():
        h_sc[...] = jnp.zeros_like(h_sc)
        c_sc[...] = jnp.zeros_like(c_sc)

    H = hidden_dim
    whh = whh_ref[...]                      # (H, 4H) bf16, hoisted out of the loop
    rem = sl_ref[...] - step * chunk        # (B, 1) int32: valid steps left in chunk

    def body(i, carry):
        h, c = carry                        # carried as vreg values, f32
        # gates = gates_in[t] + h @ W_hh^T  -> (B, 4H), f32 accumulation on the MXU
        gates = gi_ref[i].astype(jnp.float32) + jnp.dot(
            h.astype(jnp.bfloat16), whh, preferred_element_type=jnp.float32)
        i_g = jax.nn.sigmoid(gates[:, 0 * H:1 * H])   # input gate
        f_g = jax.nn.sigmoid(gates[:, 1 * H:2 * H])   # forget gate
        g_g = jnp.tanh(gates[:, 2 * H:3 * H])         # cell candidate
        o_g = jax.nn.sigmoid(gates[:, 3 * H:4 * H])   # output gate
        c_new = f_g * c + i_g * g_g
        h_new = o_g * jnp.tanh(c_new)
        # packed-sequence masking: only advance state while t < seq_len[b]
        mask = i < rem                                # (B, 1) bool
        return jnp.where(mask, h_new, h), jnp.where(mask, c_new, c)

    # TODO(synk): at large B, split the (H,4H) matmul into four (H,H) matmuls and
    #             apply each nonlinearity immediately to cut vreg pressure.
    h, c = lax.fori_loop(0, chunk, body, (h_sc[...], c_sc[...]), unroll=True)

    # spill state to scratch only once per chunk
    h_sc[...] = h
    c_sc[...] = c

    @pl.when(step == pl.num_programs(0) - 1)
    def _finalize():
        feats_ref[...] = h


# ------------------------------ wrapper --------------------------------------
def lstm_forward(x, seq_lengths, params, *, chunk=None):
    """x: (B, T, D) f32, seq_lengths: (B,) int. Returns (scores (B,C), feats (B,H))."""
    B, T, D = x.shape
    H = params["whh_t"].shape[0]

    # (0) Pad batch to a full sublane group (multiple of 8); pad rows have length 0
    #     so their state stays zero and is sliced off at the end.
    Bp = max(8, ((B + 7) // 8) * 8)
    sl = seq_lengths.astype(jnp.int32)
    if Bp != B:
        x = jnp.pad(x, ((0, Bp - B), (0, 0), (0, 0)))
        sl = jnp.pad(sl, (0, Bp - B))
    sl = sl.reshape(Bp, 1)

    # (1) Input projection hoisted out of the recurrence. Transpose the SMALL x to
    #     time-major first, then one big GEMM; emit the streamed tensor in bf16.
    xt = jnp.transpose(x, (1, 0, 2))                                   # (T, Bp, D)
    gi = (xt.reshape(T * Bp, D) @ params["wih_t"] + params["b"])
    gi = gi.reshape(T, Bp, 4 * H).astype(jnp.bfloat16)                 # (T, Bp, 4H) bf16

    # (2) Chunk the time axis. Cap so the double-buffered bf16 gi block stays far
    #     below the v7x scoped-VMEM budget; pad T up to a multiple of the chunk.
    if chunk is None:
        per_buf_budget = 4 * 1024 * 1024                               # bytes, x2 buffers
        max_chunk = max(1, per_buf_budget // (Bp * 4 * H * 2))
        chunk = min(T, 64, max_chunk)
    chunk = max(1, min(chunk, T))
    n_chunks = pl.cdiv(T, chunk)
    Tp = n_chunks * chunk
    if Tp != T:
        # padded steps are masked out by (t < seq_len); state is frozen there
        gi = jnp.pad(gi, ((0, Tp - T), (0, 0), (0, 0)))

    whh_bf16 = params["whh_t"].astype(jnp.bfloat16)                    # (H, 4H)

    kernel = functools.partial(_lstm_recurrence_kernel, hidden_dim=H, chunk=chunk)

    feats_p = pl.pallas_call(
        kernel,
        out_shape=jax.ShapeDtypeStruct((Bp, H), jnp.float32),
        grid=(n_chunks,),
        in_specs=[
            pl.BlockSpec((chunk, Bp, 4 * H), lambda s: (s, 0, 0)),     # gi chunk (bf16)
            pl.BlockSpec((Bp, 1), lambda s: (0, 0)),                   # seq_lengths
            pl.BlockSpec((H, 4 * H), lambda s: (0, 0)),                # W_hh^T (bf16)
        ],
        out_specs=pl.BlockSpec((Bp, H), lambda s: (0, 0)),             # feats (= ht)
        scratch_shapes=[
            pltpu.VMEM((Bp, H), jnp.float32),                          # h state
            pltpu.VMEM((Bp, H), jnp.float32),                          # c state
        ],
        compiler_params=pltpu.CompilerParams(
            dimension_semantics=("arbitrary",),                        # time is sequential
            vmem_limit_bytes=32 * 1024 * 1024),
    )(gi, sl, whh_bf16)

    feats = feats_p[:B]
    # (3) Dense head + sigmoid moved to the wrapper (noise-level compute).
    scores = jax.nn.sigmoid(feats @ params["wd_t"] + params["bd"])
    return scores, feats


# --------------------------- pure-JAX reference ------------------------------
def lstm_reference(x, seq_lengths, params, *, match_kernel_dtypes=True):
    """Module-semantics reference. With match_kernel_dtypes=True it mirrors the
    kernel's bf16 streaming/matmul quantization (for a tight correctness check)."""
    B, T, D = x.shape
    H = params["whh_t"].shape[0]

    gi = x @ params["wih_t"] + params["b"]                             # (B, T, 4H)
    whh = params["whh_t"]
    if match_kernel_dtypes:
        gi = gi.astype(jnp.bfloat16).astype(jnp.float32)
        whh = whh.astype(jnp.bfloat16)

    h0 = jnp.zeros((B, H), jnp.float32)
    c0 = jnp.zeros((B, H), jnp.float32)

    def step(carry, t):
        h, c = carry
        gates = gi[:, t, :] + jnp.dot(h.astype(whh.dtype), whh,
                                      preferred_element_type=jnp.float32)
        i_g = jax.nn.sigmoid(gates[:, 0 * H:1 * H])
        f_g = jax.nn.sigmoid(gates[:, 1 * H:2 * H])
        g_g = jnp.tanh(gates[:, 2 * H:3 * H])
        o_g = jax.nn.sigmoid(gates[:, 3 * H:4 * H])
        c_new = f_g * c + i_g * g_g
        h_new = o_g * jnp.tanh(c_new)
        mask = (t < seq_lengths)[:, None]
        return (jnp.where(mask, h_new, h), jnp.where(mask, c_new, c)), None

    (h, _), _ = lax.scan(step, (h0, c0), jnp.arange(T))
    feats = h
    scores = jax.nn.sigmoid(feats @ params["wd_t"] + params["bd"])
    return scores, feats


# ----------------------------- parameter init --------------------------------
def init_params(key, input_dim, hidden_dim, num_classes):
    k1, k2, k3 = jax.random.split(key, 3)
    # nn.init.xavier_uniform_ on weight_ih_l0 (4H, D)
    w_ih = jax.nn.initializers.glorot_uniform()(k1, (4 * hidden_dim, input_dim), jnp.float32)
    # nn.init.orthogonal_ on weight_hh_l0 (4H, H)
    w_hh = jax.nn.initializers.orthogonal()(k2, (4 * hidden_dim, hidden_dim), jnp.float32)
    # nn.init.xavier_uniform_ on dense weight (C, H), zeros bias
    w_d = jax.nn.initializers.glorot_uniform()(k3, (num_classes, hidden_dim), jnp.float32)
    return {
        "wih_t": jnp.asarray(w_ih.T),                                  # (D, 4H)
        "whh_t": jnp.asarray(w_hh.T),                                  # (H, 4H)
        "b": jnp.zeros((1, 4 * hidden_dim), jnp.float32),              # b_ih + b_hh (zeros)
        "wd_t": jnp.asarray(w_d.T),                                    # (H, C)
        "bd": jnp.zeros((1, num_classes), jnp.float32),
    }


# --------------------------------- main ---------------------------------------
if __name__ == "__main__":
    # Module-consistent small shapes: input_dim=76 and hidden_dim=128 are the defaults.
    B, T, D, H, C = 4, 16, 76, 128, 1

    key = jax.random.PRNGKey(0)
    k_param, k_x = jax.random.split(key)
    params = init_params(k_param, input_dim=D, hidden_dim=H, num_classes=C)

    x = jax.random.normal(k_x, (B, T, D), dtype=jnp.float32)
    seq_lengths = jnp.array([16, 11, 7, 13], dtype=jnp.int32)   # per-sample valid lengths

    scores, feats = lstm_forward(x, seq_lengths, params)
    jax.block_until_ready((scores, feats))

    # Tight check vs a reference that mirrors the kernel's bf16 streaming/matmul dtypes.
    s_m, f_m = lstm_reference(x, seq_lengths, params, match_kernel_dtypes=True)
    np.testing.assert_allclose(np.asarray(feats), np.asarray(f_m), rtol=5e-3, atol=5e-3)
    np.testing.assert_allclose(np.asarray(scores), np.asarray(s_m), rtol=5e-3, atol=5e-3)

    # Loose sanity check vs full-f32 module semantics (bf16 streaming tolerance).
    s_f, f_f = lstm_reference(x, seq_lengths, params, match_kernel_dtypes=False)
    np.testing.assert_allclose(np.asarray(feats), np.asarray(f_f), rtol=5e-2, atol=5e-2)
    np.testing.assert_allclose(np.asarray(scores), np.asarray(s_f), rtol=5e-2, atol=5e-2)

    assert scores.shape == (B, C) and feats.shape == (B, H)
    print("KERNEL_OK")
</pallas_src>

<mosaic_0001>
module attributes {stable_mosaic.version = 11 : i64} {
  func.func @_lstm_recurrence_kernel(%arg0: i32, %arg1: memref<16x8x512xbf16, #tpu.memory_space<vmem>>, %arg2: memref<8x1xi32, #tpu.memory_space<vmem>>, %arg3: memref<128x512xbf16, #tpu.memory_space<vmem>>, %arg4: memref<8x128xf32, #tpu.memory_space<vmem>>, %arg5: memref<8x128xf32, #tpu.memory_space<vmem>>, %arg6: memref<8x128xf32, #tpu.memory_space<vmem>>) attributes {dimension_semantics = [#tpu.dimension_semantics<arbitrary>], iteration_bounds = array<i64: 1>, scalar_prefetch = 0 : i64, scratch_operands = 2 : i64, tpu.core_type = #tpu.core_type<tc>, window_params = [{transform_indices = @transform_0, window_bounds = array<i64: 16, 8, 512>}, {pipeline_mode = #tpu.pipeline_mode<synchronous>, transform_indices = @transform_1, window_bounds = array<i64: 8, 1>}, {pipeline_mode = #tpu.pipeline_mode<synchronous>, transform_indices = @transform_2, window_bounds = array<i64: 128, 512>}, {pipeline_mode = #tpu.pipeline_mode<synchronous>, transform_indices = @transform_3, window_bounds = array<i64: 8, 128>}]} {
    %c0_i32 = arith.constant 0 : i32
    %0 = arith.cmpi eq, %arg0, %c0_i32 : i32
    %1 = arith.extui %0 : i1 to i32
    %c0_i32_0 = arith.constant 0 : i32
    %2 = arith.cmpi ne, %1, %c0_i32_0 : i32
    scf.if %2 {
      %cst_111 = arith.constant 0.000000e+00 : f32
      %655 = vector.broadcast %cst_111 : f32 to vector<8x128xf32>
      %c0_112 = arith.constant 0 : index
      %c0_113 = arith.constant 0 : index
      %656 = vector.load %arg5[%c0_112, %c0_113] : memref<8x128xf32, #tpu.memory_space<vmem>>, vector<8x128xf32>
      tpu.vector_store %arg5[%c0_112, %c0_113], %655 {strides = array<i32>} : memref<8x128xf32, #tpu.memory_space<vmem>>, vector<8x128xf32>,
      %cst_114 = arith.constant 0.000000e+00 : f32
      %657 = vector.broadcast %cst_114 : f32 to vector<8x128xf32>
      %c0_115 = arith.constant 0 : index
      %c0_116 = arith.constant 0 : index
      %658 = vector.load %arg6[%c0_115, %c0_116] : memref<8x128xf32, #tpu.memory_space<vmem>>, vector<8x128xf32>
      tpu.vector_store %arg6[%c0_115, %c0_116], %657 {strides = array<i32>} : memref<8x128xf32, #tpu.memory_space<vmem>>, vector<8x128xf32>,
    } else {
    }
    %c0 = arith.constant 0 : index
    %c0_1 = arith.constant 0 : index
    %3 = vector.load %arg3[%c0, %c0_1] : memref<128x512xbf16, #tpu.memory_space<vmem>>, vector<128x512xbf16>
    %c0_2 = arith.constant 0 : index
    %c0_3 = arith.constant 0 : index
    %4 = vector.load %arg2[%c0_2, %c0_3] : memref<8x1xi32, #tpu.memory_space<vmem>>, vector<8x1xi32>
    %c16_i32 = arith.constant 16 : i32
    %5 = arith.muli %arg0, %c16_i32 : i32
    %6 = vector.broadcast %5 : i32 to vector<8x1xi32>
    %7 = arith.subi %4, %6 : vector<8x1xi32>
    %c0_4 = arith.constant 0 : index
    %c0_5 = arith.constant 0 : index
    %8 = vector.load %arg5[%c0_4, %c0_5] : memref<8x128xf32, #tpu.memory_space<vmem>>, vector<8x128xf32>
    %c0_6 = arith.constant 0 : index
    %c0_7 = arith.constant 0 : index
    %9 = vector.load %arg6[%c0_6, %c0_7] : memref<8x128xf32, #tpu.memory_space<vmem>>, vector<8x128xf32>
    %c0_i32_8 = arith.constant 0 : i32
    %10 = arith.index_cast %c0_i32_8 : i32 to index
    %c0_9 = arith.constant 0 : index
    %c0_10 = arith.constant 0 : index
    %11 = vector.load %arg1[%10, %c0_9, %c0_10] : memref<16x8x512xbf16, #tpu.memory_space<vmem>>, vector<1x8x512xbf16>
    %12 = vector.shape_cast %11 : vector<1x8x512xbf16> to vector<8x512xbf16>
    %13 = arith.extf %12 : vector<8x512xbf16> to vector<8x512xf32>
    %14 = arith.truncf %8 : vector<8x128xf32> to vector<8x128xbf16>
    %cst = arith.constant dense<0.000000e+00> : vector<8x512xf32>
    %15 = tpu.matmul %14, %3, %cst {dimension_numbers = #tpu.dot_dimension_numbers<[1], [0], [0], [1], [0, 0, 1, 1], [], []>} : vector<8x128xbf16>, vector<128x512xbf16>, vector<8x512xf32> -> vector<8x512xf32>
    %16 = arith.addf %13, %15 : vector<8x512xf32>
    %17 = vector.extract_strided_slice %16 {offsets = [0, 0], sizes = [8, 128], strides = [1, 1]} : vector<8x512xf32> to vector<8x128xf32>
    %18 = arith.negf %17 : vector<8x128xf32>
    %19 = math.exp %18 : vector<8x128xf32>
    %cst_11 = arith.constant 1.000000e+00 : f32
    %20 = vector.broadcast %cst_11 : f32 to vector<8x128xf32>
    %21 = arith.addf %20, %19 : vector<8x128xf32>
    %22 = arith.divf %20, %21 : vector<8x128xf32>
    %23 = vector.extract_strided_slice %16 {offsets = [0, 128], sizes = [8, 128], strides = [1, 1]} : vector<8x512xf32> to vector<8x128xf32>
    %24 = arith.negf %23 : vector<8x128xf32>
    %25 = math.exp %24 : vector<8x128xf32>
    %cst_12 = arith.constant 1.000000e+00 : f32
    %26 = vector.broadcast %cst_12 : f32 to vector<8x128xf32>
    %27 = arith.addf %26, %25 : vector<8x128xf32>
    %28 = arith.divf %26, %27 : vector<8x128xf32>
    %29 = vector.extract_strided_slice %16 {offsets = [0, 256], sizes = [8, 128], strides = [1, 1]} : vector<8x512xf32> to vector<8x128xf32>
    %30 = math.tanh %29 : vector<8x128xf32>
    %31 = vector.extract_strided_slice %16 {offsets = [0, 384], sizes = [8, 128], strides = [1, 1]} : vector<8x512xf32> to vector<8x128xf32>
    %32 = arith.negf %31 : vector<8x128xf32>
    %33 = math.exp %32 : vector<8x128xf32>
    %cst_13 = arith.constant 1.000000e+00 : f32
    %34 = vector.broadcast %cst_13 : f32 to vector<8x128xf32>
    %35 = arith.addf %34, %33 : vector<8x128xf32>
    %36 = arith.divf %34, %35 : vector<8x128xf32>
    %37 = arith.mulf %28, %9 : vector<8x128xf32>
    %38 = arith.mulf %22, %30 : vector<8x128xf32>
    %39 = arith.addf %37, %38 : vector<8x128xf32>
    %40 = math.tanh %39 : vector<8x128xf32>
    %41 = arith.mulf %36, %40 : vector<8x128xf32>
    %42 = vector.broadcast %c0_i32_8 : i32 to vector<8x1xi32>
    %43 = arith.cmpi slt, %42, %7 : vector<8x1xi32>
    %44 = vector.shape_cast %43 : vector<8x1xi1> to vector<8x1xi1>
    %45 = vector.broadcast %44 : vector<8x1xi1> to vector<8x128xi1>
    %46 = arith.select %45, %41, %8 : vector<8x128xi1>, vector<8x128xf32>
    %47 = vector.shape_cast %43 : vector<8x1xi1> to vector<8x1xi1>
    %48 = vector.broadcast %47 : vector<8x1xi1> to vector<8x128xi1>
    %49 = arith.select %48, %39, %9 : vector<8x128xi1>, vector<8x128xf32>
    %c1_i32 = arith.constant 1 : i32
    %50 = arith.index_cast %c1_i32 : i32 to index
    %c0_14 = arith.constant 0 : index
    %c0_15 = arith.constant 0 : index
    %51 = vector.load %arg1[%50, %c0_14, %c0_15] : memref<16x8x512xbf16, #tpu.memory_space<vmem>>, vector<1x8x512xbf16>
    %52 = vector.shape_cast %51 : vector<1x8x512xbf16> to vector<8x512xbf16>
    %53 = arith.extf %52 : vector<8x512xbf16> to vector<8x512xf32>
    %54 = arith.truncf %46 : vector<8x128xf32> to vector<8x128xbf16>
    %cst_16 = arith.constant dense<0.000000e+00> : vector<8x512xf32>
    %55 = tpu.matmul %54, %3, %cst_16 {dimension_numbers = #tpu.dot_dimension_numbers<[1], [0], [0], [1], [0, 0, 1, 1], [], []>} : vector<8x128xbf16>, vector<128x512xbf16>, vector<8x512xf32> -> vector<8x512xf32>
    %56 = arith.addf %53, %55 : vector<8x512xf32>
    %57 = vector.extract_strided_slice %56 {offsets = [0, 0], sizes = [8, 128], strides = [1, 1]} : vector<8x512xf32> to vector<8x128xf32>
    %58 = arith.negf %57 : vector<8x128xf32>
    %59 = math.exp %58 : vector<8x128xf32>
    %cst_17 = arith.constant 1.000000e+00 : f32
    %60 = vector.broadcast %cst_17 : f32 to vector<8x128xf32>
    %61 = arith.addf %60, %59 : vector<8x128xf32>
    %62 = arith.divf %60, %61 : vector<8x128xf32>
    %63 = vector.extract_strided_slice %56 {offsets = [0, 128], sizes = [8, 128], strides = [1, 1]} : vector<8x512xf32> to vector<8x128xf32>
    %64 = arith.negf %63 : vector<8x128xf32>
    %65 = math.exp %64 : vector<8x128xf32>
    %cst_18 = arith.constant 1.000000e+00 : f32
    %66 = vector.broadcast %cst_18 : f32 to vector<8x128xf32>
    %67 = arith.addf %66, %65 : vector<8x128xf32>
    %68 = arith.divf %66, %67 : vector<8x128xf32>
    %69 = vector.extract_strided_slice %56 {offsets = [0, 256], sizes = [8, 128], strides = [1, 1]} : vector<8x512xf32> to vector<8x128xf32>
    %70 = math.tanh %69 : vector<8x128xf32>
    %71 = vector.extract_strided_slice %56 {offsets = [0, 384], sizes = [8, 128], strides = [1, 1]} : vector<8x512xf32> to vector<8x128xf32>
    %72 = arith.negf %71 : vector<8x128xf32>
    %73 = math.exp %72 : vector<8x128xf32>
    %cst_19 = arith.constant 1.000000e+00 : f32
    %74 = vector.broadcast %cst_19 : f32 to vector<8x128xf32>
    %75 = arith.addf %74, %73 : vector<8x128xf32>
    %76 = arith.divf %74, %75 : vector<8x128xf32>
    %77 = arith.mulf %68, %49 : vector<8x128xf32>
    %78 = arith.mulf %62, %70 : vector<8x128xf32>
    %79 = arith.addf %77, %78 : vector<8x128xf32>
    %80 = math.tanh %79 : vector<8x128xf32>
    %81 = arith.mulf %76, %80 : vector<8x128xf32>
    %82 = vector.broadcast %c1_i32 : i32 to vector<8x1xi32>
    %83 = arith.cmpi slt, %82, %7 : vector<8x1xi32>
    %84 = vector.shape_cast %83 : vector<8x1xi1> to vector<8x1xi1>
    %85 = vector.broadcast %84 : vector<8x1xi1> to vector<8x128xi1>
    %86 = arith.select %85, %81, %46 : vector<8x128xi1>, vector<8x128xf32>
    %87 = vector.shape_cast %83 : vector<8x1xi1> to vector<8x1xi1>
    %88 = vector.broadcast %87 : vector<8x1xi1> to vector<8x128xi1>
    %89 = arith.select %88, %79, %49 : vector<8x128xi1>, vector<8x128xf32>
    %c2_i32 = arith.constant 2 : i32
    %90 = arith.index_cast %c2_i32 : i32 to index
    %c0_20 = arith.constant 0 : index
    %c0_21 = arith.constant 0 : index
    %91 = vector.load %arg1[%90, %c0_20, %c0_21] : memref<16x8x512xbf16, #tpu.memory_space<vmem>>, vector<1x8x512xbf16>
    %92 = vector.shape_cast %91 : vector<1x8x512xbf16> to vector<8x512xbf16>
    %93 = arith.extf %92 : vector<8x512xbf16> to vector<8x512xf32>
    %94 = arith.truncf %86 : vector<8x128xf32> to vector<8x128xbf16>
    %cst_22 = arith.constant dense<0.000000e+00> : vector<8x512xf32>
    %95 = tpu.matmul %94, %3, %cst_22 {dimension_numbers = #tpu.dot_dimension_numbers<[1], [0], [0], [1], [0, 0, 1, 1], [], []>} : vector<8x128xbf16>, vector<128x512xbf16>, vector<8x512xf32> -> vector<8x512xf32>
    %96 = arith.addf %93, %95 : vector<8x512xf32>
    %97 = vector.extract_strided_slice %96 {offsets = [0, 0], sizes = [8, 128], strides = [1, 1]} : vector<8x512xf32> to vector<8x128xf32>
    %98 = arith.negf %97 : vector<8x128xf32>
    %99 = math.exp %98 : vector<8x128xf32>
    %cst_23 = arith.constant 1.000000e+00 : f32
    %100 = vector.broadcast %cst_23 : f32 to vector<8x128xf32>
    %101 = arith.addf %100, %99 : vector<8x128xf32>
    %102 = arith.divf %100, %101 : vector<8x128xf32>
    %103 = vector.extract_strided_slice %96 {offsets = [0, 128], sizes = [8, 128], strides = [1, 1]} : vector<8x512xf32> to vector<8x128xf32>
    %104 = arith.negf %103 : vector<8x128xf32>
    %105 = math.exp %104 : vector<8x128xf32>
    %cst_24 = arith.constant 1.000000e+00 : f32
    %106 = vector.broadcast %cst_24 : f32 to vector<8x128xf32>
    %107 = arith.addf %106, %105 : vector<8x128xf32>
    %108 = arith.divf %106, %107 : vector<8x128xf32>
    %109 = vector.extract_strided_slice %96 {offsets = [0, 256], sizes = [8, 128], strides = [1, 1]} : vector<8x512xf32> to vector<8x128xf32>
    %110 = math.tanh %109 : vector<8x128xf32>
    %111 = vector.extract_strided_slice %96 {offsets = [0, 384], sizes = [8, 128], strides = [1, 1]} : vector<8x512xf32> to vector<8x128xf32>
    %112 = arith.negf %111 : vector<8x128xf32>
    %113 = math.exp %112 : vector<8x128xf32>
    %cst_25 = arith.constant 1.000000e+00 : f32
    %114 = vector.broadcast %cst_25 : f32 to vector<8x128xf32>
    %115 = arith.addf %114, %113 : vector<8x128xf32>
    %116 = arith.divf %114, %115 : vector<8x128xf32>
    %117 = arith.mulf %108, %89 : vector<8x128xf32>
    %118 = arith.mulf %102, %110 : vector<8x128xf32>
    %119 = arith.addf %117, %118 : vector<8x128xf32>
    %120 = math.tanh %119 : vector<8x128xf32>
    %121 = arith.mulf %116, %120 : vector<8x128xf32>
    %122 = vector.broadcast %c2_i32 : i32 to vector<8x1xi32>
    %123 = arith.cmpi slt, %122, %7 : vector<8x1xi32>
    %124 = vector.shape_cast %123 : vector<8x1xi1> to vector<8x1xi1>
    %125 = vector.broadcast %124 : vector<8x1xi1> to vector<8x128xi1>
    %126 = arith.select %125, %121, %86 : vector<8x128xi1>, vector<8x128xf32>
    %127 = vector.shape_cast %123 : vector<8x1xi1> to vector<8x1xi1>
    %128 = vector.broadcast %127 : vector<8x1xi1> to vector<8x128xi1>
    %129 = arith.select %128, %119, %89 : vector<8x128xi1>, vector<8x128xf32>
    %c3_i32 = arith.constant 3 : i32
    %130 = arith.index_cast %c3_i32 : i32 to index
    %c0_26 = arith.constant 0 : index
    %c0_27 = arith.constant 0 : index
    %131 = vector.load %arg1[%130, %c0_26, %c0_27] : memref<16x8x512xbf16, #tpu.memory_space<vmem>>, vector<1x8x512xbf16>
    %132 = vector.shape_cast %131 : vector<1x8x512xbf16> to vector<8x512xbf16>
    %133 = arith.extf %132 : vector<8x512xbf16> to vector<8x512xf32>
    %134 = arith.truncf %126 : vector<8x128xf32> to vector<8x128xbf16>
    %cst_28 = arith.constant dense<0.000000e+00> : vector<8x512xf32>
    %135 = tpu.matmul %134, %3, %cst_28 {dimension_numbers = #tpu.dot_dimension_numbers<[1], [0], [0], [1], [0, 0, 1, 1], [], []>} : vector<8x128xbf16>, vector<128x512xbf16>, vector<8x512xf32> -> vector<8x512xf32>
    %136 = arith.addf %133, %135 : vector<8x512xf32>
    %137 = vector.extract_strided_slice %136 {offsets = [0, 0], sizes = [8, 128], strides = [1, 1]} : vector<8x512xf32> to vector<8x128xf32>
    %138 = arith.negf %137 : vector<8x128xf32>
    %139 = math.exp %138 : vector<8x128xf32>
    %cst_29 = arith.constant 1.000000e+00 : f32
    %140 = vector.broadcast %cst_29 : f32 to vector<8x128xf32>
    %141 = arith.addf %140, %139 : vector<8x128xf32>
    %142 = arith.divf %140, %141 : vector<8x128xf32>
    %143 = vector.extract_strided_slice %136 {offsets = [0, 128], sizes = [8, 128], strides = [1, 1]} : vector<8x512xf32> to vector<8x128xf32>
    %144 = arith.negf %143 : vector<8x128xf32>
    %145 = math.exp %144 : vector<8x128xf32>
    %cst_30 = arith.constant 1.000000e+00 : f32
    %146 = vector.broadcast %cst_30 : f32 to vector<8x128xf32>
    %147 = arith.addf %146, %145 : vector<8x128xf32>
    %148 = arith.divf %146, %147 : vector<8x128xf32>
    %149 = vector.extract_strided_slice %136 {offsets = [0, 256], sizes = [8, 128], strides = [1, 1]} : vector<8x512xf32> to vector<8x128xf32>
    %150 = math.tanh %149 : vector<8x128xf32>
    %151 = vector.extract_strided_slice %136 {offsets = [0, 384], sizes = [8, 128], strides = [1, 1]} : vector<8x512xf32> to vector<8x128xf32>
    %152 = arith.negf %151 : vector<8x128xf32>
    %153 = math.exp %152 : vector<8x128xf32>
    %cst_31 = arith.constant 1.000000e+00 : f32
    %154 = vector.broadcast %cst_31 : f32 to vector<8x128xf32>
    %155 = arith.addf %154, %153 : vector<8x128xf32>
    %156 = arith.divf %154, %155 : vector<8x128xf32>
    %157 = arith.mulf %148, %129 : vector<8x128xf32>
    %158 = arith.mulf %142, %150 : vector<8x128xf32>
    %159 = arith.addf %157, %158 : vector<8x128xf32>
    %160 = math.tanh %159 : vector<8x128xf32>
    %161 = arith.mulf %156, %160 : vector<8x128xf32>
    %162 = vector.broadcast %c3_i32 : i32 to vector<8x1xi32>
    %163 = arith.cmpi slt, %162, %7 : vector<8x1xi32>
    %164 = vector.shape_cast %163 : vector<8x1xi1> to vector<8x1xi1>
    %165 = vector.broadcast %164 : vector<8x1xi1> to vector<8x128xi1>
    %166 = arith.select %165, %161, %126 : vector<8x128xi1>, vector<8x128xf32>
    %167 = vector.shape_cast %163 : vector<8x1xi1> to vector<8x1xi1>
    %168 = vector.broadcast %167 : vector<8x1xi1> to vector<8x128xi1>
    %169 = arith.select %168, %159, %129 : vector<8x128xi1>, vector<8x128xf32>
    %c4_i32 = arith.constant 4 : i32
    %170 = arith.index_cast %c4_i32 : i32 to index
    %c0_32 = arith.constant 0 : index
    %c0_33 = arith.constant 0 : index
    %171 = vector.load %arg1[%170, %c0_32, %c0_33] : memref<16x8x512xbf16, #tpu.memory_space<vmem>>, vector<1x8x512xbf16>
    %172 = vector.shape_cast %171 : vector<1x8x512xbf16> to vector<8x512xbf16>
    %173 = arith.extf %172 : vector<8x512xbf16> to vector<8x512xf32>
    %174 = arith.truncf %166 : vector<8x128xf32> to vector<8x128xbf16>
    %cst_34 = arith.constant dense<0.000000e+00> : vector<8x512xf32>
    %175 = tpu.matmul %174, %3, %cst_34 {dimension_numbers = #tpu.dot_dimension_numbers<[1], [0], [0], [1], [0, 0, 1, 1], [], []>} : vector<8x128xbf16>, vector<128x512xbf16>, vector<8x512xf32> -> vector<8x512xf32>
    %176 = arith.addf %173, %175 : vector<8x512xf32>
    %177 = vector.extract_strided_slice %176 {offsets = [0, 0], sizes = [8, 128], strides = [1, 1]} : vector<8x512xf32> to vector<8x128xf32>
    %178 = arith.negf %177 : vector<8x128xf32>
    %179 = math.exp %178 : vector<8x128xf32>
    %cst_35 = arith.constant 1.000000e+00 : f32
    %180 = vector.broadcast %cst_35 : f32 to vector<8x128xf32>
    %181 = arith.addf %180, %179 : vector<8x128xf32>
    %182 = arith.divf %180, %181 : vector<8x128xf32>
    %183 = vector.extract_strided_slice %176 {offsets = [0, 128], sizes = [8, 128], strides = [1, 1]} : vector<8x512xf32> to vector<8x128xf32>
    %184 = arith.negf %183 : vector<8x128xf32>
    %185 = math.exp %184 : vector<8x128xf32>
    %cst_36 = arith.constant 1.000000e+00 : f32
    %186 = vector.broadcast %cst_36 : f32 to vector<8x128xf32>
    %187 = arith.addf %186, %185 : vector<8x128xf32>
    %188 = arith.divf %186, %187 : vector<8x128xf32>
    %189 = vector.extract_strided_slice %176 {offsets = [0, 256], sizes = [8, 128], strides = [1, 1]} : vector<8x512xf32> to vector<8x128xf32>
    %190 = math.tanh %189 : vector<8x128xf32>
    %191 = vector.extract_strided_slice %176 {offsets = [0, 384], sizes = [8, 128], strides = [1, 1]} : vector<8x512xf32> to vector<8x128xf32>
    %192 = arith.negf %191 : vector<8x128xf32>
    %193 = math.exp %192 : vector<8x128xf32>
    %cst_37 = arith.constant 1.000000e+00 : f32
    %194 = vector.broadcast %cst_37 : f32 to vector<8x128xf32>
    %195 = arith.addf %194, %193 : vector<8x128xf32>
    %196 = arith.divf %194, %195 : vector<8x128xf32>
    %197 = arith.mulf %188, %169 : vector<8x128xf32>
    %198 = arith.mulf %182, %190 : vector<8x128xf32>
    %199 = arith.addf %197, %198 : vector<8x128xf32>
    %200 = math.tanh %199 : vector<8x128xf32>
    %201 = arith.mulf %196, %200 : vector<8x128xf32>
    %202 = vector.broadcast %c4_i32 : i32 to vector<8x1xi32>
    %203 = arith.cmpi slt, %202, %7 : vector<8x1xi32>
    %204 = vector.shape_cast %203 : vector<8x1xi1> to vector<8x1xi1>
    %205 = vector.broadcast %204 : vector<8x1xi1> to vector<8x128xi1>
    %206 = arith.select %205, %201, %166 : vector<8x128xi1>, vector<8x128xf32>
    %207 = vector.shape_cast %203 : vector<8x1xi1> to vector<8x1xi1>
    %208 = vector.broadcast %207 : vector<8x1xi1> to vector<8x128xi1>
    %209 = arith.select %208, %199, %169 : vector<8x128xi1>, vector<8x128xf32>
    %c5_i32 = arith.constant 5 : i32
    %210 = arith.index_cast %c5_i32 : i32 to index
    %c0_38 = arith.constant 0 : index
    %c0_39 = arith.constant 0 : index
    %211 = vector.load %arg1[%210, %c0_38, %c0_39] : memref<16x8x512xbf16, #tpu.memory_space<vmem>>, vector<1x8x512xbf16>
    %212 = vector.shape_cast %211 : vector<1x8x512xbf16> to vector<8x512xbf16>
    %213 = arith.extf %212 : vector<8x512xbf16> to vector<8x512xf32>
    %214 = arith.truncf %206 : vector<8x128xf32> to vector<8x128xbf16>
    %cst_40 = arith.constant dense<0.000000e+00> : vector<8x512xf32>
    %215 = tpu.matmul %214, %3, %cst_40 {dimension_numbers = #tpu.dot_dimension_numbers<[1], [0], [0], [1], [0, 0, 1, 1], [], []>} : vector<8x128xbf16>, vector<128x512xbf16>, vector<8x512xf32> -> vector<8x512xf32>
    %216 = arith.addf %213, %215 : vector<8x512xf32>
    %217 = vector.extract_strided_slice %216 {offsets = [0, 0], sizes = [8, 128], strides = [1, 1]} : vector<8x512xf32> to vector<8x128xf32>
    %218 = arith.negf %217 : vector<8x128xf32>
    %219 = math.exp %218 : vector<8x128xf32>
    %cst_41 = arith.constant 1.000000e+00 : f32
    %220 = vector.broadcast %cst_41 : f32 to vector<8x128xf32>
    %221 = arith.addf %220, %219 : vector<8x128xf32>
    %222 = arith.divf %220, %221 : vector<8x128xf32>
    %223 = vector.extract_strided_slice %216 {offsets = [0, 128], sizes = [8, 128], strides = [1, 1]} : vector<8x512xf32> to vector<8x128xf32>
    %224 = arith.negf %223 : vector<8x128xf32>
    %225 = math.exp %224 : vector<8x128xf32>
    %cst_42 = arith.constant 1.000000e+00 : f32
    %226 = vector.broadcast %cst_42 : f32 to vector<8x128xf32>
    %227 = arith.addf %226, %225 : vector<8x128xf32>
    %228 = arith.divf %226, %227 : vector<8x128xf32>
    %229 = vector.extract_strided_slice %216 {offsets = [0, 256], sizes = [8, 128], strides = [1, 1]} : vector<8x512xf32> to vector<8x128xf32>
    %230 = math.tanh %229 : vector<8x128xf32>
    %231 = vector.extract_strided_slice %216 {offsets = [0, 384], sizes = [8, 128], strides = [1, 1]} : vector<8x512xf32> to vector<8x128xf32>
    %232 = arith.negf %231 : vector<8x128xf32>
    %233 = math.exp %232 : vector<8x128xf32>
    %cst_43 = arith.constant 1.000000e+00 : f32
    %234 = vector.broadcast %cst_43 : f32 to vector<8x128xf32>
    %235 = arith.addf %234, %233 : vector<8x128xf32>
    %236 = arith.divf %234, %235 : vector<8x128xf32>
    %237 = arith.mulf %228, %209 : vector<8x128xf32>
    %238 = arith.mulf %222, %230 : vector<8x128xf32>
    %239 = arith.addf %237, %238 : vector<8x128xf32>
    %240 = math.tanh %239 : vector<8x128xf32>
    %241 = arith.mulf %236, %240 : vector<8x128xf32>
    %242 = vector.broadcast %c5_i32 : i32 to vector<8x1xi32>
    %243 = arith.cmpi slt, %242, %7 : vector<8x1xi32>
    %244 = vector.shape_cast %243 : vector<8x1xi1> to vector<8x1xi1>
    %245 = vector.broadcast %244 : vector<8x1xi1> to vector<8x128xi1>
    %246 = arith.select %245, %241, %206 : vector<8x128xi1>, vector<8x128xf32>
    %247 = vector.shape_cast %243 : vector<8x1xi1> to vector<8x1xi1>
    %248 = vector.broadcast %247 : vector<8x1xi1> to vector<8x128xi1>
    %249 = arith.select %248, %239, %209 : vector<8x128xi1>, vector<8x128xf32>
    %c6_i32 = arith.constant 6 : i32
    %250 = arith.index_cast %c6_i32 : i32 to index
    %c0_44 = arith.constant 0 : index
    %c0_45 = arith.constant 0 : index
    %251 = vector.load %arg1[%250, %c0_44, %c0_45] : memref<16x8x512xbf16, #tpu.memory_space<vmem>>, vector<1x8x512xbf16>
    %252 = vector.shape_cast %251 : vector<1x8x512xbf16> to vector<8x512xbf16>
    %253 = arith.extf %252 : vector<8x512xbf16> to vector<8x512xf32>
    %254 = arith.truncf %246 : vector<8x128xf32> to vector<8x128xbf16>
    %cst_46 = arith.constant dense<0.000000e+00> : vector<8x512xf32>
    %255 = tpu.matmul %254, %3, %cst_46 {dimension_numbers = #tpu.dot_dimension_numbers<[1], [0], [0], [1], [0, 0, 1, 1], [], []>} : vector<8x128xbf16>, vector<128x512xbf16>, vector<8x512xf32> -> vector<8x512xf32>
    %256 = arith.addf %253, %255 : vector<8x512xf32>
    %257 = vector.extract_strided_slice %256 {offsets = [0, 0], sizes = [8, 128], strides = [1, 1]} : vector<8x512xf32> to vector<8x128xf32>
    %258 = arith.negf %257 : vector<8x128xf32>
    %259 = math.exp %258 : vector<8x128xf32>
    %cst_47 = arith.constant 1.000000e+00 : f32
    %260 = vector.broadcast %cst_47 : f32 to vector<8x128xf32>
    %261 = arith.addf %260, %259 : vector<8x128xf32>
    %262 = arith.divf %260, %261 : vector<8x128xf32>
    %263 = vector.extract_strided_slice %256 {offsets = [0, 128], sizes = [8, 128], strides = [1, 1]} : vector<8x512xf32> to vector<8x128xf32>
    %264 = arith.negf %263 : vector<8x128xf32>
    %265 = math.exp %264 : vector<8x128xf32>
    %cst_48 = arith.constant 1.000000e+00 : f32
    %266 = vector.broadcast %cst_48 : f32 to vector<8x128xf32>
    %267 = arith.addf %266, %265 : vector<8x128xf32>
    %268 = arith.divf %266, %267 : vector<8x128xf32>
    %269 = vector.extract_strided_slice %256 {offsets = [0, 256], sizes = [8, 128], strides = [1, 1]} : vector<8x512xf32> to vector<8x128xf32>
    %270 = math.tanh %269 : vector<8x128xf32>
    %271 = vector.extract_strided_slice %256 {offsets = [0, 384], sizes = [8, 128], strides = [1, 1]} : vector<8x512xf32> to vector<8x128xf32>
    %272 = arith.negf %271 : vector<8x128xf32>
    %273 = math.exp %272 : vector<8x128xf32>
    %cst_49 = arith.constant 1.000000e+00 : f32
    %274 = vector.broadcast %cst_49 : f32 to vector<8x128xf32>
    %275 = arith.addf %274, %273 : vector<8x128xf32>
    %276 = arith.divf %274, %275 : vector<8x128xf32>
    %277 = arith.mulf %268, %249 : vector<8x128xf32>
    %278 = arith.mulf %262, %270 : vector<8x128xf32>
    %279 = arith.addf %277, %278 : vector<8x128xf32>
    %280 = math.tanh %279 : vector<8x128xf32>
    %281 = arith.mulf %276, %280 : vector<8x128xf32>
    %282 = vector.broadcast %c6_i32 : i32 to vector<8x1xi32>
    %283 = arith.cmpi slt, %282, %7 : vector<8x1xi32>
    %284 = vector.shape_cast %283 : vector<8x1xi1> to vector<8x1xi1>
    %285 = vector.broadcast %284 : vector<8x1xi1> to vector<8x128xi1>
    %286 = arith.select %285, %281, %246 : vector<8x128xi1>, vector<8x128xf32>
    %287 = vector.shape_cast %283 : vector<8x1xi1> to vector<8x1xi1>
    %288 = vector.broadcast %287 : vector<8x1xi1> to vector<8x128xi1>
    %289 = arith.select %288, %279, %249 : vector<8x128xi1>, vector<8x128xf32>
    %c7_i32 = arith.constant 7 : i32
    %290 = arith.index_cast %c7_i32 : i32 to index
    %c0_50 = arith.constant 0 : index
    %c0_51 = arith.constant 0 : index
    %291 = vector.load %arg1[%290, %c0_50, %c0_51] : memref<16x8x512xbf16, #tpu.memory_space<vmem>>, vector<1x8x512xbf16>
    %292 = vector.shape_cast %291 : vector<1x8x512xbf16> to vector<8x512xbf16>
    %293 = arith.extf %292 : vector<8x512xbf16> to vector<8x512xf32>
    %294 = arith.truncf %286 : vector<8x128xf32> to vector<8x128xbf16>
    %cst_52 = arith.constant dense<0.000000e+00> : vector<8x512xf32>
    %295 = tpu.matmul %294, %3, %cst_52 {dimension_numbers = #tpu.dot_dimension_numbers<[1], [0], [0], [1], [0, 0, 1, 1], [], []>} : vector<8x128xbf16>, vector<128x512xbf16>, vector<8x512xf32> -> vector<8x512xf32>
    %296 = arith.addf %293, %295 : vector<8x512xf32>
    %297 = vector.extract_strided_slice %296 {offsets = [0, 0], sizes = [8, 128], strides = [1, 1]} : vector<8x512xf32> to vector<8x128xf32>
    %298 = arith.negf %297 : vector<8x128xf32>
    %299 = math.exp %298 : vector<8x128xf32>
    %cst_53 = arith.constant 1.000000e+00 : f32
    %300 = vector.broadcast %cst_53 : f32 to vector<8x128xf32>
    %301 = arith.addf %300, %299 : vector<8x128xf32>
    %302 = arith.divf %300, %301 : vector<8x128xf32>
    %303 = vector.extract_strided_slice %296 {offsets = [0, 128], sizes = [8, 128], strides = [1, 1]} : vector<8x512xf32> to vector<8x128xf32>
    %304 = arith.negf %303 : vector<8x128xf32>
    %305 = math.exp %304 : vector<8x128xf32>
    %cst_54 = arith.constant 1.000000e+00 : f32
    %306 = vector.broadcast %cst_54 : f32 to vector<8x128xf32>
    %307 = arith.addf %306, %305 : vector<8x128xf32>
    %308 = arith.divf %306, %307 : vector<8x128xf32>
    %309 = vector.extract_strided_slice %296 {offsets = [0, 256], sizes = [8, 128], strides = [1, 1]} : vector<8x512xf32> to vector<8x128xf32>
    %310 = math.tanh %309 : vector<8x128xf32>
    %311 = vector.extract_strided_slice %296 {offsets = [0, 384], sizes = [8, 128], strides = [1, 1]} : vector<8x512xf32> to vector<8x128xf32>
    %312 = arith.negf %311 : vector<8x128xf32>
    %313 = math.exp %312 : vector<8x128xf32>
    %cst_55 = arith.constant 1.000000e+00 : f32
    %314 = vector.broadcast %cst_55 : f32 to vector<8x128xf32>
    %315 = arith.addf %314, %313 : vector<8x128xf32>
    %316 = arith.divf %314, %315 : vector<8x128xf32>
    %317 = arith.mulf %308, %289 : vector<8x128xf32>
    %318 = arith.mulf %302, %310 : vector<8x128xf32>
    %319 = arith.addf %317, %318 : vector<8x128xf32>
    %320 = math.tanh %319 : vector<8x128xf32>
    %321 = arith.mulf %316, %320 : vector<8x128xf32>
    %322 = vector.broadcast %c7_i32 : i32 to vector<8x1xi32>
    %323 = arith.cmpi slt, %322, %7 : vector<8x1xi32>
    %324 = vector.shape_cast %323 : vector<8x1xi1> to vector<8x1xi1>
    %325 = vector.broadcast %324 : vector<8x1xi1> to vector<8x128xi1>
    %326 = arith.select %325, %321, %286 : vector<8x128xi1>, vector<8x128xf32>
    %327 = vector.shape_cast %323 : vector<8x1xi1> to vector<8x1xi1>
    %328 = vector.broadcast %327 : vector<8x1xi1> to vector<8x128xi1>
    %329 = arith.select %328, %319, %289 : vector<8x128xi1>, vector<8x128xf32>
    %c8_i32 = arith.constant 8 : i32
    %330 = arith.index_cast %c8_i32 : i32 to index
    %c0_56 = arith.constant 0 : index
    %c0_57 = arith.constant 0 : index
    %331 = vector.load %arg1[%330, %c0_56, %c0_57] : memref<16x8x512xbf16, #tpu.memory_space<vmem>>, vector<1x8x512xbf16>
    %332 = vector.shape_cast %331 : vector<1x8x512xbf16> to vector<8x512xbf16>
    %333 = arith.extf %332 : vector<8x512xbf16> to vector<8x512xf32>
    %334 = arith.truncf %326 : vector<8x128xf32> to vector<8x128xbf16>
    %cst_58 = arith.constant dense<0.000000e+00> : vector<8x512xf32>
    %335 = tpu.matmul %334, %3, %cst_58 {dimension_numbers = #tpu.dot_dimension_numbers<[1], [0], [0], [1], [0, 0, 1, 1], [], []>} : vector<8x128xbf16>, vector<128x512xbf16>, vector<8x512xf32> -> vector<8x512xf32>
    %336 = arith.addf %333, %335 : vector<8x512xf32>
    %337 = vector.extract_strided_slice %336 {offsets = [0, 0], sizes = [8, 128], strides = [1, 1]} : vector<8x512xf32> to vector<8x128xf32>
    %338 = arith.negf %337 : vector<8x128xf32>
    %339 = math.exp %338 : vector<8x128xf32>
    %cst_59 = arith.constant 1.000000e+00 : f32
    %340 = vector.broadcast %cst_59 : f32 to vector<8x128xf32>
    %341 = arith.addf %340, %339 : vector<8x128xf32>
    %342 = arith.divf %340, %341 : vector<8x128xf32>
    %343 = vector.extract_strided_slice %336 {offsets = [0, 128], sizes = [8, 128], strides = [1, 1]} : vector<8x512xf32> to vector<8x128xf32>
    %344 = arith.negf %343 : vector<8x128xf32>
    %345 = math.exp %344 : vector<8x128xf32>
    %cst_60 = arith.constant 1.000000e+00 : f32
    %346 = vector.broadcast %cst_60 : f32 to vector<8x128xf32>
    %347 = arith.addf %346, %345 : vector<8x128xf32>
    %348 = arith.divf %346, %347 : vector<8x128xf32>
    %349 = vector.extract_strided_slice %336 {offsets = [0, 256], sizes = [8, 128], strides = [1, 1]} : vector<8x512xf32> to vector<8x128xf32>
    %350 = math.tanh %349 : vector<8x128xf32>
    %351 = vector.extract_strided_slice %336 {offsets = [0, 384], sizes = [8, 128], strides = [1, 1]} : vector<8x512xf32> to vector<8x128xf32>
    %352 = arith.negf %351 : vector<8x128xf32>
    %353 = math.exp %352 : vector<8x128xf32>
    %cst_61 = arith.constant 1.000000e+00 : f32
    %354 = vector.broadcast %cst_61 : f32 to vector<8x128xf32>
    %355 = arith.addf %354, %353 : vector<8x128xf32>
    %356 = arith.divf %354, %355 : vector<8x128xf32>
    %357 = arith.mulf %348, %329 : vector<8x128xf32>
    %358 = arith.mulf %342, %350 : vector<8x128xf32>
    %359 = arith.addf %357, %358 : vector<8x128xf32>
    %360 = math.tanh %359 : vector<8x128xf32>
    %361 = arith.mulf %356, %360 : vector<8x128xf32>
    %362 = vector.broadcast %c8_i32 : i32 to vector<8x1xi32>
    %363 = arith.cmpi slt, %362, %7 : vector<8x1xi32>
    %364 = vector.shape_cast %363 : vector<8x1xi1> to vector<8x1xi1>
    %365 = vector.broadcast %364 : vector<8x1xi1> to vector<8x128xi1>
    %366 = arith.select %365, %361, %326 : vector<8x128xi1>, vector<8x128xf32>
    %367 = vector.shape_cast %363 : vector<8x1xi1> to vector<8x1xi1>
    %368 = vector.broadcast %367 : vector<8x1xi1> to vector<8x128xi1>
    %369 = arith.select %368, %359, %329 : vector<8x128xi1>, vector<8x128xf32>
    %c9_i32 = arith.constant 9 : i32
    %370 = arith.index_cast %c9_i32 : i32 to index
    %c0_62 = arith.constant 0 : index
    %c0_63 = arith.constant 0 : index
    %371 = vector.load %arg1[%370, %c0_62, %c0_63] : memref<16x8x512xbf16, #tpu.memory_space<vmem>>, vector<1x8x512xbf16>
    %372 = vector.shape_cast %371 : vector<1x8x512xbf16> to vector<8x512xbf16>
    %373 = arith.extf %372 : vector<8x512xbf16> to vector<8x512xf32>
    %374 = arith.truncf %366 : vector<8x128xf32> to vector<8x128xbf16>
    %cst_64 = arith.constant dense<0.000000e+00> : vector<8x512xf32>
    %375 = tpu.matmul %374, %3, %cst_64 {dimension_numbers = #tpu.dot_dimension_numbers<[1], [0], [0], [1], [0, 0, 1, 1], [], []>} : vector<8x128xbf16>, vector<128x512xbf16>, vector<8x512xf32> -> vector<8x512xf32>
    %376 = arith.addf %373, %375 : vector<8x512xf32>
    %377 = vector.extract_strided_slice %376 {offsets = [0, 0], sizes = [8, 128], strides = [1, 1]} : vector<8x512xf32> to vector<8x128xf32>
    %378 = arith.negf %377 : vector<8x128xf32>
    %379 = math.exp %378 : vector<8x128xf32>
    %cst_65 = arith.constant 1.000000e+00 : f32
    %380 = vector.broadcast %cst_65 : f32 to vector<8x128xf32>
    %381 = arith.addf %380, %379 : vector<8x128xf32>
    %382 = arith.divf %380, %381 : vector<8x128xf32>
    %383 = vector.extract_strided_slice %376 {offsets = [0, 128], sizes = [8, 128], strides = [1, 1]} : vector<8x512xf32> to vector<8x128xf32>
    %384 = arith.negf %383 : vector<8x128xf32>
    %385 = math.exp %384 : vector<8x128xf32>
    %cst_66 = arith.constant 1.000000e+00 : f32
    %386 = vector.broadcast %cst_66 : f32 to vector<8x128xf32>
    %387 = arith.addf %386, %385 : vector<8x128xf32>
    %388 = arith.divf %386, %387 : vector<8x128xf32>
    %389 = vector.extract_strided_slice %376 {offsets = [0, 256], sizes = [8, 128], strides = [1, 1]} : vector<8x512xf32> to vector<8x128xf32>
    %390 = math.tanh %389 : vector<8x128xf32>
    %391 = vector.extract_strided_slice %376 {offsets = [0, 384], sizes = [8, 128], strides = [1, 1]} : vector<8x512xf32> to vector<8x128xf32>
    %392 = arith.negf %391 : vector<8x128xf32>
    %393 = math.exp %392 : vector<8x128xf32>
    %cst_67 = arith.constant 1.000000e+00 : f32
    %394 = vector.broadcast %cst_67 : f32 to vector<8x128xf32>
    %395 = arith.addf %394, %393 : vector<8x128xf32>
    %396 = arith.divf %394, %395 : vector<8x128xf32>
    %397 = arith.mulf %388, %369 : vector<8x128xf32>
    %398 = arith.mulf %382, %390 : vector<8x128xf32>
    %399 = arith.addf %397, %398 : vector<8x128xf32>
    %400 = math.tanh %399 : vector<8x128xf32>
    %401 = arith.mulf %396, %400 : vector<8x128xf32>
    %402 = vector.broadcast %c9_i32 : i32 to vector<8x1xi32>
    %403 = arith.cmpi slt, %402, %7 : vector<8x1xi32>
    %404 = vector.shape_cast %403 : vector<8x1xi1> to vector<8x1xi1>
    %405 = vector.broadcast %404 : vector<8x1xi1> to vector<8x128xi1>
    %406 = arith.select %405, %401, %366 : vector<8x128xi1>, vector<8x128xf32>
    %407 = vector.shape_cast %403 : vector<8x1xi1> to vector<8x1xi1>
    %408 = vector.broadcast %407 : vector<8x1xi1> to vector<8x128xi1>
    %409 = arith.select %408, %399, %369 : vector<8x128xi1>, vector<8x128xf32>
    %c10_i32 = arith.constant 10 : i32
    %410 = arith.index_cast %c10_i32 : i32 to index
    %c0_68 = arith.constant 0 : index
    %c0_69 = arith.constant 0 : index
    %411 = vector.load %arg1[%410, %c0_68, %c0_69] : memref<16x8x512xbf16, #tpu.memory_space<vmem>>, vector<1x8x512xbf16>
    %412 = vector.shape_cast %411 : vector<1x8x512xbf16> to vector<8x512xbf16>
    %413 = arith.extf %412 : vector<8x512xbf16> to vector<8x512xf32>
    %414 = arith.truncf %406 : vector<8x128xf32> to vector<8x128xbf16>
    %cst_70 = arith.constant dense<0.000000e+00> : vector<8x512xf32>
    %415 = tpu.matmul %414, %3, %cst_70 {dimension_numbers = #tpu.dot_dimension_numbers<[1], [0], [0], [1], [0, 0, 1, 1], [], []>} : vector<8x128xbf16>, vector<128x512xbf16>, vector<8x512xf32> -> vector<8x512xf32>
    %416 = arith.addf %413, %415 : vector<8x512xf32>
    %417 = vector.extract_strided_slice %416 {offsets = [0, 0], sizes = [8, 128], strides = [1, 1]} : vector<8x512xf32> to vector<8x128xf32>
    %418 = arith.negf %417 : vector<8x128xf32>
    %419 = math.exp %418 : vector<8x128xf32>
    %cst_71 = arith.constant 1.000000e+00 : f32
    %420 = vector.broadcast %cst_71 : f32 to vector<8x128xf32>
    %421 = arith.addf %420, %419 : vector<8x128xf32>
    %422 = arith.divf %420, %421 : vector<8x128xf32>
    %423 = vector.extract_strided_slice %416 {offsets = [0, 128], sizes = [8, 128], strides = [1, 1]} : vector<8x512xf32> to vector<8x128xf32>
    %424 = arith.negf %423 : vector<8x128xf32>
    %425 = math.exp %424 : vector<8x128xf32>
    %cst_72 = arith.constant 1.000000e+00 : f32
    %426 = vector.broadcast %cst_72 : f32 to vector<8x128xf32>
    %427 = arith.addf %426, %425 : vector<8x128xf32>
    %428 = arith.divf %426, %427 : vector<8x128xf32>
    %429 = vector.extract_strided_slice %416 {offsets = [0, 256], sizes = [8, 128], strides = [1, 1]} : vector<8x512xf32> to vector<8x128xf32>
    %430 = math.tanh %429 : vector<8x128xf32>
    %431 = vector.extract_strided_slice %416 {offsets = [0, 384], sizes = [8, 128], strides = [1, 1]} : vector<8x512xf32> to vector<8x128xf32>
    %432 = arith.negf %431 : vector<8x128xf32>
    %433 = math.exp %432 : vector<8x128xf32>
    %cst_73 = arith.constant 1.000000e+00 : f32
    %434 = vector.broadcast %cst_73 : f32 to vector<8x128xf32>
    %435 = arith.addf %434, %433 : vector<8x128xf32>
    %436 = arith.divf %434, %435 : vector<8x128xf32>
    %437 = arith.mulf %428, %409 : vector<8x128xf32>
    %438 = arith.mulf %422, %430 : vector<8x128xf32>
    %439 = arith.addf %437, %438 : vector<8x128xf32>
    %440 = math.tanh %439 : vector<8x128xf32>
    %441 = arith.mulf %436, %440 : vector<8x128xf32>
    %442 = vector.broadcast %c10_i32 : i32 to vector<8x1xi32>
    %443 = arith.cmpi slt, %442, %7 : vector<8x1xi32>
    %444 = vector.shape_cast %443 : vector<8x1xi1> to vector<8x1xi1>
    %445 = vector.broadcast %444 : vector<8x1xi1> to vector<8x128xi1>
    %446 = arith.select %445, %441, %406 : vector<8x128xi1>, vector<8x128xf32>
    %447 = vector.shape_cast %443 : vector<8x1xi1> to vector<8x1xi1>
    %448 = vector.broadcast %447 : vector<8x1xi1> to vector<8x128xi1>
    %449 = arith.select %448, %439, %409 : vector<8x128xi1>, vector<8x128xf32>
    %c11_i32 = arith.constant 11 : i32
    %450 = arith.index_cast %c11_i32 : i32 to index
    %c0_74 = arith.constant 0 : index
    %c0_75 = arith.constant 0 : index
    %451 = vector.load %arg1[%450, %c0_74, %c0_75] : memref<16x8x512xbf16, #tpu.memory_space<vmem>>, vector<1x8x512xbf16>
    %452 = vector.shape_cast %451 : vector<1x8x512xbf16> to vector<8x512xbf16>
    %453 = arith.extf %452 : vector<8x512xbf16> to vector<8x512xf32>
    %454 = arith.truncf %446 : vector<8x128xf32> to vector<8x128xbf16>
    %cst_76 = arith.constant dense<0.000000e+00> : vector<8x512xf32>
    %455 = tpu.matmul %454, %3, %cst_76 {dimension_numbers = #tpu.dot_dimension_numbers<[1], [0], [0], [1], [0, 0, 1, 1], [], []>} : vector<8x128xbf16>, vector<128x512xbf16>, vector<8x512xf32> -> vector<8x512xf32>
    %456 = arith.addf %453, %455 : vector<8x512xf32>
    %457 = vector.extract_strided_slice %456 {offsets = [0, 0], sizes = [8, 128], strides = [1, 1]} : vector<8x512xf32> to vector<8x128xf32>
    %458 = arith.negf %457 : vector<8x128xf32>
    %459 = math.exp %458 : vector<8x128xf32>
    %cst_77 = arith.constant 1.000000e+00 : f32
    %460 = vector.broadcast %cst_77 : f32 to vector<8x128xf32>
    %461 = arith.addf %460, %459 : vector<8x128xf32>
    %462 = arith.divf %460, %461 : vector<8x128xf32>
    %463 = vector.extract_strided_slice %456 {offsets = [0, 128], sizes = [8, 128], strides = [1, 1]} : vector<8x512xf32> to vector<8x128xf32>
    %464 = arith.negf %463 : vector<8x128xf32>
    %465 = math.exp %464 : vector<8x128xf32>
    %cst_78 = arith.constant 1.000000e+00 : f32
    %466 = vector.broadcast %cst_78 : f32 to vector<8x128xf32>
    %467 = arith.addf %466, %465 : vector<8x128xf32>
    %468 = arith.divf %466, %467 : vector<8x128xf32>
    %469 = vector.extract_strided_slice %456 {offsets = [0, 256], sizes = [8, 128], strides = [1, 1]} : vector<8x512xf32> to vector<8x128xf32>
    %470 = math.tanh %469 : vector<8x128xf32>
    %471 = vector.extract_strided_slice %456 {offsets = [0, 384], sizes = [8, 128], strides = [1, 1]} : vector<8x512xf32> to vector<8x128xf32>
    %472 = arith.negf %471 : vector<8x128xf32>
    %473 = math.exp %472 : vector<8x128xf32>
    %cst_79 = arith.constant 1.000000e+00 : f32
    %474 = vector.broadcast %cst_79 : f32 to vector<8x128xf32>
    %475 = arith.addf %474, %473 : vector<8x128xf32>
    %476 = arith.divf %474, %475 : vector<8x128xf32>
    %477 = arith.mulf %468, %449 : vector<8x128xf32>
    %478 = arith.mulf %462, %470 : vector<8x128xf32>
    %479 = arith.addf %477, %478 : vector<8x128xf32>
    %480 = math.tanh %479 : vector<8x128xf32>
    %481 = arith.mulf %476, %480 : vector<8x128xf32>
    %482 = vector.broadcast %c11_i32 : i32 to vector<8x1xi32>
    %483 = arith.cmpi slt, %482, %7 : vector<8x1xi32>
    %484 = vector.shape_cast %483 : vector<8x1xi1> to vector<8x1xi1>
    %485 = vector.broadcast %484 : vector<8x1xi1> to vector<8x128xi1>
    %486 = arith.select %485, %481, %446 : vector<8x128xi1>, vector<8x128xf32>
    %487 = vector.shape_cast %483 : vector<8x1xi1> to vector<8x1xi1>
    %488 = vector.broadcast %487 : vector<8x1xi1> to vector<8x128xi1>
    %489 = arith.select %488, %479, %449 : vector<8x128xi1>, vector<8x128xf32>
    %c12_i32 = arith.constant 12 : i32
    %490 = arith.index_cast %c12_i32 : i32 to index
    %c0_80 = arith.constant 0 : index
    %c0_81 = arith.constant 0 : index
    %491 = vector.load %arg1[%490, %c0_80, %c0_81] : memref<16x8x512xbf16, #tpu.memory_space<vmem>>, vector<1x8x512xbf16>
    %492 = vector.shape_cast %491 : vector<1x8x512xbf16> to vector<8x512xbf16>
    %493 = arith.extf %492 : vector<8x512xbf16> to vector<8x512xf32>
    %494 = arith.truncf %486 : vector<8x128xf32> to vector<8x128xbf16>
    %cst_82 = arith.constant dense<0.000000e+00> : vector<8x512xf32>
    %495 = tpu.matmul %494, %3, %cst_82 {dimension_numbers = #tpu.dot_dimension_numbers<[1], [0], [0], [1], [0, 0, 1, 1], [], []>} : vector<8x128xbf16>, vector<128x512xbf16>, vector<8x512xf32> -> vector<8x512xf32>
    %496 = arith.addf %493, %495 : vector<8x512xf32>
    %497 = vector.extract_strided_slice %496 {offsets = [0, 0], sizes = [8, 128], strides = [1, 1]} : vector<8x512xf32> to vector<8x128xf32>
    %498 = arith.negf %497 : vector<8x128xf32>
    %499 = math.exp %498 : vector<8x128xf32>
    %cst_83 = arith.constant 1.000000e+00 : f32
    %500 = vector.broadcast %cst_83 : f32 to vector<8x128xf32>
    %501 = arith.addf %500, %499 : vector<8x128xf32>
    %502 = arith.divf %500, %501 : vector<8x128xf32>
    %503 = vector.extract_strided_slice %496 {offsets = [0, 128], sizes = [8, 128], strides = [1, 1]} : vector<8x512xf32> to vector<8x128xf32>
    %504 = arith.negf %503 : vector<8x128xf32>
    %505 = math.exp %504 : vector<8x128xf32>
    %cst_84 = arith.constant 1.000000e+00 : f32
    %506 = vector.broadcast %cst_84 : f32 to vector<8x128xf32>
    %507 = arith.addf %506, %505 : vector<8x128xf32>
    %508 = arith.divf %506, %507 : vector<8x128xf32>
    %509 = vector.extract_strided_slice %496 {offsets = [0, 256], sizes = [8, 128], strides = [1, 1]} : vector<8x512xf32> to vector<8x128xf32>
    %510 = math.tanh %509 : vector<8x128xf32>
    %511 = vector.extract_strided_slice %496 {offsets = [0, 384], sizes = [8, 128], strides = [1, 1]} : vector<8x512xf32> to vector<8x128xf32>
    %512 = arith.negf %511 : vector<8x128xf32>
    %513 = math.exp %512 : vector<8x128xf32>
    %cst_85 = arith.constant 1.000000e+00 : f32
    %514 = vector.broadcast %cst_85 : f32 to vector<8x128xf32>
    %515 = arith.addf %514, %513 : vector<8x128xf32>
    %516 = arith.divf %514, %515 : vector<8x128xf32>
    %517 = arith.mulf %508, %489 : vector<8x128xf32>
    %518 = arith.mulf %502, %510 : vector<8x128xf32>
    %519 = arith.addf %517, %518 : vector<8x128xf32>
    %520 = math.tanh %519 : vector<8x128xf32>
    %521 = arith.mulf %516, %520 : vector<8x128xf32>
    %522 = vector.broadcast %c12_i32 : i32 to vector<8x1xi32>
    %523 = arith.cmpi slt, %522, %7 : vector<8x1xi32>
    %524 = vector.shape_cast %523 : vector<8x1xi1> to vector<8x1xi1>
    %525 = vector.broadcast %524 : vector<8x1xi1> to vector<8x128xi1>
    %526 = arith.select %525, %521, %486 : vector<8x128xi1>, vector<8x128xf32>
    %527 = vector.shape_cast %523 : vector<8x1xi1> to vector<8x1xi1>
    %528 = vector.broadcast %527 : vector<8x1xi1> to vector<8x128xi1>
    %529 = arith.select %528, %519, %489 : vector<8x128xi1>, vector<8x128xf32>
    %c13_i32 = arith.constant 13 : i32
    %530 = arith.index_cast %c13_i32 : i32 to index
    %c0_86 = arith.constant 0 : index
    %c0_87 = arith.constant 0 : index
    %531 = vector.load %arg1[%530, %c0_86, %c0_87] : memref<16x8x512xbf16, #tpu.memory_space<vmem>>, vector<1x8x512xbf16>
    %532 = vector.shape_cast %531 : vector<1x8x512xbf16> to vector<8x512xbf16>
    %533 = arith.extf %532 : vector<8x512xbf16> to vector<8x512xf32>
    %534 = arith.truncf %526 : vector<8x128xf32> to vector<8x128xbf16>
    %cst_88 = arith.constant dense<0.000000e+00> : vector<8x512xf32>
    %535 = tpu.matmul %534, %3, %cst_88 {dimension_numbers = #tpu.dot_dimension_numbers<[1], [0], [0], [1], [0, 0, 1, 1], [], []>} : vector<8x128xbf16>, vector<128x512xbf16>, vector<8x512xf32> -> vector<8x512xf32>
    %536 = arith.addf %533, %535 : vector<8x512xf32>
    %537 = vector.extract_strided_slice %536 {offsets = [0, 0], sizes = [8, 128], strides = [1, 1]} : vector<8x512xf32> to vector<8x128xf32>
    %538 = arith.negf %537 : vector<8x128xf32>
    %539 = math.exp %538 : vector<8x128xf32>
    %cst_89 = arith.constant 1.000000e+00 : f32
    %540 = vector.broadcast %cst_89 : f32 to vector<8x128xf32>
    %541 = arith.addf %540, %539 : vector<8x128xf32>
    %542 = arith.divf %540, %541 : vector<8x128xf32>
    %543 = vector.extract_strided_slice %536 {offsets = [0, 128], sizes = [8, 128], strides = [1, 1]} : vector<8x512xf32> to vector<8x128xf32>
    %544 = arith.negf %543 : vector<8x128xf32>
    %545 = math.exp %544 : vector<8x128xf32>
    %cst_90 = arith.constant 1.000000e+00 : f32
    %546 = vector.broadcast %cst_90 : f32 to vector<8x128xf32>
    %547 = arith.addf %546, %545 : vector<8x128xf32>
    %548 = arith.divf %546, %547 : vector<8x128xf32>
    %549 = vector.extract_strided_slice %536 {offsets = [0, 256], sizes = [8, 128], strides = [1, 1]} : vector<8x512xf32> to vector<8x128xf32>
    %550 = math.tanh %549 : vector<8x128xf32>
    %551 = vector.extract_strided_slice %536 {offsets = [0, 384], sizes = [8, 128], strides = [1, 1]} : vector<8x512xf32> to vector<8x128xf32>
    %552 = arith.negf %551 : vector<8x128xf32>
    %553 = math.exp %552 : vector<8x128xf32>
    %cst_91 = arith.constant 1.000000e+00 : f32
    %554 = vector.broadcast %cst_91 : f32 to vector<8x128xf32>
    %555 = arith.addf %554, %553 : vector<8x128xf32>
    %556 = arith.divf %554, %555 : vector<8x128xf32>
    %557 = arith.mulf %548, %529 : vector<8x128xf32>
    %558 = arith.mulf %542, %550 : vector<8x128xf32>
    %559 = arith.addf %557, %558 : vector<8x128xf32>
    %560 = math.tanh %559 : vector<8x128xf32>
    %561 = arith.mulf %556, %560 : vector<8x128xf32>
    %562 = vector.broadcast %c13_i32 : i32 to vector<8x1xi32>
    %563 = arith.cmpi slt, %562, %7 : vector<8x1xi32>
    %564 = vector.shape_cast %563 : vector<8x1xi1> to vector<8x1xi1>
    %565 = vector.broadcast %564 : vector<8x1xi1> to vector<8x128xi1>
    %566 = arith.select %565, %561, %526 : vector<8x128xi1>, vector<8x128xf32>
    %567 = vector.shape_cast %563 : vector<8x1xi1> to vector<8x1xi1>
    %568 = vector.broadcast %567 : vector<8x1xi1> to vector<8x128xi1>
    %569 = arith.select %568, %559, %529 : vector<8x128xi1>, vector<8x128xf32>
    %c14_i32 = arith.constant 14 : i32
    %570 = arith.index_cast %c14_i32 : i32 to index
    %c0_92 = arith.constant 0 : index
    %c0_93 = arith.constant 0 : index
    %571 = vector.load %arg1[%570, %c0_92, %c0_93] : memref<16x8x512xbf16, #tpu.memory_space<vmem>>, vector<1x8x512xbf16>
    %572 = vector.shape_cast %571 : vector<1x8x512xbf16> to vector<8x512xbf16>
    %573 = arith.extf %572 : vector<8x512xbf16> to vector<8x512xf32>
    %574 = arith.truncf %566 : vector<8x128xf32> to vector<8x128xbf16>
    %cst_94 = arith.constant dense<0.000000e+00> : vector<8x512xf32>
    %575 = tpu.matmul %574, %3, %cst_94 {dimension_numbers = #tpu.dot_dimension_numbers<[1], [0], [0], [1], [0, 0, 1, 1], [], []>} : vector<8x128xbf16>, vector<128x512xbf16>, vector<8x512xf32> -> vector<8x512xf32>
    %576 = arith.addf %573, %575 : vector<8x512xf32>
    %577 = vector.extract_strided_slice %576 {offsets = [0, 0], sizes = [8, 128], strides = [1, 1]} : vector<8x512xf32> to vector<8x128xf32>
    %578 = arith.negf %577 : vector<8x128xf32>
    %579 = math.exp %578 : vector<8x128xf32>
    %cst_95 = arith.constant 1.000000e+00 : f32
    %580 = vector.broadcast %cst_95 : f32 to vector<8x128xf32>
    %581 = arith.addf %580, %579 : vector<8x128xf32>
    %582 = arith.divf %580, %581 : vector<8x128xf32>
    %583 = vector.extract_strided_slice %576 {offsets = [0, 128], sizes = [8, 128], strides = [1, 1]} : vector<8x512xf32> to vector<8x128xf32>
    %584 = arith.negf %583 : vector<8x128xf32>
    %585 = math.exp %584 : vector<8x128xf32>
    %cst_96 = arith.constant 1.000000e+00 : f32
    %586 = vector.broadcast %cst_96 : f32 to vector<8x128xf32>
    %587 = arith.addf %586, %585 : vector<8x128xf32>
    %588 = arith.divf %586, %587 : vector<8x128xf32>
    %589 = vector.extract_strided_slice %576 {offsets = [0, 256], sizes = [8, 128], strides = [1, 1]} : vector<8x512xf32> to vector<8x128xf32>
    %590 = math.tanh %589 : vector<8x128xf32>
    %591 = vector.extract_strided_slice %576 {offsets = [0, 384], sizes = [8, 128], strides = [1, 1]} : vector<8x512xf32> to vector<8x128xf32>
    %592 = arith.negf %591 : vector<8x128xf32>
    %593 = math.exp %592 : vector<8x128xf32>
    %cst_97 = arith.constant 1.000000e+00 : f32
    %594 = vector.broadcast %cst_97 : f32 to vector<8x128xf32>
    %595 = arith.addf %594, %593 : vector<8x128xf32>
    %596 = arith.divf %594, %595 : vector<8x128xf32>
    %597 = arith.mulf %588, %569 : vector<8x128xf32>
    %598 = arith.mulf %582, %590 : vector<8x128xf32>
    %599 = arith.addf %597, %598 : vector<8x128xf32>
    %600 = math.tanh %599 : vector<8x128xf32>
    %601 = arith.mulf %596, %600 : vector<8x128xf32>
    %602 = vector.broadcast %c14_i32 : i32 to vector<8x1xi32>
    %603 = arith.cmpi slt, %602, %7 : vector<8x1xi32>
    %604 = vector.shape_cast %603 : vector<8x1xi1> to vector<8x1xi1>
    %605 = vector.broadcast %604 : vector<8x1xi1> to vector<8x128xi1>
    %606 = arith.select %605, %601, %566 : vector<8x128xi1>, vector<8x128xf32>
    %607 = vector.shape_cast %603 : vector<8x1xi1> to vector<8x1xi1>
    %608 = vector.broadcast %607 : vector<8x1xi1> to vector<8x128xi1>
    %609 = arith.select %608, %599, %569 : vector<8x128xi1>, vector<8x128xf32>
    %c15_i32 = arith.constant 15 : i32
    %610 = arith.index_cast %c15_i32 : i32 to index
    %c0_98 = arith.constant 0 : index
    %c0_99 = arith.constant 0 : index
    %611 = vector.load %arg1[%610, %c0_98, %c0_99] : memref<16x8x512xbf16, #tpu.memory_space<vmem>>, vector<1x8x512xbf16>
    %612 = vector.shape_cast %611 : vector<1x8x512xbf16> to vector<8x512xbf16>
    %613 = arith.extf %612 : vector<8x512xbf16> to vector<8x512xf32>
    %614 = arith.truncf %606 : vector<8x128xf32> to vector<8x128xbf16>
    %cst_100 = arith.constant dense<0.000000e+00> : vector<8x512xf32>
    %615 = tpu.matmul %614, %3, %cst_100 {dimension_numbers = #tpu.dot_dimension_numbers<[1], [0], [0], [1], [0, 0, 1, 1], [], []>} : vector<8x128xbf16>, vector<128x512xbf16>, vector<8x512xf32> -> vector<8x512xf32>
    %616 = arith.addf %613, %615 : vector<8x512xf32>
    %617 = vector.extract_strided_slice %616 {offsets = [0, 0], sizes = [8, 128], strides = [1, 1]} : vector<8x512xf32> to vector<8x128xf32>
    %618 = arith.negf %617 : vector<8x128xf32>
    %619 = math.exp %618 : vector<8x128xf32>
    %cst_101 = arith.constant 1.000000e+00 : f32
    %620 = vector.broadcast %cst_101 : f32 to vector<8x128xf32>
    %621 = arith.addf %620, %619 : vector<8x128xf32>
    %622 = arith.divf %620, %621 : vector<8x128xf32>
    %623 = vector.extract_strided_slice %616 {offsets = [0, 128], sizes = [8, 128], strides = [1, 1]} : vector<8x512xf32> to vector<8x128xf32>
    %624 = arith.negf %623 : vector<8x128xf32>
    %625 = math.exp %624 : vector<8x128xf32>
    %cst_102 = arith.constant 1.000000e+00 : f32
    %626 = vector.broadcast %cst_102 : f32 to vector<8x128xf32>
    %627 = arith.addf %626, %625 : vector<8x128xf32>
    %628 = arith.divf %626, %627 : vector<8x128xf32>
    %629 = vector.extract_strided_slice %616 {offsets = [0, 256], sizes = [8, 128], strides = [1, 1]} : vector<8x512xf32> to vector<8x128xf32>
    %630 = math.tanh %629 : vector<8x128xf32>
    %631 = vector.extract_strided_slice %616 {offsets = [0, 384], sizes = [8, 128], strides = [1, 1]} : vector<8x512xf32> to vector<8x128xf32>
    %632 = arith.negf %631 : vector<8x128xf32>
    %633 = math.exp %632 : vector<8x128xf32>
    %cst_103 = arith.constant 1.000000e+00 : f32
    %634 = vector.broadcast %cst_103 : f32 to vector<8x128xf32>
    %635 = arith.addf %634, %633 : vector<8x128xf32>
    %636 = arith.divf %634, %635 : vector<8x128xf32>
    %637 = arith.mulf %628, %609 : vector<8x128xf32>
    %638 = arith.mulf %622, %630 : vector<8x128xf32>
    %639 = arith.addf %637, %638 : vector<8x128xf32>
    %640 = math.tanh %639 : vector<8x128xf32>
    %641 = arith.mulf %636, %640 : vector<8x128xf32>
    %642 = vector.broadcast %c15_i32 : i32 to vector<8x1xi32>
    %643 = arith.cmpi slt, %642, %7 : vector<8x1xi32>
    %644 = vector.shape_cast %643 : vector<8x1xi1> to vector<8x1xi1>
    %645 = vector.broadcast %644 : vector<8x1xi1> to vector<8x128xi1>
    %646 = arith.select %645, %641, %606 : vector<8x128xi1>, vector<8x128xf32>
    %647 = vector.shape_cast %643 : vector<8x1xi1> to vector<8x1xi1>
    %648 = vector.broadcast %647 : vector<8x1xi1> to vector<8x128xi1>
    %649 = arith.select %648, %639, %609 : vector<8x128xi1>, vector<8x128xf32>
    %c16_i32_104 = arith.constant 16 : i32
    %c0_105 = arith.constant 0 : index
    %c0_106 = arith.constant 0 : index
    %650 = vector.load %arg5[%c0_105, %c0_106] : memref<8x128xf32, #tpu.memory_space<vmem>>, vector<8x128xf32>
    tpu.vector_store %arg5[%c0_105, %c0_106], %646 {strides = array<i32>} : memref<8x128xf32, #tpu.memory_space<vmem>>, vector<8x128xf32>,
    %c0_107 = arith.constant 0 : index
    %c0_108 = arith.constant 0 : index
    %651 = vector.load %arg6[%c0_107, %c0_108] : memref<8x128xf32, #tpu.memory_space<vmem>>, vector<8x128xf32>
    tpu.vector_store %arg6[%c0_107, %c0_108], %649 {strides = array<i32>} : memref<8x128xf32, #tpu.memory_space<vmem>>, vector<8x128xf32>,
    %c0_i32_109 = arith.constant 0 : i32
    %652 = arith.cmpi eq, %arg0, %c0_i32_109 : i32
    %653 = arith.extui %652 : i1 to i32
    %c0_i32_110 = arith.constant 0 : i32
    %654 = arith.cmpi ne, %653, %c0_i32_110 : i32
    scf.if %654 {
      %c0_111 = arith.constant 0 : index
      %c0_112 = arith.constant 0 : index
      %655 = vector.load %arg4[%c0_111, %c0_112] : memref<8x128xf32, #tpu.memory_space<vmem>>, vector<8x128xf32>
      tpu.vector_store %arg4[%c0_111, %c0_112], %646 {strides = array<i32>} : memref<8x128xf32, #tpu.memory_space<vmem>>, vector<8x128xf32>,
    } else {
    }
    return
  }
  func.func @transform_0(%arg0: i32) -> (i32, i32, i32) {
    %c0_i32 = arith.constant 0 : i32
    %c0_i32_0 = arith.constant 0 : i32
    %c0_i32_1 = arith.constant 0 : i32
    return %arg0, %c0_i32, %c0_i32_0 : i32, i32, i32
  }
  func.func @transform_1(%arg0: i32) -> (i32, i32) {
    %c0_i32 = arith.constant 0 : i32
    %c0_i32_0 = arith.constant 0 : i32
    %c0_i32_1 = arith.constant 0 : i32
    return %c0_i32, %c0_i32_0 : i32, i32
  }
  func.func @transform_2(%arg0: i32) -> (i32, i32) {
    %c0_i32 = arith.constant 0 : i32
    %c0_i32_0 = arith.constant 0 : i32
    %c0_i32_1 = arith.constant 0 : i32
    return %c0_i32, %c0_i32_0 : i32, i32
  }
  func.func @transform_3(%arg0: i32) -> (i32, i32) {
    %c0_i32 = arith.constant 0 : i32
    %c0_i32_0 = arith.constant 0 : i32
    %c0_i32_1 = arith.constant 0 : i32
    return %c0_i32, %c0_i32_0 : i32, i32
  }
}

</mosaic_0001>

<llo_original>
// kernel: tpu_custom_call.1
$region0: #{tpu_custom_call.1}
  #allocation0 [shape = 'u32[]', space=smem, size = 0x4, offset = 0x4, fixed_abs, tag = 'smem constant byte address 0x4 - core index']
  #allocation1 [shape = 'u32[144,128]{1,0:T(1,128)}', space=vmem, size = 0x12000, scoped, tag = 'internal scratch']
  #allocation2 [shape = 'f32[8,128]{1,0:T(8,128)}', space=vmem, size = 0x1000, scoped, tag = 'scratch operand']
  #allocation3 [shape = 'f32[8,128]{1,0:T(8,128)}', space=vmem, size = 0x1000, scoped, tag = 'scratch operand']
  %s0 = inlined_call_operand.hbm [shape: bf16[16,8,512], index: 0, kind: input, shape index: {}]
  %s1 = inlined_call_operand.vmem [shape: s32[8,1], index: 1, kind: input, shape index: {}]
  %s2 = inlined_call_operand.hbm [shape: bf16[128,512], index: 2, kind: input, shape index: {}]
  %s3 = inlined_call_operand.hbm [shape: f32[8,128], index: 3, kind: output, shape index: {}]
  %s4 = sld [smem:[#allocation0]]
  $region38: #{tpu_custom_call.1} parent=0
    _
  %s6 = ssub.s32 1, %s4
  %s7 = scalar_select 0, %s6, %s4
  $region1: #{tpu_custom_call.1} parent=0
    #allocation4 [shape = 'u8[131072]{0}', space=vmem, size = 0x20000, scoped, tag = 'input window, operand 0, single buffered']
    #allocation5 [shape = 's32[1]{0}', space=sflag, size = 0x4, scoped, tag = 'scoped memory for tpu_custom_call.1']
    #allocation6 [shape = 's32[1]{0}', space=sflag, size = 0x4, scoped, tag = 'scoped memory for tpu_custom_call.1']
    #allocation7 [shape = 'u8[131072]{0}', space=vmem, size = 0x20000, scoped, tag = 'input window, operand 2, single buffered']
    #allocation8 [shape = 's32[1]{0}', space=sflag, size = 0x4, scoped, tag = 'scoped memory for tpu_custom_call.1']
    #allocation9 [shape = 'u8[4096]{0}', space=vmem, size = 0x1000, scoped, tag = 'output window, operand 0, single buffered']
    %8 = vsyncpa [#allocation5], 0
    %9 = vsyncpa [#allocation8], 0
    %10 = vsyncpa [#allocation6], 0
    // Predicated region
    $region2: #{tpu_custom_call.1} parent=1 // pred_check
      _
    $region3: #{tpu_custom_call.1} parent=1 // pred_check_branch
      %12 = sbr.rel (0) target = $region5
    $region4: #{tpu_custom_call.1} parent=1 // pred_region
      %s14 = ssub.s32 4096, 4096
      %15 = vsyncadd [#allocation5], %s14
      %s16 = sshll.u32 [#allocation4], 4
      %s17 = int_to_ptr.vmem [resolvable:$true] %s16
      %22 = dma.hbm_to_vmem [thread:$0]  %s0, 4096, %s17, [#allocation5], 256, 256, 16
    $region5: #{tpu_custom_call.1} parent=1 // pred_fallthru
      _
    // Predicated region
    $region6: #{tpu_custom_call.1} parent=1 // pred_check
      _
    $region7: #{tpu_custom_call.1} parent=1 // pred_check_branch
      %24 = sbr.rel (0) target = $region9
    $region8: #{tpu_custom_call.1} parent=1 // pred_region
      _
    $region9: #{tpu_custom_call.1} parent=1 // pred_fallthru
      _
    // Predicated region
    $region10: #{tpu_custom_call.1} parent=1 // pred_check
      _
    $region11: #{tpu_custom_call.1} parent=1 // pred_check_branch
      %26 = sbr.rel (0) target = $region13
    $region12: #{tpu_custom_call.1} parent=1 // pred_region
      %s28 = ssub.s32 4096, 4096
      %29 = vsyncadd [#allocation8], %s28
      %s30 = sshll.u32 [#allocation7], 4
      %s31 = int_to_ptr.vmem [resolvable:$true] %s30
      %36 = dma.hbm_to_vmem [thread:$0]  %s2, 4096, %s31, [#allocation8], 256, 256, 16
    $region13: #{tpu_custom_call.1} parent=1 // pred_fallthru
      _
    // Predicated region
    $region14: #{tpu_custom_call.1} parent=1 // pred_check
      _
    $region15: #{tpu_custom_call.1} parent=1 // pred_check_branch
      %38 = sbr.rel (0) target = $region17
    $region16: #{tpu_custom_call.1} parent=1 // pred_region
      %39 = dma.done [#allocation5], 4096
    $region17: #{tpu_custom_call.1} parent=1 // pred_fallthru
      _
    // Predicated region
    $region18: #{tpu_custom_call.1} parent=1 // pred_check
      _
    $region19: #{tpu_custom_call.1} parent=1 // pred_check_branch
      %41 = sbr.rel (0) target = $region21
    $region20: #{tpu_custom_call.1} parent=1 // pred_region
      %42 = dma.done [#allocation8], 4096
    $region21: #{tpu_custom_call.1} parent=1 // pred_fallthru
      _
    %p44 = scmp.eq.s32.totalorder 0, 0
    // Predicated region
    $region22: #{tpu_custom_call.1} parent=1 // pred_check
      %p45 = pneg %p44
    $region23: #{tpu_custom_call.1} parent=1 // pred_check_branch
      %47 = sbr.rel (%p45) target = $region25
    $region24: #{tpu_custom_call.1} parent=1 // pred_region
      %48 = vst [vmem:[#allocation2] sm:$0xff] 0.0
      %49 = vst [vmem:[#allocation3] sm:$0xff] 0.0
    $region25: #{tpu_custom_call.1} parent=1 // pred_fallthru
      _
    %v50 = vld [vmem:[#allocation7] sm:$0xff]
    %v51 = vld [vmem:[#allocation7 + $0x8] sm:$0xff]
    %v52 = vld [vmem:[#allocation7 + $0x10] sm:$0xff]
    %v53 = vld [vmem:[#allocation7 + $0x18] sm:$0xff]
    %v54 = vld [vmem:[#allocation7 + $0x20] sm:$0xff]
    %v55 = vld [vmem:[#allocation7 + $0x28] sm:$0xff]
    %v56 = vld [vmem:[#allocation7 + $0x30] sm:$0xff]
    %v57 = vld [vmem:[#allocation7 + $0x38] sm:$0xff]
    %v58 = vld [vmem:[#allocation7 + $0x40] sm:$0xff]
    %v59 = vld [vmem:[#allocation7 + $0x48] sm:$0xff]
    %v60 = vld [vmem:[#allocation7 + $0x50] sm:$0xff]
    %v61 = vld [vmem:[#allocation7 + $0x58] sm:$0xff]
    %v62 = vld [vmem:[#allocation7 + $0x60] sm:$0xff]
    %v63 = vld [vmem:[#allocation7 + $0x68] sm:$0xff]
    %v64 = vld [vmem:[#allocation7 + $0x70] sm:$0xff]
    %v65 = vld [vmem:[#allocation7 + $0x78] sm:$0xff]
    %v66 = vld [vmem:[#allocation7 + $0x80] sm:$0xff]
    %v67 = vld [vmem:[#allocation7 + $0x88] sm:$0xff]
    %v68 = vld [vmem:[#allocation7 + $0x90] sm:$0xff]
    %v69 = vld [vmem:[#allocation7 + $0x98] sm:$0xff]
    %v70 = vld [vmem:[#allocation7 + $0xa0] sm:$0xff]
    %v71 = vld [vmem:[#allocation7 + $0xa8] sm:$0xff]
    %v72 = vld [vmem:[#allocation7 + $0xb0] sm:$0xff]
    %v73 = vld [vmem:[#allocation7 + $0xb8] sm:$0xff]
    %v74 = vld [vmem:[#allocation7 + $0xc0] sm:$0xff]
    %v75 = vld [vmem:[#allocation7 + $0xc8] sm:$0xff]
    %v76 = vld [vmem:[#allocation7 + $0xd0] sm:$0xff]
    %v77 = vld [vmem:[#allocation7 + $0xd8] sm:$0xff]
    %v78 = vld [vmem:[#allocation7 + $0xe0] sm:$0xff]
    %v79 = vld [vmem:[#allocation7 + $0xe8] sm:$0xff]
    %v80 = vld [vmem:[#allocation7 + $0xf0] sm:$0xff]
    %v81 = vld [vmem:[#allocation7 + $0xf8] sm:$0xff]
    %v82 = vld [vmem:[%s1] sm:$0xff]
    %s83 = smul.u32 0, 16
    %v84 = vstv %s83
    %v85 = vsub.s32 %v82, %v84
    %v86 = vld [vmem:[#allocation2] sm:$0xff]
    %v87 = vld [vmem:[#allocation3] sm:$0xff]
    %v88 = vld [vmem:[#allocation4] sm:$0xff]
    %v89 = vld [vmem:[#allocation4 + $0x8] sm:$0xff]
    %v90 = vunpack.c.l.bf16 %v88
    %v91 = vunpack.c.h.bf16 %v88
    %v92 = vunpack.c.l.bf16 %v89
    %v93 = vunpack.c.h.bf16 %v89
    %v94 = vpack.c.bf16 %v86, %v86
    %v127 = vunpack.c.l.b16 %v50
    %v128 = vunpack.c.h.b16 %v50
    %v129 = vunpack.c.l.b16 %v51
    %v130 = vunpack.c.h.b16 %v51
    %v131 = vunpack.c.l.b16 %v52
    %v132 = vunpack.c.h.b16 %v52
    %v133 = vunpack.c.l.b16 %v53
    %v134 = vunpack.c.h.b16 %v53
    %v135 = vunpack.c.l.b16 %v54
    %v136 = vunpack.c.h.b16 %v54
    %v137 = vunpack.c.l.b16 %v55
    %v138 = vunpack.c.h.b16 %v55
    %v139 = vunpack.c.l.b16 %v56
    %v140 = vunpack.c.h.b16 %v56
    %v141 = vunpack.c.l.b16 %v57
    %v142 = vunpack.c.h.b16 %v57
    %v143 = vunpack.c.l.b16 %v58
    %v144 = vunpack.c.h.b16 %v58
    %v145 = vunpack.c.l.b16 %v59
    %v146 = vunpack.c.h.b16 %v59
    %v147 = vunpack.c.l.b16 %v60
    %v148 = vunpack.c.h.b16 %v60
    %v149 = vunpack.c.l.b16 %v61
    %v150 = vunpack.c.h.b16 %v61
    %v151 = vunpack.c.l.b16 %v62
    %v152 = vunpack.c.h.b16 %v62
    %v153 = vunpack.c.l.b16 %v63
    %v154 = vunpack.c.h.b16 %v63
    %v155 = vunpack.c.l.b16 %v64
    %v156 = vunpack.c.h.b16 %v64
    %v157 = vunpack.c.l.b16 %v65
    %v158 = vunpack.c.h.b16 %v65
    %v159 = vunpack.c.l.b16 %v66
    %v160 = vunpack.c.h.b16 %v66
    %v161 = vunpack.c.l.b16 %v67
    %v162 = vunpack.c.h.b16 %v67
    %v163 = vunpack.c.l.b16 %v68
    %v164 = vunpack.c.h.b16 %v68
    %v165 = vunpack.c.l.b16 %v69
    %v166 = vunpack.c.h.b16 %v69
    %v167 = vunpack.c.l.b16 %v70
    %v168 = vunpack.c.h.b16 %v70
    %v169 = vunpack.c.l.b16 %v71
    %v170 = vunpack.c.h.b16 %v71
    %v171 = vunpack.c.l.b16 %v72
    %v172 = vunpack.c.h.b16 %v72
    %v173 = vunpack.c.l.b16 %v73
    %v174 = vunpack.c.h.b16 %v73
    %v175 = vunpack.c.l.b16 %v74
    %v176 = vunpack.c.h.b16 %v74
    %v177 = vunpack.c.l.b16 %v75
    %v178 = vunpack.c.h.b16 %v75
    %v179 = vunpack.c.l.b16 %v76
    %v180 = vunpack.c.h.b16 %v76
    %v181 = vunpack.c.l.b16 %v77
    %v182 = vunpack.c.h.b16 %v77
    %v183 = vunpack.c.l.b16 %v78
    %v184 = vunpack.c.h.b16 %v78
    %v185 = vunpack.c.l.b16 %v79
    %v186 = vunpack.c.h.b16 %v79
    %v187 = vunpack.c.l.b16 %v80
    %v188 = vunpack.c.h.b16 %v80
    %v189 = vunpack.c.l.b16 %v81
    %v190 = vunpack.c.h.b16 %v81
    %v191 = vpack.c.b16 %v131, %v127
    %v192 = vpack.c.b16 %v132, %v128
    %v193 = vpack.c.b16 %v133, %v129
    %v194 = vpack.c.b16 %v134, %v130
    %v195 = vpack.c.b16 %v139, %v135
    %v196 = vpack.c.b16 %v140, %v136
    %v197 = vpack.c.b16 %v141, %v137
    %v198 = vpack.c.b16 %v142, %v138
    %v199 = vpack.c.b16 %v147, %v143
    %v200 = vpack.c.b16 %v148, %v144
    %v201 = vpack.c.b16 %v149, %v145
    %v202 = vpack.c.b16 %v150, %v146
    %v203 = vpack.c.b16 %v155, %v151
    %v204 = vpack.c.b16 %v156, %v152
    %v205 = vpack.c.b16 %v157, %v153
    %v206 = vpack.c.b16 %v158, %v154
    %v207 = vpack.c.b16 %v163, %v159
    %v208 = vpack.c.b16 %v164, %v160
    %v209 = vpack.c.b16 %v165, %v161
    %v210 = vpack.c.b16 %v166, %v162
    %v211 = vpack.c.b16 %v171, %v167
    %v212 = vpack.c.b16 %v172, %v168
    %v213 = vpack.c.b16 %v173, %v169
    %v214 = vpack.c.b16 %v174, %v170
    %v215 = vpack.c.b16 %v179, %v175
    %v216 = vpack.c.b16 %v180, %v176
    %v217 = vpack.c.b16 %v181, %v177
    %v218 = vpack.c.b16 %v182, %v178
    %v219 = vpack.c.b16 %v187, %v183
    %v220 = vpack.c.b16 %v188, %v184
    %v221 = vpack.c.b16 %v189, %v185
    %v222 = vpack.c.b16 %v190, %v186
    %255 = vmatprep.subr.bf16.mxu0 %v220
    %256 = vmatpush1.bf16.msra.mxu0 %v219
    %257 = vmatprep.subr.bf16.mxu0 %v216
    %258 = vmatpush1.bf16.msra.mxu0 %v215
    %259 = vmatprep.subr.bf16.mxu0 %v212
    %260 = vmatpush1.bf16.msra.mxu0 %v211
    %261 = vmatprep.subr.bf16.mxu0 %v208
    %262 = vmatpush1.bf16.msra.mxu0 %v207
    %263 = vmatprep.subr.bf16.mxu0 %v204
    %264 = vmatpush1.bf16.msra.mxu0 %v203
    %265 = vmatprep.subr.bf16.mxu0 %v200
    %266 = vmatpush1.bf16.msra.mxu0 %v199
    %267 = vmatprep.subr.bf16.mxu0 %v196
    %268 = vmatpush1.bf16.msra.mxu0 %v195
    %269 = vmatprep.subr.bf16.mxu0 %v192
    %270 = vmatpush1.bf16.msra.mxu0 %v191
    %271 = vmatprep.subr.bf16.mxu0 0
    %272 = vmatpush2.bf16.msra.mxu0 0
    %273 = vmatprep.subr.bf16.mxu0 0
    %274 = vmatpush2.bf16.msra.mxu0 0
    %275 = vmatprep.subr.bf16.mxu0 0
    %276 = vmatpush2.bf16.msra.mxu0 0
    %277 = vmatprep.subr.bf16.mxu0 0
    %278 = vmatpush2.bf16.msra.mxu0 0
    %279 = vmatprep.subr.bf16.mxu0 0
    %280 = vmatpush2.bf16.msra.mxu0 0
    %281 = vmatprep.subr.bf16.mxu0 0
    %282 = vmatpush2.bf16.msra.mxu0 0
    %283 = vmatprep.subr.bf16.mxu0 0
    %284 = vmatpush2.bf16.msra.mxu0 0
    %285 = vmatprep.subr.bf16.mxu0 0
    %286 = vmatpush2.bf16.msra.mxu0 0
    %287 = vmatprep.mubr.bf16.mxu0 0
    %288 = vmatmul.mubr.bf16.gmra.mxu0 %v94
    %v289 = vpop.f32.mrf.mxu0
    %v290 = vadd.f32 0.0, %v289
    %v291 = vpop.f32.mrf.mxu0
    %v292 = vadd.f32 0.0, %v291
    %v293 = vpop.f32.mrf.mxu0
    %v294 = vpop.f32.mrf.mxu0
    %295 = vdwg.mxu0
    %296 = vmatprep.subr.bf16.mxu0 %v222
    %297 = vmatpush1.bf16.msra.mxu0 %v221
    %298 = vmatprep.subr.bf16.mxu0 %v218
    %299 = vmatpush1.bf16.msra.mxu0 %v217
    %300 = vmatprep.subr.bf16.mxu0 %v214
    %301 = vmatpush1.bf16.msra.mxu0 %v213
    %302 = vmatprep.subr.bf16.mxu0 %v210
    %303 = vmatpush1.bf16.msra.mxu0 %v209
    %304 = vmatprep.subr.bf16.mxu0 %v206
    %305 = vmatpush1.bf16.msra.mxu0 %v205
    %306 = vmatprep.subr.bf16.mxu0 %v202
    %307 = vmatpush1.bf16.msra.mxu0 %v201
    %308 = vmatprep.subr.bf16.mxu0 %v198
    %309 = vmatpush1.bf16.msra.mxu0 %v197
    %310 = vmatprep.subr.bf16.mxu0 %v194
    %311 = vmatpush1.bf16.msra.mxu0 %v193
    %312 = vmatprep.subr.bf16.mxu0 0
    %313 = vmatpush2.bf16.msra.mxu0 0
    %314 = vmatprep.subr.bf16.mxu0 0
    %315 = vmatpush2.bf16.msra.mxu0 0
    %316 = vmatprep.subr.bf16.mxu0 0
    %317 = vmatpush2.bf16.msra.mxu0 0
    %318 = vmatprep.subr.bf16.mxu0 0
    %319 = vmatpush2.bf16.msra.mxu0 0
    %320 = vmatprep.subr.bf16.mxu0 0
    %321 = vmatpush2.bf16.msra.mxu0 0
    %322 = vmatprep.subr.bf16.mxu0 0
    %323 = vmatpush2.bf16.msra.mxu0 0
    %324 = vmatprep.subr.bf16.mxu0 0
    %325 = vmatpush2.bf16.msra.mxu0 0
    %326 = vmatprep.subr.bf16.mxu0 0
    %327 = vmatpush2.bf16.msra.mxu0 0
    %328 = vmatprep.mubr.bf16.mxu0 0
    %329 = vmatmul.mubr.bf16.gmra.mxu0 %v94
    %v330 = vpop.f32.mrf.mxu0
    %v331 = vadd.f32 0.0, %v330
    %v332 = vpop.f32.mrf.mxu0
    %v333 = vadd.f32 0.0, %v332
    %v334 = vpop.f32.mrf.mxu0
    %v335 = vpop.f32.mrf.mxu0
    %336 = vdwg.mxu0
    %v337 = vadd.f32 %v90, %v290
    %v338 = vadd.f32 %v91, %v292
    %v339 = vadd.f32 %v92, %v331
    %v340 = vadd.f32 %v93, %v333
    %v341 = vxor.u32 %v337, 2147483648
    %v342 = vmul.f32 %v341, 1.442695
    %v343 = vpow.pop %v342
    %v344 = vadd.f32 %v343, 1.0
    %v345 = vrcp.pop %v344
    %v346 = vmul.f32 1.0, %v345
    %v347 = vxor.u32 %v338, 2147483648
    %v348 = vmul.f32 %v347, 1.442695
    %v349 = vpow.pop %v348
    %v350 = vadd.f32 %v349, 1.0
    %v351 = vrcp.pop %v350
    %v352 = vmul.f32 1.0, %v351
    %v353 = vtanh.pop %v339
    %v354 = vxor.u32 %v340, 2147483648
    %v355 = vmul.f32 %v354, 1.442695
    %v356 = vpow.pop %v355
    %v357 = vadd.f32 %v356, 1.0
    %v358 = vrcp.pop %v357
    %v359 = vmul.f32 1.0, %v358
    %v360 = vmul.f32 %v352, %v87
    %v361 = vmul.f32 %v346, %v353
    %v362 = vadd.f32 %v360, %v361
    %v363 = vtanh.pop %v362
    %v364 = vmul.f32 %v359, %v363
    %vm365 = vcmp.gt.s32.totalorder %v85, 0
    %v366 = vsel %vm365, 1, 0
    %367 = vset.pattern.permute.xlu0 0
    %368 = vperm.xlu0 %367, %v366
    %v369 = vpop.permute.xlu0 %368
    %vm370 = vcmp.eq.s32.totalorder %v369, 1
    %v371 = vsel %vm370, %v364, %v86
    %v372 = vsel %vm370, %v362, %v87
    %s373 = scalar_lea.vmem [#allocation4], 16
    %v374 = vld [vmem:[%s373] sm:$0xff]
    %v375 = vld [vmem:[%s373 + $0x8] sm:$0xff]
    %v376 = vunpack.c.l.bf16 %v374
    %v377 = vunpack.c.h.bf16 %v374
    %v378 = vunpack.c.l.bf16 %v375
    %v379 = vunpack.c.h.bf16 %v375
    %v380 = vpack.c.bf16 %v371, %v371
    %381 = vmatprep.subr.bf16.mxu0 %v220
    %382 = vmatpush1.bf16.msra.mxu0 %v219
    %383 = vmatprep.subr.bf16.mxu0 %v216
    %384 = vmatpush1.bf16.msra.mxu0 %v215
    %385 = vmatprep.subr.bf16.mxu0 %v212
    %386 = vmatpush1.bf16.msra.mxu0 %v211
    %387 = vmatprep.subr.bf16.mxu0 %v208
    %388 = vmatpush1.bf16.msra.mxu0 %v207
    %389 = vmatprep.subr.bf16.mxu0 %v204
    %390 = vmatpush1.bf16.msra.mxu0 %v203
    %391 = vmatprep.subr.bf16.mxu0 %v200
    %392 = vmatpush1.bf16.msra.mxu0 %v199
    %393 = vmatprep.subr.bf16.mxu0 %v196
    %394 = vmatpush1.bf16.msra.mxu0 %v195
    %395 = vmatprep.subr.bf16.mxu0 %v192
    %396 = vmatpush1.bf16.msra.mxu0 %v191
    %397 = vmatprep.subr.bf16.mxu0 0
    %398 = vmatpush2.bf16.msra.mxu0 0
    %399 = vmatprep.subr.bf16.mxu0 0
    %400 = vmatpush2.bf16.msra.mxu0 0
    %401 = vmatprep.subr.bf16.mxu0 0
    %402 = vmatpush2.bf16.msra.mxu0 0
    %403 = vmatprep.subr.bf16.mxu0 0
    %404 = vmatpush2.bf16.msra.mxu0 0
    %405 = vmatprep.subr.bf16.mxu0 0
    %406 = vmatpush2.bf16.msra.mxu0 0
    %407 = vmatprep.subr.bf16.mxu0 0
    %408 = vmatpush2.bf16.msra.mxu0 0
    %409 = vmatprep.subr.bf16.mxu0 0
    %410 = vmatpush2.bf16.msra.mxu0 0
    %411 = vmatprep.subr.bf16.mxu0 0
    %412 = vmatpush2.bf16.msra.mxu0 0
    %413 = vmatprep.mubr.bf16.mxu0 0
    %414 = vmatmul.mubr.bf16.gmra.mxu0 %v380
    %v415 = vpop.f32.mrf.mxu0
    %v416 = vadd.f32 0.0, %v415
    %v417 = vpop.f32.mrf.mxu0
    %v418 = vadd.f32 0.0, %v417
    %v419 = vpop.f32.mrf.mxu0
    %v420 = vpop.f32.mrf.mxu0
    %421 = vdwg.mxu0
    %422 = vmatprep.subr.bf16.mxu0 %v222
    %423 = vmatpush1.bf16.msra.mxu0 %v221
    %424 = vmatprep.subr.bf16.mxu0 %v218
    %425 = vmatpush1.bf16.msra.mxu0 %v217
    %426 = vmatprep.subr.bf16.mxu0 %v214
    %427 = vmatpush1.bf16.msra.mxu0 %v213
    %428 = vmatprep.subr.bf16.mxu0 %v210
    %429 = vmatpush1.bf16.msra.mxu0 %v209
    %430 = vmatprep.subr.bf16.mxu0 %v206
    %431 = vmatpush1.bf16.msra.mxu0 %v205
    %432 = vmatprep.subr.bf16.mxu0 %v202
    %433 = vmatpush1.bf16.msra.mxu0 %v201
    %434 = vmatprep.subr.bf16.mxu0 %v198
    %435 = vmatpush1.bf16.msra.mxu0 %v197
    %436 = vmatprep.subr.bf16.mxu0 %v194
    %437 = vmatpush1.bf16.msra.mxu0 %v193
    %438 = vmatprep.subr.bf16.mxu0 0
    %439 = vmatpush2.bf16.msra.mxu0 0
    %440 = vmatprep.subr.bf16.mxu0 0
    %441 = vmatpush2.bf16.msra.mxu0 0
    %442 = vmatprep.subr.bf16.mxu0 0
    %443 = vmatpush2.bf16.msra.mxu0 0
    %444 = vmatprep.subr.bf16.mxu0 0
    %445 = vmatpush2.bf16.msra.mxu0 0
    %446 = vmatprep.subr.bf16.mxu0 0
    %447 = vmatpush2.bf16.msra.mxu0 0
    %448 = vmatprep.subr.bf16.mxu0 0
    %449 = vmatpush2.bf16.msra.mxu0 0
    %450 = vmatprep.subr.bf16.mxu0 0
    %451 = vmatpush2.bf16.msra.mxu0 0
    %452 = vmatprep.subr.bf16.mxu0 0
    %453 = vmatpush2.bf16.msra.mxu0 0
    %454 = vmatprep.mubr.bf16.mxu0 0
    %455 = vmatmul.mubr.bf16.gmra.mxu0 %v380
    %v456 = vpop.f32.mrf.mxu0
    %v457 = vadd.f32 0.0, %v456
    %v458 = vpop.f32.mrf.mxu0
    %v459 = vadd.f32 0.0, %v458
    %v460 = vpop.f32.mrf.mxu0
    %v461 = vpop.f32.mrf.mxu0
    %462 = vdwg.mxu0
    %v463 = vadd.f32 %v376, %v416
    %v464 = vadd.f32 %v377, %v418
    %v465 = vadd.f32 %v378, %v457
    %v466 = vadd.f32 %v379, %v459
    %v467 = vxor.u32 %v463, 2147483648
    %v468 = vmul.f32 %v467, 1.442695
    %v469 = vpow.pop %v468
    %v470 = vadd.f32 %v469, 1.0
    %v471 = vrcp.pop %v470
    %v472 = vmul.f32 1.0, %v471
    %v473 = vxor.u32 %v464, 2147483648
    %v474 = vmul.f32 %v473, 1.442695
    %v475 = vpow.pop %v474
    %v476 = vadd.f32 %v475, 1.0
    %v477 = vrcp.pop %v476
    %v478 = vmul.f32 1.0, %v477
    %v479 = vtanh.pop %v465
    %v480 = vxor.u32 %v466, 2147483648
    %v481 = vmul.f32 %v480, 1.442695
    %v482 = vpow.pop %v481
    %v483 = vadd.f32 %v482, 1.0
    %v484 = vrcp.pop %v483
    %v485 = vmul.f32 1.0, %v484
    %v486 = vmul.f32 %v478, %v372
    %v487 = vmul.f32 %v472, %v479
    %v488 = vadd.f32 %v486, %v487
    %v489 = vtanh.pop %v488
    %v490 = vmul.f32 %v485, %v489
    %vm491 = vcmp.gt.s32.totalorder %v85, 1
    %v492 = vsel %vm491, 1, 0
    %493 = vset.pattern.permute.xlu0 0
    %494 = vperm.xlu0 %493, %v492
    %v495 = vpop.permute.xlu0 %494
    %vm496 = vcmp.eq.s32.totalorder %v495, 1
    %v497 = vsel %vm496, %v490, %v371
    %v498 = vsel %vm496, %v488, %v372
    %s499 = scalar_lea.vmem [#allocation4], 32
    %v500 = vld [vmem:[%s499] sm:$0xff]
    %v501 = vld [vmem:[%s499 + $0x8] sm:$0xff]
    %v502 = vunpack.c.l.bf16 %v500
    %v503 = vunpack.c.h.bf16 %v500
    %v504 = vunpack.c.l.bf16 %v501
    %v505 = vunpack.c.h.bf16 %v501
    %v506 = vpack.c.bf16 %v497, %v497
    %507 = vmatprep.subr.bf16.mxu0 %v220
    %508 = vmatpush1.bf16.msra.mxu0 %v219
    %509 = vmatprep.subr.bf16.mxu0 %v216
    %510 = vmatpush1.bf16.msra.mxu0 %v215
    %511 = vmatprep.subr.bf16.mxu0 %v212
    %512 = vmatpush1.bf16.msra.mxu0 %v211
    %513 = vmatprep.subr.bf16.mxu0 %v208
    %514 = vmatpush1.bf16.msra.mxu0 %v207
    %515 = vmatprep.subr.bf16.mxu0 %v204
    %516 = vmatpush1.bf16.msra.mxu0 %v203
    %517 = vmatprep.subr.bf16.mxu0 %v200
    %518 = vmatpush1.bf16.msra.mxu0 %v199
    %519 = vmatprep.subr.bf16.mxu0 %v196
    %520 = vmatpush1.bf16.msra.mxu0 %v195
    %521 = vmatprep.subr.bf16.mxu0 %v192
    %522 = vmatpush1.bf16.msra.mxu0 %v191
    %523 = vmatprep.subr.bf16.mxu0 0
    %524 = vmatpush2.bf16.msra.mxu0 0
    %525 = vmatprep.subr.bf16.mxu0 0
    %526 = vmatpush2.bf16.msra.mxu0 0
    %527 = vmatprep.subr.bf16.mxu0 0
    %528 = vmatpush2.bf16.msra.mxu0 0
    %529 = vmatprep.subr.bf16.mxu0 0
    %530 = vmatpush2.bf16.msra.mxu0 0
    %531 = vmatprep.subr.bf16.mxu0 0
    %532 = vmatpush2.bf16.msra.mxu0 0
    %533 = vmatprep.subr.bf16.mxu0 0
    %534 = vmatpush2.bf16.msra.mxu0 0
    %535 = vmatprep.subr.bf16.mxu0 0
    %536 = vmatpush2.bf16.msra.mxu0 0
    %537 = vmatprep.subr.bf16.mxu0 0
    %538 = vmatpush2.bf16.msra.mxu0 0
    %539 = vmatprep.mubr.bf16.mxu0 0
    %540 = vmatmul.mubr.bf16.gmra.mxu0 %v506
    %v541 = vpop.f32.mrf.mxu0
    %v542 = vadd.f32 0.0, %v541
    %v543 = vpop.f32.mrf.mxu0
    %v544 = vadd.f32 0.0, %v543
    %v545 = vpop.f32.mrf.mxu0
    %v546 = vpop.f32.mrf.mxu0
    %547 = vdwg.mxu0
    %548 = vmatprep.subr.bf16.mxu0 %v222
    %549 = vmatpush1.bf16.msra.mxu0 %v221
    %550 = vmatprep.subr.bf16.mxu0 %v218
    %551 = vmatpush1.bf16.msra.mxu0 %v217
    %552 = vmatprep.subr.bf16.mxu0 %v214
    %553 = vmatpush1.bf16.msra.mxu0 %v213
    %554 = vmatprep.subr.bf16.mxu0 %v210
    %555 = vmatpush1.bf16.msra.mxu0 %v209
    %556 = vmatprep.subr.bf16.mxu0 %v206
    %557 = vmatpush1.bf16.msra.mxu0 %v205
    %558 = vmatprep.subr.bf16.mxu0 %v202
    %559 = vmatpush1.bf16.msra.mxu0 %v201
    %560 = vmatprep.subr.bf16.mxu0 %v198
    %561 = vmatpush1.bf16.msra.mxu0 %v197
    %562 = vmatprep.subr.bf16.mxu0 %v194
    %563 = vmatpush1.bf16.msra.mxu0 %v193
    %564 = vmatprep.subr.bf16.mxu0 0
    %565 = vmatpush2.bf16.msra.mxu0 0
    %566 = vmatprep.subr.bf16.mxu0 0
    %567 = vmatpush2.bf16.msra.mxu0 0
    %568 = vmatprep.subr.bf16.mxu0 0
    %569 = vmatpush2.bf16.msra.mxu0 0
    %570 = vmatprep.subr.bf16.mxu0 0
    %571 = vmatpush2.bf16.msra.mxu0 0
    %572 = vmatprep.subr.bf16.mxu0 0
    %573 = vmatpush2.bf16.msra.mxu0 0
    %574 = vmatprep.subr.bf16.mxu0 0
    %575 = vmatpush2.bf16.msra.mxu0 0
    %576 = vmatprep.subr.bf16.mxu0 0
    %577 = vmatpush2.bf16.msra.mxu0 0
    %578 = vmatprep.subr.bf16.mxu0 0
    %579 = vmatpush2.bf16.msra.mxu0 0
    %580 = vmatprep.mubr.bf16.mxu0 0
    %581 = vmatmul.mubr.bf16.gmra.mxu0 %v506
    %v582 = vpop.f32.mrf.mxu0
    %v583 = vadd.f32 0.0, %v582
    %v584 = vpop.f32.mrf.mxu0
    %v585 = vadd.f32 0.0, %v584
    %v586 = vpop.f32.mrf.mxu0
    %v587 = vpop.f32.mrf.mxu0
    %588 = vdwg.mxu0
    %v589 = vadd.f32 %v502, %v542
    %v590 = vadd.f32 %v503, %v544
    %v591 = vadd.f32 %v504, %v583
    %v592 = vadd.f32 %v505, %v585
    %v593 = vxor.u32 %v589, 2147483648
    %v594 = vmul.f32 %v593, 1.442695
    %v595 = vpow.pop %v594
    %v596 = vadd.f32 %v595, 1.0
    %v597 = vrcp.pop %v596
    %v598 = vmul.f32 1.0, %v597
    %v599 = vxor.u32 %v590, 2147483648
    %v600 = vmul.f32 %v599, 1.442695
    %v601 = vpow.pop %v600
    %v602 = vadd.f32 %v601, 1.0
    %v603 = vrcp.pop %v602
    %v604 = vmul.f32 1.0, %v603
    %v605 = vtanh.pop %v591
    %v606 = vxor.u32 %v592, 2147483648
    %v607 = vmul.f32 %v606, 1.442695
    %v608 = vpow.pop %v607
    %v609 = vadd.f32 %v608, 1.0
    %v610 = vrcp.pop %v609
    %v611 = vmul.f32 1.0, %v610
    %v612 = vmul.f32 %v604, %v498
    %v613 = vmul.f32 %v598, %v605
    %v614 = vadd.f32 %v612, %v613
    %v615 = vtanh.pop %v614
    %v616 = vmul.f32 %v611, %v615
    %vm617 = vcmp.gt.s32.totalorder %v85, 2
    %v618 = vsel %vm617, 1, 0
    %619 = vset.pattern.permute.xlu0 0
    %620 = vperm.xlu0 %619, %v618
    %v621 = vpop.permute.xlu0 %620
    %vm622 = vcmp.eq.s32.totalorder %v621, 1
    %v623 = vsel %vm622, %v616, %v497
    %v624 = vsel %vm622, %v614, %v498
    %s625 = scalar_lea.vmem [#allocation4], 48
    %v626 = vld [vmem:[%s625] sm:$0xff]
    %v627 = vld [vmem:[%s625 + $0x8] sm:$0xff]
    %v628 = vunpack.c.l.bf16 %v626
    %v629 = vunpack.c.h.bf16 %v626
    %v630 = vunpack.c.l.bf16 %v627
    %v631 = vunpack.c.h.bf16 %v627
    %v632 = vpack.c.bf16 %v623, %v623
    %633 = vmatprep.subr.bf16.mxu0 %v220
    %634 = vmatpush1.bf16.msra.mxu0 %v219
    %635 = vmatprep.subr.bf16.mxu0 %v216
    %636 = vmatpush1.bf16.msra.mxu0 %v215
    %637 = vmatprep.subr.bf16.mxu0 %v212
    %638 = vmatpush1.bf16.msra.mxu0 %v211
    %639 = vmatprep.subr.bf16.mxu0 %v208
    %640 = vmatpush1.bf16.msra.mxu0 %v207
    %641 = vmatprep.subr.bf16.mxu0 %v204
    %642 = vmatpush1.bf16.msra.mxu0 %v203
    %643 = vmatprep.subr.bf16.mxu0 %v200
    %644 = vmatpush1.bf16.msra.mxu0 %v199
    %645 = vmatprep.subr.bf16.mxu0 %v196
    %646 = vmatpush1.bf16.msra.mxu0 %v195
    %647 = vmatprep.subr.bf16.mxu0 %v192
    %648 = vmatpush1.bf16.msra.mxu0 %v191
    %649 = vmatprep.subr.bf16.mxu0 0
    %650 = vmatpush2.bf16.msra.mxu0 0
    %651 = vmatprep.subr.bf16.mxu0 0
    %652 = vmatpush2.bf16.msra.mxu0 0
    %653 = vmatprep.subr.bf16.mxu0 0
    %654 = vmatpush2.bf16.msra.mxu0 0
    %655 = vmatprep.subr.bf16.mxu0 0
    %656 = vmatpush2.bf16.msra.mxu0 0
    %657 = vmatprep.subr.bf16.mxu0 0
    %658 = vmatpush2.bf16.msra.mxu0 0
    %659 = vmatprep.subr.bf16.mxu0 0
    %660 = vmatpush2.bf16.msra.mxu0 0
    %661 = vmatprep.subr.bf16.mxu0 0
    %662 = vmatpush2.bf16.msra.mxu0 0
    %663 = vmatprep.subr.bf16.mxu0 0
    %664 = vmatpush2.bf16.msra.mxu0 0
    %665 = vmatprep.mubr.bf16.mxu0 0
    %666 = vmatmul.mubr.bf16.gmra.mxu0 %v632
    %v667 = vpop.f32.mrf.mxu0
    %v668 = vadd.f32 0.0, %v667
    %v669 = vpop.f32.mrf.mxu0
    %v670 = vadd.f32 0.0, %v669
    %v671 = vpop.f32.mrf.mxu0
    %v672 = vpop.f32.mrf.mxu0
    %673 = vdwg.mxu0
    %674 = vmatprep.subr.bf16.mxu0 %v222
    %675 = vmatpush1.bf16.msra.mxu0 %v221
    %676 = vmatprep.subr.bf16.mxu0 %v218
    %677 = vmatpush1.bf16.msra.mxu0 %v217
    %678 = vmatprep.subr.bf16.mxu0 %v214
    %679 = vmatpush1.bf16.msra.mxu0 %v213
    %680 = vmatprep.subr.bf16.mxu0 %v210
    %681 = vmatpush1.bf16.msra.mxu0 %v209
    %682 = vmatprep.subr.bf16.mxu0 %v206
    %683 = vmatpush1.bf16.msra.mxu0 %v205
    %684 = vmatprep.subr.bf16.mxu0 %v202
    %685 = vmatpush1.bf16.msra.mxu0 %v201
    %686 = vmatprep.subr.bf16.mxu0 %v198
    %687 = vmatpush1.bf16.msra.mxu0 %v197
    %688 = vmatprep.subr.bf16.mxu0 %v194
    %689 = vmatpush1.bf16.msra.mxu0 %v193
    %690 = vmatprep.subr.bf16.mxu0 0
    %691 = vmatpush2.bf16.msra.mxu0 0
    %692 = vmatprep.subr.bf16.mxu0 0
    %693 = vmatpush2.bf16.msra.mxu0 0
    %694 = vmatprep.subr.bf16.mxu0 0
    %695 = vmatpush2.bf16.msra.mxu0 0
    %696 = vmatprep.subr.bf16.mxu0 0
    %697 = vmatpush2.bf16.msra.mxu0 0
    %698 = vmatprep.subr.bf16.mxu0 0
    %699 = vmatpush2.bf16.msra.mxu0 0
    %700 = vmatprep.subr.bf16.mxu0 0
    %701 = vmatpush2.bf16.msra.mxu0 0
    %702 = vmatprep.subr.bf16.mxu0 0
    %703 = vmatpush2.bf16.msra.mxu0 0
    %704 = vmatprep.subr.bf16.mxu0 0
    %705 = vmatpush2.bf16.msra.mxu0 0
    %706 = vmatprep.mubr.bf16.mxu0 0
    %707 = vmatmul.mubr.bf16.gmra.mxu0 %v632
    %v708 = vpop.f32.mrf.mxu0
    %v709 = vadd.f32 0.0, %v708
    %v710 = vpop.f32.mrf.mxu0
    %v711 = vadd.f32 0.0, %v710
    %v712 = vpop.f32.mrf.mxu0
    %v713 = vpop.f32.mrf.mxu0
    %714 = vdwg.mxu0
    %v715 = vadd.f32 %v628, %v668
    %v716 = vadd.f32 %v629, %v670
    %v717 = vadd.f32 %v630, %v709
    %v718 = vadd.f32 %v631, %v711
    %v719 = vxor.u32 %v715, 2147483648
    %v720 = vmul.f32 %v719, 1.442695
    %v721 = vpow.pop %v720
    %v722 = vadd.f32 %v721, 1.0
    %v723 = vrcp.pop %v722
    %v724 = vmul.f32 1.0, %v723
    %v725 = vxor.u32 %v716, 2147483648
    %v726 = vmul.f32 %v725, 1.442695
    %v727 = vpow.pop %v726
    %v728 = vadd.f32 %v727, 1.0
    %v729 = vrcp.pop %v728
    %v730 = vmul.f32 1.0, %v729
    %v731 = vtanh.pop %v717
    %v732 = vxor.u32 %v718, 2147483648
    %v733 = vmul.f32 %v732, 1.442695
    %v734 = vpow.pop %v733
    %v735 = vadd.f32 %v734, 1.0
    %v736 = vrcp.pop %v735
    %v737 = vmul.f32 1.0, %v736
    %v738 = vmul.f32 %v730, %v624
    %v739 = vmul.f32 %v724, %v731
    %v740 = vadd.f32 %v738, %v739
    %v741 = vtanh.pop %v740
    %v742 = vmul.f32 %v737, %v741
    %vm743 = vcmp.gt.s32.totalorder %v85, 3
    %v744 = vsel %vm743, 1, 0
    %745 = vset.pattern.permute.xlu0 0
    %746 = vperm.xlu0 %745, %v744
    %v747 = vpop.permute.xlu0 %746
    %vm748 = vcmp.eq.s32.totalorder %v747, 1
    %v749 = vsel %vm748, %v742, %v623
    %v750 = vsel %vm748, %v740, %v624
    %s751 = scalar_lea.vmem [#allocation4], 64
    %v752 = vld [vmem:[%s751] sm:$0xff]
    %v753 = vld [vmem:[%s751 + $0x8] sm:$0xff]
    %v754 = vunpack.c.l.bf16 %v752
    %v755 = vunpack.c.h.bf16 %v752
    %v756 = vunpack.c.l.bf16 %v753
    %v757 = vunpack.c.h.bf16 %v753
    %v758 = vpack.c.bf16 %v749, %v749
    %759 = vmatprep.subr.bf16.mxu0 %v220
    %760 = vmatpush1.bf16.msra.mxu0 %v219
    %761 = vmatprep.subr.bf16.mxu0 %v216
    %762 = vmatpush1.bf16.msra.mxu0 %v215
    %763 = vmatprep.subr.bf16.mxu0 %v212
    %764 = vmatpush1.bf16.msra.mxu0 %v211
    %765 = vmatprep.subr.bf16.mxu0 %v208
    %766 = vmatpush1.bf16.msra.mxu0 %v207
    %767 = vmatprep.subr.bf16.mxu0 %v204
    %768 = vmatpush1.bf16.msra.mxu0 %v203
    %769 = vmatprep.subr.bf16.mxu0 %v200
    %770 = vmatpush1.bf16.msra.mxu0 %v199
    %771 = vmatprep.subr.bf16.mxu0 %v196
    %772 = vmatpush1.bf16.msra.mxu0 %v195
    %773 = vmatprep.subr.bf16.mxu0 %v192
    %774 = vmatpush1.bf16.msra.mxu0 %v191
    %775 = vmatprep.subr.bf16.mxu0 0
    %776 = vmatpush2.bf16.msra.mxu0 0
    %777 = vmatprep.subr.bf16.mxu0 0
    %778 = vmatpush2.bf16.msra.mxu0 0
    %779 = vmatprep.subr.bf16.mxu0 0
    %780 = vmatpush2.bf16.msra.mxu0 0
    %781 = vmatprep.subr.bf16.mxu0 0
    %782 = vmatpush2.bf16.msra.mxu0 0
    %783 = vmatprep.subr.bf16.mxu0 0
    %784 = vmatpush2.bf16.msra.mxu0 0
    %785 = vmatprep.subr.bf16.mxu0 0
    %786 = vmatpush2.bf16.msra.mxu0 0
    %787 = vmatprep.subr.bf16.mxu0 0
    %788 = vmatpush2.bf16.msra.mxu0 0
    %789 = vmatprep.subr.bf16.mxu0 0
    %790 = vmatpush2.bf16.msra.mxu0 0
    %791 = vmatprep.mubr.bf16.mxu0 0
    %792 = vmatmul.mubr.bf16.gmra.mxu0 %v758
    %v793 = vpop.f32.mrf.mxu0
    %v794 = vadd.f32 0.0, %v793
    %v795 = vpop.f32.mrf.mxu0
    %v796 = vadd.f32 0.0, %v795
    %v797 = vpop.f32.mrf.mxu0
    %v798 = vpop.f32.mrf.mxu0
    %799 = vdwg.mxu0
    %800 = vmatprep.subr.bf16.mxu0 %v222
    %801 = vmatpush1.bf16.msra.mxu0 %v221
    %802 = vmatprep.subr.bf16.mxu0 %v218
    %803 = vmatpush1.bf16.msra.mxu0 %v217
    %804 = vmatprep.subr.bf16.mxu0 %v214
    %805 = vmatpush1.bf16.msra.mxu0 %v213
    %806 = vmatprep.subr.bf16.mxu0 %v210
    %807 = vmatpush1.bf16.msra.mxu0 %v209
    %808 = vmatprep.subr.bf16.mxu0 %v206
    %809 = vmatpush1.bf16.msra.mxu0 %v205
    %810 = vmatprep.subr.bf16.mxu0 %v202
    %811 = vmatpush1.bf16.msra.mxu0 %v201
    %812 = vmatprep.subr.bf16.mxu0 %v198
    %813 = vmatpush1.bf16.msra.mxu0 %v197
    %814 = vmatprep.subr.bf16.mxu0 %v194
    %815 = vmatpush1.bf16.msra.mxu0 %v193
    %816 = vmatprep.subr.bf16.mxu0 0
    %817 = vmatpush2.bf16.msra.mxu0 0
    %818 = vmatprep.subr.bf16.mxu0 0
    %819 = vmatpush2.bf16.msra.mxu0 0
    %820 = vmatprep.subr.bf16.mxu0 0
    %821 = vmatpush2.bf16.msra.mxu0 0
    %822 = vmatprep.subr.bf16.mxu0 0
    %823 = vmatpush2.bf16.msra.mxu0 0
    %824 = vmatprep.subr.bf16.mxu0 0
    %825 = vmatpush2.bf16.msra.mxu0 0
    %826 = vmatprep.subr.bf16.mxu0 0
    %827 = vmatpush2.bf16.msra.mxu0 0
    %828 = vmatprep.subr.bf16.mxu0 0
    %829 = vmatpush2.bf16.msra.mxu0 0
    %830 = vmatprep.subr.bf16.mxu0 0
    %831 = vmatpush2.bf16.msra.mxu0 0
    %832 = vmatprep.mubr.bf16.mxu0 0
    %833 = vmatmul.mubr.bf16.gmra.mxu0 %v758
    %v834 = vpop.f32.mrf.mxu0
    %v835 = vadd.f32 0.0, %v834
    %v836 = vpop.f32.mrf.mxu0
    %v837 = vadd.f32 0.0, %v836
    %v838 = vpop.f32.mrf.mxu0
    %v839 = vpop.f32.mrf.mxu0
    %840 = vdwg.mxu0
    %v841 = vadd.f32 %v754, %v794
    %v842 = vadd.f32 %v755, %v796
    %v843 = vadd.f32 %v756, %v835
    %v844 = vadd.f32 %v757, %v837
    %v845 = vxor.u32 %v841, 2147483648
    %v846 = vmul.f32 %v845, 1.442695
    %v847 = vpow.pop %v846
    %v848 = vadd.f32 %v847, 1.0
    %v849 = vrcp.pop %v848
    %v850 = vmul.f32 1.0, %v849
    %v851 = vxor.u32 %v842, 2147483648
    %v852 = vmul.f32 %v851, 1.442695
    %v853 = vpow.pop %v852
    %v854 = vadd.f32 %v853, 1.0
    %v855 = vrcp.pop %v854
    %v856 = vmul.f32 1.0, %v855
    %v857 = vtanh.pop %v843
    %v858 = vxor.u32 %v844, 2147483648
    %v859 = vmul.f32 %v858, 1.442695
    %v860 = vpow.pop %v859
    %v861 = vadd.f32 %v860, 1.0
    %v862 = vrcp.pop %v861
    %v863 = vmul.f32 1.0, %v862
    %v864 = vmul.f32 %v856, %v750
    %v865 = vmul.f32 %v850, %v857
    %v866 = vadd.f32 %v864, %v865
    %v867 = vtanh.pop %v866
    %v868 = vmul.f32 %v863, %v867
    %vm869 = vcmp.gt.s32.totalorder %v85, 4
    %v870 = vsel %vm869, 1, 0
    %871 = vset.pattern.permute.xlu0 0
    %872 = vperm.xlu0 %871, %v870
    %v873 = vpop.permute.xlu0 %872
    %vm874 = vcmp.eq.s32.totalorder %v873, 1
    %v875 = vsel %vm874, %v868, %v749
    %v876 = vsel %vm874, %v866, %v750
    %s877 = scalar_lea.vmem [#allocation4], 80
    %v878 = vld [vmem:[%s877] sm:$0xff]
    %v879 = vld [vmem:[%s877 + $0x8] sm:$0xff]
    %v880 = vunpack.c.l.bf16 %v878
    %v881 = vunpack.c.h.bf16 %v878
    %v882 = vunpack.c.l.bf16 %v879
    %v883 = vunpack.c.h.bf16 %v879
    %v884 = vpack.c.bf16 %v875, %v875
    %885 = vmatprep.subr.bf16.mxu0 %v220
    %886 = vmatpush1.bf16.msra.mxu0 %v219
    %887 = vmatprep.subr.bf16.mxu0 %v216
    %888 = vmatpush1.bf16.msra.mxu0 %v215
    %889 = vmatprep.subr.bf16.mxu0 %v212
    %890 = vmatpush1.bf16.msra.mxu0 %v211
    %891 = vmatprep.subr.bf16.mxu0 %v208
    %892 = vmatpush1.bf16.msra.mxu0 %v207
    %893 = vmatprep.subr.bf16.mxu0 %v204
    %894 = vmatpush1.bf16.msra.mxu0 %v203
    %895 = vmatprep.subr.bf16.mxu0 %v200
    %896 = vmatpush1.bf16.msra.mxu0 %v199
    %897 = vmatprep.subr.bf16.mxu0 %v196
    %898 = vmatpush1.bf16.msra.mxu0 %v195
    %899 = vmatprep.subr.bf16.mxu0 %v192
    %900 = vmatpush1.bf16.msra.mxu0 %v191
    %901 = vmatprep.subr.bf16.mxu0 0
    %902 = vmatpush2.bf16.msra.mxu0 0
    %903 = vmatprep.subr.bf16.mxu0 0
    %904 = vmatpush2.bf16.msra.mxu0 0
    %905 = vmatprep.subr.bf16.mxu0 0
    %906 = vmatpush2.bf16.msra.mxu0 0
    %907 = vmatprep.subr.bf16.mxu0 0
    %908 = vmatpush2.bf16.msra.mxu0 0
    %909 = vmatprep.subr.bf16.mxu0 0
    %910 = vmatpush2.bf16.msra.mxu0 0
    %911 = vmatprep.subr.bf16.mxu0 0
    %912 = vmatpush2.bf16.msra.mxu0 0
    %913 = vmatprep.subr.bf16.mxu0 0
    %914 = vmatpush2.bf16.msra.mxu0 0
    %915 = vmatprep.subr.bf16.mxu0 0
    %916 = vmatpush2.bf16.msra.mxu0 0
    %917 = vmatprep.mubr.bf16.mxu0 0
    %918 = vmatmul.mubr.bf16.gmra.mxu0 %v884
    %v919 = vpop.f32.mrf.mxu0
    %v920 = vadd.f32 0.0, %v919
    %v921 = vpop.f32.mrf.mxu0
    %v922 = vadd.f32 0.0, %v921
    %v923 = vpop.f32.mrf.mxu0
    %v924 = vpop.f32.mrf.mxu0
    %925 = vdwg.mxu0
    %926 = vmatprep.subr.bf16.mxu0 %v222
    %927 = vmatpush1.bf16.msra.mxu0 %v221
    %928 = vmatprep.subr.bf16.mxu0 %v218
    %929 = vmatpush1.bf16.msra.mxu0 %v217
    %930 = vmatprep.subr.bf16.mxu0 %v214
    %931 = vmatpush1.bf16.msra.mxu0 %v213
    %932 = vmatprep.subr.bf16.mxu0 %v210
    %933 = vmatpush1.bf16.msra.mxu0 %v209
    %934 = vmatprep.subr.bf16.mxu0 %v206
    %935 = vmatpush1.bf16.msra.mxu0 %v205
    %936 = vmatprep.subr.bf16.mxu0 %v202
    %937 = vmatpush1.bf16.msra.mxu0 %v201
    %938 = vmatprep.subr.bf16.mxu0 %v198
    %939 = vmatpush1.bf16.msra.mxu0 %v197
    %940 = vmatprep.subr.bf16.mxu0 %v194
    %941 = vmatpush1.bf16.msra.mxu0 %v193
    %942 = vmatprep.subr.bf16.mxu0 0
    %943 = vmatpush2.bf16.msra.mxu0 0
    %944 = vmatprep.subr.bf16.mxu0 0
    %945 = vmatpush2.bf16.msra.mxu0 0
    %946 = vmatprep.subr.bf16.mxu0 0
    %947 = vmatpush2.bf16.msra.mxu0 0
    %948 = vmatprep.subr.bf16.mxu0 0
    %949 = vmatpush2.bf16.msra.mxu0 0
    %950 = vmatprep.subr.bf16.mxu0 0
    %951 = vmatpush2.bf16.msra.mxu0 0
    %952 = vmatprep.subr.bf16.mxu0 0
    %953 = vmatpush2.bf16.msra.mxu0 0
    %954 = vmatprep.subr.bf16.mxu0 0
    %955 = vmatpush2.bf16.msra.mxu0 0
    %956 = vmatprep.subr.bf16.mxu0 0
    %957 = vmatpush2.bf16.msra.mxu0 0
    %958 = vmatprep.mubr.bf16.mxu0 0
    %959 = vmatmul.mubr.bf16.gmra.mxu0 %v884
    %v960 = vpop.f32.mrf.mxu0
    %v961 = vadd.f32 0.0, %v960
    %v962 = vpop.f32.mrf.mxu0
    %v963 = vadd.f32 0.0, %v962
    %v964 = vpop.f32.mrf.mxu0
    %v965 = vpop.f32.mrf.mxu0
    %966 = vdwg.mxu0
    %v967 = vadd.f32 %v880, %v920
    %v968 = vadd.f32 %v881, %v922
    %v969 = vadd.f32 %v882, %v961
    %v970 = vadd.f32 %v883, %v963
    %v971 = vxor.u32 %v967, 2147483648
    %v972 = vmul.f32 %v971, 1.442695
    %v973 = vpow.pop %v972
    %v974 = vadd.f32 %v973, 1.0
    %v975 = vrcp.pop %v974
    %v976 = vmul.f32 1.0, %v975
    %v977 = vxor.u32 %v968, 2147483648
    %v978 = vmul.f32 %v977, 1.442695
    %v979 = vpow.pop %v978
    %v980 = vadd.f32 %v979, 1.0
    %v981 = vrcp.pop %v980
    %v982 = vmul.f32 1.0, %v981
    %v983 = vtanh.pop %v969
    %v984 = vxor.u32 %v970, 2147483648
    %v985 = vmul.f32 %v984, 1.442695
    %v986 = vpow.pop %v985
    %v987 = vadd.f32 %v986, 1.0
    %v988 = vrcp.pop %v987
    %v989 = vmul.f32 1.0, %v988
    %v990 = vmul.f32 %v982, %v876
    %v991 = vmul.f32 %v976, %v983
    %v992 = vadd.f32 %v990, %v991
    %v993 = vtanh.pop %v992
    %v994 = vmul.f32 %v989, %v993
    %vm995 = vcmp.gt.s32.totalorder %v85, 5
    %v996 = vsel %vm995, 1, 0
    %997 = vset.pattern.permute.xlu0 0
    %998 = vperm.xlu0 %997, %v996
    %v999 = vpop.permute.xlu0 %998
    %vm1000 = vcmp.eq.s32.totalorder %v999, 1
    %v1001 = vsel %vm1000, %v994, %v875
    %v1002 = vsel %vm1000, %v992, %v876
    %s1003 = scalar_lea.vmem [#allocation4], 96
    %v1004 = vld [vmem:[%s1003] sm:$0xff]
    %v1005 = vld [vmem:[%s1003 + $0x8] sm:$0xff]
    %v1006 = vunpack.c.l.bf16 %v1004
    %v1007 = vunpack.c.h.bf16 %v1004
    %v1008 = vunpack.c.l.bf16 %v1005
    %v1009 = vunpack.c.h.bf16 %v1005
    %v1010 = vpack.c.bf16 %v1001, %v1001
    %1011 = vmatprep.subr.bf16.mxu0 %v220
    %1012 = vmatpush1.bf16.msra.mxu0 %v219
    %1013 = vmatprep.subr.bf16.mxu0 %v216
    %1014 = vmatpush1.bf16.msra.mxu0 %v215
    %1015 = vmatprep.subr.bf16.mxu0 %v212
    %1016 = vmatpush1.bf16.msra.mxu0 %v211
    %1017 = vmatprep.subr.bf16.mxu0 %v208
    %1018 = vmatpush1.bf16.msra.mxu0 %v207
    %1019 = vmatprep.subr.bf16.mxu0 %v204
    %1020 = vmatpush1.bf16.msra.mxu0 %v203
    %1021 = vmatprep.subr.bf16.mxu0 %v200
    %1022 = vmatpush1.bf16.msra.mxu0 %v199
    %1023 = vmatprep.subr.bf16.mxu0 %v196
    %1024 = vmatpush1.bf16.msra.mxu0 %v195
    %1025 = vmatprep.subr.bf16.mxu0 %v192
    %1026 = vmatpush1.bf16.msra.mxu0 %v191
    %1027 = vmatprep.subr.bf16.mxu0 0
    %1028 = vmatpush2.bf16.msra.mxu0 0
    %1029 = vmatprep.subr.bf16.mxu0 0
    %1030 = vmatpush2.bf16.msra.mxu0 0
    %1031 = vmatprep.subr.bf16.mxu0 0
    %1032 = vmatpush2.bf16.msra.mxu0 0
    %1033 = vmatprep.subr.bf16.mxu0 0
    %1034 = vmatpush2.bf16.msra.mxu0 0
    %1035 = vmatprep.subr.bf16.mxu0 0
    %1036 = vmatpush2.bf16.msra.mxu0 0
    %1037 = vmatprep.subr.bf16.mxu0 0
    %1038 = vmatpush2.bf16.msra.mxu0 0
    %1039 = vmatprep.subr.bf16.mxu0 0
    %1040 = vmatpush2.bf16.msra.mxu0 0
    %1041 = vmatprep.subr.bf16.mxu0 0
    %1042 = vmatpush2.bf16.msra.mxu0 0
    %1043 = vmatprep.mubr.bf16.mxu0 0
    %1044 = vmatmul.mubr.bf16.gmra.mxu0 %v1010
    %v1045 = vpop.f32.mrf.mxu0
    %v1046 = vadd.f32 0.0, %v1045
    %v1047 = vpop.f32.mrf.mxu0
    %v1048 = vadd.f32 0.0, %v1047
    %v1049 = vpop.f32.mrf.mxu0
    %v1050 = vpop.f32.mrf.mxu0
    %1051 = vdwg.mxu0
    %1052 = vmatprep.subr.bf16.mxu0 %v222
    %1053 = vmatpush1.bf16.msra.mxu0 %v221
    %1054 = vmatprep.subr.bf16.mxu0 %v218
    %1055 = vmatpush1.bf16.msra.mxu0 %v217
    %1056 = vmatprep.subr.bf16.mxu0 %v214
    %1057 = vmatpush1.bf16.msra.mxu0 %v213
    %1058 = vmatprep.subr.bf16.mxu0 %v210
    %1059 = vmatpush1.bf16.msra.mxu0 %v209
    %1060 = vmatprep.subr.bf16.mxu0 %v206
    %1061 = vmatpush1.bf16.msra.mxu0 %v205
    %1062 = vmatprep.subr.bf16.mxu0 %v202
    %1063 = vmatpush1.bf16.msra.mxu0 %v201
    %1064 = vmatprep.subr.bf16.mxu0 %v198
    %1065 = vmatpush1.bf16.msra.mxu0 %v197
    %1066 = vmatprep.subr.bf16.mxu0 %v194
    %1067 = vmatpush1.bf16.msra.mxu0 %v193
    %1068 = vmatprep.subr.bf16.mxu0 0
    %1069 = vmatpush2.bf16.msra.mxu0 0
    %1070 = vmatprep.subr.bf16.mxu0 0
    %1071 = vmatpush2.bf16.msra.mxu0 0
    %1072 = vmatprep.subr.bf16.mxu0 0
    %1073 = vmatpush2.bf16.msra.mxu0 0
    %1074 = vmatprep.subr.bf16.mxu0 0
    %1075 = vmatpush2.bf16.msra.mxu0 0
    %1076 = vmatprep.subr.bf16.mxu0 0
    %1077 = vmatpush2.bf16.msra.mxu0 0
    %1078 = vmatprep.subr.bf16.mxu0 0
    %1079 = vmatpush2.bf16.msra.mxu0 0
    %1080 = vmatprep.subr.bf16.mxu0 0
    %1081 = vmatpush2.bf16.msra.mxu0 0
    %1082 = vmatprep.subr.bf16.mxu0 0
    %1083 = vmatpush2.bf16.msra.mxu0 0
    %1084 = vmatprep.mubr.bf16.mxu0 0
    %1085 = vmatmul.mubr.bf16.gmra.mxu0 %v1010
    %v1086 = vpop.f32.mrf.mxu0
    %v1087 = vadd.f32 0.0, %v1086
    %v1088 = vpop.f32.mrf.mxu0
    %v1089 = vadd.f32 0.0, %v1088
    %v1090 = vpop.f32.mrf.mxu0
    %v1091 = vpop.f32.mrf.mxu0
    %1092 = vdwg.mxu0
    %v1093 = vadd.f32 %v1006, %v1046
    %v1094 = vadd.f32 %v1007, %v1048
    %v1095 = vadd.f32 %v1008, %v1087
    %v1096 = vadd.f32 %v1009, %v1089
    %v1097 = vxor.u32 %v1093, 2147483648
    %v1098 = vmul.f32 %v1097, 1.442695
    %v1099 = vpow.pop %v1098
    %v1100 = vadd.f32 %v1099, 1.0
    %v1101 = vrcp.pop %v1100
    %v1102 = vmul.f32 1.0, %v1101
    %v1103 = vxor.u32 %v1094, 2147483648
    %v1104 = vmul.f32 %v1103, 1.442695
    %v1105 = vpow.pop %v1104
    %v1106 = vadd.f32 %v1105, 1.0
    %v1107 = vrcp.pop %v1106
    %v1108 = vmul.f32 1.0, %v1107
    %v1109 = vtanh.pop %v1095
    %v1110 = vxor.u32 %v1096, 2147483648
    %v1111 = vmul.f32 %v1110, 1.442695
    %v1112 = vpow.pop %v1111
    %v1113 = vadd.f32 %v1112, 1.0
    %v1114 = vrcp.pop %v1113
    %v1115 = vmul.f32 1.0, %v1114
    %v1116 = vmul.f32 %v1108, %v1002
    %v1117 = vmul.f32 %v1102, %v1109
    %v1118 = vadd.f32 %v1116, %v1117
    %v1119 = vtanh.pop %v1118
    %v1120 = vmul.f32 %v1115, %v1119
    %vm1121 = vcmp.gt.s32.totalorder %v85, 6
    %v1122 = vsel %vm1121, 1, 0
    %1123 = vset.pattern.permute.xlu0 0
    %1124 = vperm.xlu0 %1123, %v1122
    %v1125 = vpop.permute.xlu0 %1124
    %vm1126 = vcmp.eq.s32.totalorder %v1125, 1
    %v1127 = vsel %vm1126, %v1120, %v1001
    %v1128 = vsel %vm1126, %v1118, %v1002
    %s1129 = scalar_lea.vmem [#allocation4], 112
    %v1130 = vld [vmem:[%s1129] sm:$0xff]
    %v1131 = vld [vmem:[%s1129 + $0x8] sm:$0xff]
    %v1132 = vunpack.c.l.bf16 %v1130
    %v1133 = vunpack.c.h.bf16 %v1130
    %v1134 = vunpack.c.l.bf16 %v1131
    %v1135 = vunpack.c.h.bf16 %v1131
    %v1136 = vpack.c.bf16 %v1127, %v1127
    %1137 = vmatprep.subr.bf16.mxu0 %v220
    %1138 = vmatpush1.bf16.msra.mxu0 %v219
    %1139 = vmatprep.subr.bf16.mxu0 %v216
    %1140 = vmatpush1.bf16.msra.mxu0 %v215
    %1141 = vmatprep.subr.bf16.mxu0 %v212
    %1142 = vmatpush1.bf16.msra.mxu0 %v211
    %1143 = vmatprep.subr.bf16.mxu0 %v208
    %1144 = vmatpush1.bf16.msra.mxu0 %v207
    %1145 = vmatprep.subr.bf16.mxu0 %v204
    %1146 = vmatpush1.bf16.msra.mxu0 %v203
    %1147 = vmatprep.subr.bf16.mxu0 %v200
    %1148 = vmatpush1.bf16.msra.mxu0 %v199
    %1149 = vmatprep.subr.bf16.mxu0 %v196
    %1150 = vmatpush1.bf16.msra.mxu0 %v195
    %1151 = vmatprep.subr.bf16.mxu0 %v192
    %1152 = vmatpush1.bf16.msra.mxu0 %v191
    %1153 = vmatprep.subr.bf16.mxu0 0
    %1154 = vmatpush2.bf16.msra.mxu0 0
    %1155 = vmatprep.subr.bf16.mxu0 0
    %1156 = vmatpush2.bf16.msra.mxu0 0
    %1157 = vmatprep.subr.bf16.mxu0 0
    %1158 = vmatpush2.bf16.msra.mxu0 0
    %1159 = vmatprep.subr.bf16.mxu0 0
    %1160 = vmatpush2.bf16.msra.mxu0 0
    %1161 = vmatprep.subr.bf16.mxu0 0
    %1162 = vmatpush2.bf16.msra.mxu0 0
    %1163 = vmatprep.subr.bf16.mxu0 0
    %1164 = vmatpush2.bf16.msra.mxu0 0
    %1165 = vmatprep.subr.bf16.mxu0 0
    %1166 = vmatpush2.bf16.msra.mxu0 0
    %1167 = vmatprep.subr.bf16.mxu0 0
    %1168 = vmatpush2.bf16.msra.mxu0 0
    %1169 = vmatprep.mubr.bf16.mxu0 0
    %1170 = vmatmul.mubr.bf16.gmra.mxu0 %v1136
    %v1171 = vpop.f32.mrf.mxu0
    %v1172 = vadd.f32 0.0, %v1171
    %v1173 = vpop.f32.mrf.mxu0
    %v1174 = vadd.f32 0.0, %v1173
    %v1175 = vpop.f32.mrf.mxu0
    %v1176 = vpop.f32.mrf.mxu0
    %1177 = vdwg.mxu0
    %1178 = vmatprep.subr.bf16.mxu0 %v222
    %1179 = vmatpush1.bf16.msra.mxu0 %v221
    %1180 = vmatprep.subr.bf16.mxu0 %v218
    %1181 = vmatpush1.bf16.msra.mxu0 %v217
    %1182 = vmatprep.subr.bf16.mxu0 %v214
    %1183 = vmatpush1.bf16.msra.mxu0 %v213
    %1184 = vmatprep.subr.bf16.mxu0 %v210
    %1185 = vmatpush1.bf16.msra.mxu0 %v209
    %1186 = vmatprep.subr.bf16.mxu0 %v206
    %1187 = vmatpush1.bf16.msra.mxu0 %v205
    %1188 = vmatprep.subr.bf16.mxu0 %v202
    %1189 = vmatpush1.bf16.msra.mxu0 %v201
    %1190 = vmatprep.subr.bf16.mxu0 %v198
    %1191 = vmatpush1.bf16.msra.mxu0 %v197
    %1192 = vmatprep.subr.bf16.mxu0 %v194
    %1193 = vmatpush1.bf16.msra.mxu0 %v193
    %1194 = vmatprep.subr.bf16.mxu0 0
    %1195 = vmatpush2.bf16.msra.mxu0 0
    %1196 = vmatprep.subr.bf16.mxu0 0
    %1197 = vmatpush2.bf16.msra.mxu0 0
    %1198 = vmatprep.subr.bf16.mxu0 0
    %1199 = vmatpush2.bf16.msra.mxu0 0
    %1200 = vmatprep.subr.bf16.mxu0 0
    %1201 = vmatpush2.bf16.msra.mxu0 0
    %1202 = vmatprep.subr.bf16.mxu0 0
    %1203 = vmatpush2.bf16.msra.mxu0 0
    %1204 = vmatprep.subr.bf16.mxu0 0
    %1205 = vmatpush2.bf16.msra.mxu0 0
    %1206 = vmatprep.subr.bf16.mxu0 0
    %1207 = vmatpush2.bf16.msra.mxu0 0
    %1208 = vmatprep.subr.bf16.mxu0 0
    %1209 = vmatpush2.bf16.msra.mxu0 0
    %1210 = vmatprep.mubr.bf16.mxu0 0
    %1211 = vmatmul.mubr.bf16.gmra.mxu0 %v1136
    %v1212 = vpop.f32.mrf.mxu0
    %v1213 = vadd.f32 0.0, %v1212
    %v1214 = vpop.f32.mrf.mxu0
    %v1215 = vadd.f32 0.0, %v1214
    %v1216 = vpop.f32.mrf.mxu0
    %v1217 = vpop.f32.mrf.mxu0
    %1218 = vdwg.mxu0
    %v1219 = vadd.f32 %v1132, %v1172
    %v1220 = vadd.f32 %v1133, %v1174
    %v1221 = vadd.f32 %v1134, %v1213
    %v1222 = vadd.f32 %v1135, %v1215
    %v1223 = vxor.u32 %v1219, 2147483648
    %v1224 = vmul.f32 %v1223, 1.442695
    %v1225 = vpow.pop %v1224
    %v1226 = vadd.f32 %v1225, 1.0
    %v1227 = vrcp.pop %v1226
    %v1228 = vmul.f32 1.0, %v1227
    %v1229 = vxor.u32 %v1220, 2147483648
    %v1230 = vmul.f32 %v1229, 1.442695
    %v1231 = vpow.pop %v1230
    %v1232 = vadd.f32 %v1231, 1.0
    %v1233 = vrcp.pop %v1232
    %v1234 = vmul.f32 1.0, %v1233
    %v1235 = vtanh.pop %v1221
    %v1236 = vxor.u32 %v1222, 2147483648
    %v1237 = vmul.f32 %v1236, 1.442695
    %v1238 = vpow.pop %v1237
    %v1239 = vadd.f32 %v1238, 1.0
    %v1240 = vrcp.pop %v1239
    %v1241 = vmul.f32 1.0, %v1240
    %v1242 = vmul.f32 %v1234, %v1128
    %v1243 = vmul.f32 %v1228, %v1235
    %v1244 = vadd.f32 %v1242, %v1243
    %v1245 = vtanh.pop %v1244
    %v1246 = vmul.f32 %v1241, %v1245
    %vm1247 = vcmp.gt.s32.totalorder %v85, 7
    %v1248 = vsel %vm1247, 1, 0
    %1249 = vset.pattern.permute.xlu0 0
    %1250 = vperm.xlu0 %1249, %v1248
    %v1251 = vpop.permute.xlu0 %1250
    %vm1252 = vcmp.eq.s32.totalorder %v1251, 1
    %v1253 = vsel %vm1252, %v1246, %v1127
    %v1254 = vsel %vm1252, %v1244, %v1128
    %s1255 = scalar_lea.vmem [#allocation4], 128
    %v1256 = vld [vmem:[%s1255] sm:$0xff]
    %v1257 = vld [vmem:[%s1255 + $0x8] sm:$0xff]
    %v1258 = vunpack.c.l.bf16 %v1256
    %v1259 = vunpack.c.h.bf16 %v1256
    %v1260 = vunpack.c.l.bf16 %v1257
    %v1261 = vunpack.c.h.bf16 %v1257
    %v1262 = vpack.c.bf16 %v1253, %v1253
    %1263 = vmatprep.subr.bf16.mxu0 %v220
    %1264 = vmatpush1.bf16.msra.mxu0 %v219
    %1265 = vmatprep.subr.bf16.mxu0 %v216
    %1266 = vmatpush1.bf16.msra.mxu0 %v215
    %1267 = vmatprep.subr.bf16.mxu0 %v212
    %1268 = vmatpush1.bf16.msra.mxu0 %v211
    %1269 = vmatprep.subr.bf16.mxu0 %v208
    %1270 = vmatpush1.bf16.msra.mxu0 %v207
    %1271 = vmatprep.subr.bf16.mxu0 %v204
    %1272 = vmatpush1.bf16.msra.mxu0 %v203
    %1273 = vmatprep.subr.bf16.mxu0 %v200
    %1274 = vmatpush1.bf16.msra.mxu0 %v199
    %1275 = vmatprep.subr.bf16.mxu0 %v196
    %1276 = vmatpush1.bf16.msra.mxu0 %v195
    %1277 = vmatprep.subr.bf16.mxu0 %v192
    %1278 = vmatpush1.bf16.msra.mxu0 %v191
    %1279 = vmatprep.subr.bf16.mxu0 0
    %1280 = vmatpush2.bf16.msra.mxu0 0
    %1281 = vmatprep.subr.bf16.mxu0 0
    %1282 = vmatpush2.bf16.msra.mxu0 0
    %1283 = vmatprep.subr.bf16.mxu0 0
    %1284 = vmatpush2.bf16.msra.mxu0 0
    %1285 = vmatprep.subr.bf16.mxu0 0
    %1286 = vmatpush2.bf16.msra.mxu0 0
    %1287 = vmatprep.subr.bf16.mxu0 0
    %1288 = vmatpush2.bf16.msra.mxu0 0
    %1289 = vmatprep.subr.bf16.mxu0 0
    %1290 = vmatpush2.bf16.msra.mxu0 0
    %1291 = vmatprep.subr.bf16.mxu0 0
    %1292 = vmatpush2.bf16.msra.mxu0 0
    %1293 = vmatprep.subr.bf16.mxu0 0
    %1294 = vmatpush2.bf16.msra.mxu0 0
    %1295 = vmatprep.mubr.bf16.mxu0 0
    %1296 = vmatmul.mubr.bf16.gmra.mxu0 %v1262
    %v1297 = vpop.f32.mrf.mxu0
    %v1298 = vadd.f32 0.0, %v1297
    %v1299 = vpop.f32.mrf.mxu0
    %v1300 = vadd.f32 0.0, %v1299
    %v1301 = vpop.f32.mrf.mxu0
    %v1302 = vpop.f32.mrf.mxu0
    %1303 = vdwg.mxu0
    %1304 = vmatprep.subr.bf16.mxu0 %v222
    %1305 = vmatpush1.bf16.msra.mxu0 %v221
    %1306 = vmatprep.subr.bf16.mxu0 %v218
    %1307 = vmatpush1.bf16.msra.mxu0 %v217
    %1308 = vmatprep.subr.bf16.mxu0 %v214
    %1309 = vmatpush1.bf16.msra.mxu0 %v213
    %1310 = vmatprep.subr.bf16.mxu0 %v210
    %1311 = vmatpush1.bf16.msra.mxu0 %v209
    %1312 = vmatprep.subr.bf16.mxu0 %v206
    %1313 = vmatpush1.bf16.msra.mxu0 %v205
    %1314 = vmatprep.subr.bf16.mxu0 %v202
    %1315 = vmatpush1.bf16.msra.mxu0 %v201
    %1316 = vmatprep.subr.bf16.mxu0 %v198
    %1317 = vmatpush1.bf16.msra.mxu0 %v197
    %1318 = vmatprep.subr.bf16.mxu0 %v194
    %1319 = vmatpush1.bf16.msra.mxu0 %v193
    %1320 = vmatprep.subr.bf16.mxu0 0
    %1321 = vmatpush2.bf16.msra.mxu0 0
    %1322 = vmatprep.subr.bf16.mxu0 0
    %1323 = vmatpush2.bf16.msra.mxu0 0
    %1324 = vmatprep.subr.bf16.mxu0 0
    %1325 = vmatpush2.bf16.msra.mxu0 0
    %1326 = vmatprep.subr.bf16.mxu0 0
    %1327 = vmatpush2.bf16.msra.mxu0 0
    %1328 = vmatprep.subr.bf16.mxu0 0
    %1329 = vmatpush2.bf16.msra.mxu0 0
    %1330 = vmatprep.subr.bf16.mxu0 0
    %1331 = vmatpush2.bf16.msra.mxu0 0
    %1332 = vmatprep.subr.bf16.mxu0 0
    %1333 = vmatpush2.bf16.msra.mxu0 0
    %1334 = vmatprep.subr.bf16.mxu0 0
    %1335 = vmatpush2.bf16.msra.mxu0 0
    %1336 = vmatprep.mubr.bf16.mxu0 0
    %1337 = vmatmul.mubr.bf16.gmra.mxu0 %v1262
    %v1338 = vpop.f32.mrf.mxu0
    %v1339 = vadd.f32 0.0, %v1338
    %v1340 = vpop.f32.mrf.mxu0
    %v1341 = vadd.f32 0.0, %v1340
    %v1342 = vpop.f32.mrf.mxu0
    %v1343 = vpop.f32.mrf.mxu0
    %1344 = vdwg.mxu0
    %v1345 = vadd.f32 %v1258, %v1298
    %v1346 = vadd.f32 %v1259, %v1300
    %v1347 = vadd.f32 %v1260, %v1339
    %v1348 = vadd.f32 %v1261, %v1341
    %v1349 = vxor.u32 %v1345, 2147483648
    %v1350 = vmul.f32 %v1349, 1.442695
    %v1351 = vpow.pop %v1350
    %v1352 = vadd.f32 %v1351, 1.0
    %v1353 = vrcp.pop %v1352
    %v1354 = vmul.f32 1.0, %v1353
    %v1355 = vxor.u32 %v1346, 2147483648
    %v1356 = vmul.f32 %v1355, 1.442695
    %v1357 = vpow.pop %v1356
    %v1358 = vadd.f32 %v1357, 1.0
    %v1359 = vrcp.pop %v1358
    %v1360 = vmul.f32 1.0, %v1359
    %v1361 = vtanh.pop %v1347
    %v1362 = vxor.u32 %v1348, 2147483648
    %v1363 = vmul.f32 %v1362, 1.442695
    %v1364 = vpow.pop %v1363
    %v1365 = vadd.f32 %v1364, 1.0
    %v1366 = vrcp.pop %v1365
    %v1367 = vmul.f32 1.0, %v1366
    %v1368 = vmul.f32 %v1360, %v1254
    %v1369 = vmul.f32 %v1354, %v1361
    %v1370 = vadd.f32 %v1368, %v1369
    %v1371 = vtanh.pop %v1370
    %v1372 = vmul.f32 %v1367, %v1371
    %vm1373 = vcmp.gt.s32.totalorder %v85, 8
    %v1374 = vsel %vm1373, 1, 0
    %1375 = vset.pattern.permute.xlu0 0
    %1376 = vperm.xlu0 %1375, %v1374
    %v1377 = vpop.permute.xlu0 %1376
    %vm1378 = vcmp.eq.s32.totalorder %v1377, 1
    %v1379 = vsel %vm1378, %v1372, %v1253
    %v1380 = vsel %vm1378, %v1370, %v1254
    %s1381 = scalar_lea.vmem [#allocation4], 144
    %v1382 = vld [vmem:[%s1381] sm:$0xff]
    %v1383 = vld [vmem:[%s1381 + $0x8] sm:$0xff]
    %v1384 = vunpack.c.l.bf16 %v1382
    %v1385 = vunpack.c.h.bf16 %v1382
    %v1386 = vunpack.c.l.bf16 %v1383
    %v1387 = vunpack.c.h.bf16 %v1383
    %v1388 = vpack.c.bf16 %v1379, %v1379
    %1389 = vmatprep.subr.bf16.mxu0 %v220
    %1390 = vmatpush1.bf16.msra.mxu0 %v219
    %1391 = vmatprep.subr.bf16.mxu0 %v216
    %1392 = vmatpush1.bf16.msra.mxu0 %v215
    %1393 = vmatprep.subr.bf16.mxu0 %v212
    %1394 = vmatpush1.bf16.msra.mxu0 %v211
    %1395 = vmatprep.subr.bf16.mxu0 %v208
    %1396 = vmatpush1.bf16.msra.mxu0 %v207
    %1397 = vmatprep.subr.bf16.mxu0 %v204
    %1398 = vmatpush1.bf16.msra.mxu0 %v203
    %1399 = vmatprep.subr.bf16.mxu0 %v200
    %1400 = vmatpush1.bf16.msra.mxu0 %v199
    %1401 = vmatprep.subr.bf16.mxu0 %v196
    %1402 = vmatpush1.bf16.msra.mxu0 %v195
    %1403 = vmatprep.subr.bf16.mxu0 %v192
    %1404 = vmatpush1.bf16.msra.mxu0 %v191
    %1405 = vmatprep.subr.bf16.mxu0 0
    %1406 = vmatpush2.bf16.msra.mxu0 0
    %1407 = vmatprep.subr.bf16.mxu0 0
    %1408 = vmatpush2.bf16.msra.mxu0 0
    %1409 = vmatprep.subr.bf16.mxu0 0
    %1410 = vmatpush2.bf16.msra.mxu0 0
    %1411 = vmatprep.subr.bf16.mxu0 0
    %1412 = vmatpush2.bf16.msra.mxu0 0
    %1413 = vmatprep.subr.bf16.mxu0 0
    %1414 = vmatpush2.bf16.msra.mxu0 0
    %1415 = vmatprep.subr.bf16.mxu0 0
    %1416 = vmatpush2.bf16.msra.mxu0 0
    %1417 = vmatprep.subr.bf16.mxu0 0
    %1418 = vmatpush2.bf16.msra.mxu0 0
    %1419 = vmatprep.subr.bf16.mxu0 0
    %1420 = vmatpush2.bf16.msra.mxu0 0
    %1421 = vmatprep.mubr.bf16.mxu0 0
    %1422 = vmatmul.mubr.bf16.gmra.mxu0 %v1388
    %v1423 = vpop.f32.mrf.mxu0
    %v1424 = vadd.f32 0.0, %v1423
    %v1425 = vpop.f32.mrf.mxu0
    %v1426 = vadd.f32 0.0, %v1425
    %v1427 = vpop.f32.mrf.mxu0
    %v1428 = vpop.f32.mrf.mxu0
    %1429 = vdwg.mxu0
    %1430 = vmatprep.subr.bf16.mxu0 %v222
    %1431 = vmatpush1.bf16.msra.mxu0 %v221
    %1432 = vmatprep.subr.bf16.mxu0 %v218
    %1433 = vmatpush1.bf16.msra.mxu0 %v217
    %1434 = vmatprep.subr.bf16.mxu0 %v214
    %1435 = vmatpush1.bf16.msra.mxu0 %v213
    %1436 = vmatprep.subr.bf16.mxu0 %v210
    %1437 = vmatpush1.bf16.msra.mxu0 %v209
    %1438 = vmatprep.subr.bf16.mxu0 %v206
    %1439 = vmatpush1.bf16.msra.mxu0 %v205
    %1440 = vmatprep.subr.bf16.mxu0 %v202
    %1441 = vmatpush1.bf16.msra.mxu0 %v201
    %1442 = vmatprep.subr.bf16.mxu0 %v198
    %1443 = vmatpush1.bf16.msra.mxu0 %v197
    %1444 = vmatprep.subr.bf16.mxu0 %v194
    %1445 = vmatpush1.bf16.msra.mxu0 %v193
    %1446 = vmatprep.subr.bf16.mxu0 0
    %1447 = vmatpush2.bf16.msra.mxu0 0
    %1448 = vmatprep.subr.bf16.mxu0 0
    %1449 = vmatpush2.bf16.msra.mxu0 0
    %1450 = vmatprep.subr.bf16.mxu0 0
    %1451 = vmatpush2.bf16.msra.mxu0 0
    %1452 = vmatprep.subr.bf16.mxu0 0
    %1453 = vmatpush2.bf16.msra.mxu0 0
    %1454 = vmatprep.subr.bf16.mxu0 0
    %1455 = vmatpush2.bf16.msra.mxu0 0
    %1456 = vmatprep.subr.bf16.mxu0 0
    %1457 = vmatpush2.bf16.msra.mxu0 0
    %1458 = vmatprep.subr.bf16.mxu0 0
    %1459 = vmatpush2.bf16.msra.mxu0 0
    %1460 = vmatprep.subr.bf16.mxu0 0
    %1461 = vmatpush2.bf16.msra.mxu0 0
    %1462 = vmatprep.mubr.bf16.mxu0 0
    %1463 = vmatmul.mubr.bf16.gmra.mxu0 %v1388
    %v1464 = vpop.f32.mrf.mxu0
    %v1465 = vadd.f32 0.0, %v1464
    %v1466 = vpop.f32.mrf.mxu0
    %v1467 = vadd.f32 0.0, %v1466
    %v1468 = vpop.f32.mrf.mxu0
    %v1469 = vpop.f32.mrf.mxu0
    %1470 = vdwg.mxu0
    %v1471 = vadd.f32 %v1384, %v1424
    %v1472 = vadd.f32 %v1385, %v1426
    %v1473 = vadd.f32 %v1386, %v1465
    %v1474 = vadd.f32 %v1387, %v1467
    %v1475 = vxor.u32 %v1471, 2147483648
    %v1476 = vmul.f32 %v1475, 1.442695
    %v1477 = vpow.pop %v1476
    %v1478 = vadd.f32 %v1477, 1.0
    %v1479 = vrcp.pop %v1478
    %v1480 = vmul.f32 1.0, %v1479
    %v1481 = vxor.u32 %v1472, 2147483648
    %v1482 = vmul.f32 %v1481, 1.442695
    %v1483 = vpow.pop %v1482
    %v1484 = vadd.f32 %v1483, 1.0
    %v1485 = vrcp.pop %v1484
    %v1486 = vmul.f32 1.0, %v1485
    %v1487 = vtanh.pop %v1473
    %v1488 = vxor.u32 %v1474, 2147483648
    %v1489 = vmul.f32 %v1488, 1.442695
    %v1490 = vpow.pop %v1489
    %v1491 = vadd.f32 %v1490, 1.0
    %v1492 = vrcp.pop %v1491
    %v1493 = vmul.f32 1.0, %v1492
    %v1494 = vmul.f32 %v1486, %v1380
    %v1495 = vmul.f32 %v1480, %v1487
    %v1496 = vadd.f32 %v1494, %v1495
    %v1497 = vtanh.pop %v1496
    %v1498 = vmul.f32 %v1493, %v1497
    %vm1499 = vcmp.gt.s32.totalorder %v85, 9
    %v1500 = vsel %vm1499, 1, 0
    %1501 = vset.pattern.permute.xlu0 0
    %1502 = vperm.xlu0 %1501, %v1500
    %v1503 = vpop.permute.xlu0 %1502
    %vm1504 = vcmp.eq.s32.totalorder %v1503, 1
    %v1505 = vsel %vm1504, %v1498, %v1379
    %v1506 = vsel %vm1504, %v1496, %v1380
    %s1507 = scalar_lea.vmem [#allocation4], 160
    %v1508 = vld [vmem:[%s1507] sm:$0xff]
    %v1509 = vld [vmem:[%s1507 + $0x8] sm:$0xff]
    %v1510 = vunpack.c.l.bf16 %v1508
    %v1511 = vunpack.c.h.bf16 %v1508
    %v1512 = vunpack.c.l.bf16 %v1509
    %v1513 = vunpack.c.h.bf16 %v1509
    %v1514 = vpack.c.bf16 %v1505, %v1505
    %1515 = vmatprep.subr.bf16.mxu0 %v220
    %1516 = vmatpush1.bf16.msra.mxu0 %v219
    %1517 = vmatprep.subr.bf16.mxu0 %v216
    %1518 = vmatpush1.bf16.msra.mxu0 %v215
    %1519 = vmatprep.subr.bf16.mxu0 %v212
    %1520 = vmatpush1.bf16.msra.mxu0 %v211
    %1521 = vmatprep.subr.bf16.mxu0 %v208
    %1522 = vmatpush1.bf16.msra.mxu0 %v207
    %1523 = vmatprep.subr.bf16.mxu0 %v204
    %1524 = vmatpush1.bf16.msra.mxu0 %v203
    %1525 = vmatprep.subr.bf16.mxu0 %v200
    %1526 = vmatpush1.bf16.msra.mxu0 %v199
    %1527 = vmatprep.subr.bf16.mxu0 %v196
    %1528 = vmatpush1.bf16.msra.mxu0 %v195
    %1529 = vmatprep.subr.bf16.mxu0 %v192
    %1530 = vmatpush1.bf16.msra.mxu0 %v191
    %1531 = vmatprep.subr.bf16.mxu0 0
    %1532 = vmatpush2.bf16.msra.mxu0 0
    %1533 = vmatprep.subr.bf16.mxu0 0
    %1534 = vmatpush2.bf16.msra.mxu0 0
    %1535 = vmatprep.subr.bf16.mxu0 0
    %1536 = vmatpush2.bf16.msra.mxu0 0
    %1537 = vmatprep.subr.bf16.mxu0 0
    %1538 = vmatpush2.bf16.msra.mxu0 0
    %1539 = vmatprep.subr.bf16.mxu0 0
    %1540 = vmatpush2.bf16.msra.mxu0 0
    %1541 = vmatprep.subr.bf16.mxu0 0
    %1542 = vmatpush2.bf16.msra.mxu0 0
    %1543 = vmatprep.subr.bf16.mxu0 0
    %1544 = vmatpush2.bf16.msra.mxu0 0
    %1545 = vmatprep.subr.bf16.mxu0 0
    %1546 = vmatpush2.bf16.msra.mxu0 0
    %1547 = vmatprep.mubr.bf16.mxu0 0
    %1548 = vmatmul.mubr.bf16.gmra.mxu0 %v1514
    %v1549 = vpop.f32.mrf.mxu0
    %v1550 = vadd.f32 0.0, %v1549
    %v1551 = vpop.f32.mrf.mxu0
    %v1552 = vadd.f32 0.0, %v1551
    %v1553 = vpop.f32.mrf.mxu0
    %v1554 = vpop.f32.mrf.mxu0
    %1555 = vdwg.mxu0
    %1556 = vmatprep.subr.bf16.mxu0 %v222
    %1557 = vmatpush1.bf16.msra.mxu0 %v221
    %1558 = vmatprep.subr.bf16.mxu0 %v218
    %1559 = vmatpush1.bf16.msra.mxu0 %v217
    %1560 = vmatprep.subr.bf16.mxu0 %v214
    %1561 = vmatpush1.bf16.msra.mxu0 %v213
    %1562 = vmatprep.subr.bf16.mxu0 %v210
    %1563 = vmatpush1.bf16.msra.mxu0 %v209
    %1564 = vmatprep.subr.bf16.mxu0 %v206
    %1565 = vmatpush1.bf16.msra.mxu0 %v205
    %1566 = vmatprep.subr.bf16.mxu0 %v202
    %1567 = vmatpush1.bf16.msra.mxu0 %v201
    %1568 = vmatprep.subr.bf16.mxu0 %v198
    %1569 = vmatpush1.bf16.msra.mxu0 %v197
    %1570 = vmatprep.subr.bf16.mxu0 %v194
    %1571 = vmatpush1.bf16.msra.mxu0 %v193
    %1572 = vmatprep.subr.bf16.mxu0 0
    %1573 = vmatpush2.bf16.msra.mxu0 0
    %1574 = vmatprep.subr.bf16.mxu0 0
    %1575 = vmatpush2.bf16.msra.mxu0 0
    %1576 = vmatprep.subr.bf16.mxu0 0
    %1577 = vmatpush2.bf16.msra.mxu0 0
    %1578 = vmatprep.subr.bf16.mxu0 0
    %1579 = vmatpush2.bf16.msra.mxu0 0
    %1580 = vmatprep.subr.bf16.mxu0 0
    %1581 = vmatpush2.bf16.msra.mxu0 0
    %1582 = vmatprep.subr.bf16.mxu0 0
    %1583 = vmatpush2.bf16.msra.mxu0 0
    %1584 = vmatprep.subr.bf16.mxu0 0
    %1585 = vmatpush2.bf16.msra.mxu0 0
    %1586 = vmatprep.subr.bf16.mxu0 0
    %1587 = vmatpush2.bf16.msra.mxu0 0
    %1588 = vmatprep.mubr.bf16.mxu0 0
    %1589 = vmatmul.mubr.bf16.gmra.mxu0 %v1514
    %v1590 = vpop.f32.mrf.mxu0
    %v1591 = vadd.f32 0.0, %v1590
    %v1592 = vpop.f32.mrf.mxu0
    %v1593 = vadd.f32 0.0, %v1592
    %v1594 = vpop.f32.mrf.mxu0
    %v1595 = vpop.f32.mrf.mxu0
    %1596 = vdwg.mxu0
    %v1597 = vadd.f32 %v1510, %v1550
    %v1598 = vadd.f32 %v1511, %v1552
    %v1599 = vadd.f32 %v1512, %v1591
    %v1600 = vadd.f32 %v1513, %v1593
    %v1601 = vxor.u32 %v1597, 2147483648
    %v1602 = vmul.f32 %v1601, 1.442695
    %v1603 = vpow.pop %v1602
    %v1604 = vadd.f32 %v1603, 1.0
    %v1605 = vrcp.pop %v1604
    %v1606 = vmul.f32 1.0, %v1605
    %v1607 = vxor.u32 %v1598, 2147483648
    %v1608 = vmul.f32 %v1607, 1.442695
    %v1609 = vpow.pop %v1608
    %v1610 = vadd.f32 %v1609, 1.0
    %v1611 = vrcp.pop %v1610
    %v1612 = vmul.f32 1.0, %v1611
    %v1613 = vtanh.pop %v1599
    %v1614 = vxor.u32 %v1600, 2147483648
    %v1615 = vmul.f32 %v1614, 1.442695
    %v1616 = vpow.pop %v1615
    %v1617 = vadd.f32 %v1616, 1.0
    %v1618 = vrcp.pop %v1617
    %v1619 = vmul.f32 1.0, %v1618
    %v1620 = vmul.f32 %v1612, %v1506
    %v1621 = vmul.f32 %v1606, %v1613
    %v1622 = vadd.f32 %v1620, %v1621
    %v1623 = vtanh.pop %v1622
    %v1624 = vmul.f32 %v1619, %v1623
    %vm1625 = vcmp.gt.s32.totalorder %v85, 10
    %v1626 = vsel %vm1625, 1, 0
    %1627 = vset.pattern.permute.xlu0 0
    %1628 = vperm.xlu0 %1627, %v1626
    %v1629 = vpop.permute.xlu0 %1628
    %vm1630 = vcmp.eq.s32.totalorder %v1629, 1
    %v1631 = vsel %vm1630, %v1624, %v1505
    %v1632 = vsel %vm1630, %v1622, %v1506
    %s1633 = scalar_lea.vmem [#allocation4], 176
    %v1634 = vld [vmem:[%s1633] sm:$0xff]
    %v1635 = vld [vmem:[%s1633 + $0x8] sm:$0xff]
    %v1636 = vunpack.c.l.bf16 %v1634
    %v1637 = vunpack.c.h.bf16 %v1634
    %v1638 = vunpack.c.l.bf16 %v1635
    %v1639 = vunpack.c.h.bf16 %v1635
    %v1640 = vpack.c.bf16 %v1631, %v1631
    %1641 = vmatprep.subr.bf16.mxu0 %v220
    %1642 = vmatpush1.bf16.msra.mxu0 %v219
    %1643 = vmatprep.subr.bf16.mxu0 %v216
    %1644 = vmatpush1.bf16.msra.mxu0 %v215
    %1645 = vmatprep.subr.bf16.mxu0 %v212
    %1646 = vmatpush1.bf16.msra.mxu0 %v211
    %1647 = vmatprep.subr.bf16.mxu0 %v208
    %1648 = vmatpush1.bf16.msra.mxu0 %v207
    %1649 = vmatprep.subr.bf16.mxu0 %v204
    %1650 = vmatpush1.bf16.msra.mxu0 %v203
    %1651 = vmatprep.subr.bf16.mxu0 %v200
    %1652 = vmatpush1.bf16.msra.mxu0 %v199
    %1653 = vmatprep.subr.bf16.mxu0 %v196
    %1654 = vmatpush1.bf16.msra.mxu0 %v195
    %1655 = vmatprep.subr.bf16.mxu0 %v192
    %1656 = vmatpush1.bf16.msra.mxu0 %v191
    %1657 = vmatprep.subr.bf16.mxu0 0
    %1658 = vmatpush2.bf16.msra.mxu0 0
    %1659 = vmatprep.subr.bf16.mxu0 0
    %1660 = vmatpush2.bf16.msra.mxu0 0
    %1661 = vmatprep.subr.bf16.mxu0 0
    %1662 = vmatpush2.bf16.msra.mxu0 0
    %1663 = vmatprep.subr.bf16.mxu0 0
    %1664 = vmatpush2.bf16.msra.mxu0 0
    %1665 = vmatprep.subr.bf16.mxu0 0
    %1666 = vmatpush2.bf16.msra.mxu0 0
    %1667 = vmatprep.subr.bf16.mxu0 0
    %1668 = vmatpush2.bf16.msra.mxu0 0
    %1669 = vmatprep.subr.bf16.mxu0 0
    %1670 = vmatpush2.bf16.msra.mxu0 0
    %1671 = vmatprep.subr.bf16.mxu0 0
    %1672 = vmatpush2.bf16.msra.mxu0 0
    %1673 = vmatprep.mubr.bf16.mxu0 0
    %1674 = vmatmul.mubr.bf16.gmra.mxu0 %v1640
    %v1675 = vpop.f32.mrf.mxu0
    %v1676 = vadd.f32 0.0, %v1675
    %v1677 = vpop.f32.mrf.mxu0
    %v1678 = vadd.f32 0.0, %v1677
    %v1679 = vpop.f32.mrf.mxu0
    %v1680 = vpop.f32.mrf.mxu0
    %1681 = vdwg.mxu0
    %1682 = vmatprep.subr.bf16.mxu0 %v222
    %1683 = vmatpush1.bf16.msra.mxu0 %v221
    %1684 = vmatprep.subr.bf16.mxu0 %v218
    %1685 = vmatpush1.bf16.msra.mxu0 %v217
    %1686 = vmatprep.subr.bf16.mxu0 %v214
    %1687 = vmatpush1.bf16.msra.mxu0 %v213
    %1688 = vmatprep.subr.bf16.mxu0 %v210
    %1689 = vmatpush1.bf16.msra.mxu0 %v209
    %1690 = vmatprep.subr.bf16.mxu0 %v206
    %1691 = vmatpush1.bf16.msra.mxu0 %v205
    %1692 = vmatprep.subr.bf16.mxu0 %v202
    %1693 = vmatpush1.bf16.msra.mxu0 %v201
    %1694 = vmatprep.subr.bf16.mxu0 %v198
    %1695 = vmatpush1.bf16.msra.mxu0 %v197
    %1696 = vmatprep.subr.bf16.mxu0 %v194
    %1697 = vmatpush1.bf16.msra.mxu0 %v193
    %1698 = vmatprep.subr.bf16.mxu0 0
    %1699 = vmatpush2.bf16.msra.mxu0 0
    %1700 = vmatprep.subr.bf16.mxu0 0
    %1701 = vmatpush2.bf16.msra.mxu0 0
    %1702 = vmatprep.subr.bf16.mxu0 0
    %1703 = vmatpush2.bf16.msra.mxu0 0
    %1704 = vmatprep.subr.bf16.mxu0 0
    %1705 = vmatpush2.bf16.msra.mxu0 0
    %1706 = vmatprep.subr.bf16.mxu0 0
    %1707 = vmatpush2.bf16.msra.mxu0 0
    %1708 = vmatprep.subr.bf16.mxu0 0
    %1709 = vmatpush2.bf16.msra.mxu0 0
    %1710 = vmatprep.subr.bf16.mxu0 0
    %1711 = vmatpush2.bf16.msra.mxu0 0
    %1712 = vmatprep.subr.bf16.mxu0 0
    %1713 = vmatpush2.bf16.msra.mxu0 0
    %1714 = vmatprep.mubr.bf16.mxu0 0
    %1715 = vmatmul.mubr.bf16.gmra.mxu0 %v1640
    %v1716 = vpop.f32.mrf.mxu0
    %v1717 = vadd.f32 0.0, %v1716
    %v1718 = vpop.f32.mrf.mxu0
    %v1719 = vadd.f32 0.0, %v1718
    %v1720 = vpop.f32.mrf.mxu0
    %v1721 = vpop.f32.mrf.mxu0
    %1722 = vdwg.mxu0
    %v1723 = vadd.f32 %v1636, %v1676
    %v1724 = vadd.f32 %v1637, %v1678
    %v1725 = vadd.f32 %v1638, %v1717
    %v1726 = vadd.f32 %v1639, %v1719
    %v1727 = vxor.u32 %v1723, 2147483648
    %v1728 = vmul.f32 %v1727, 1.442695
    %v1729 = vpow.pop %v1728
    %v1730 = vadd.f32 %v1729, 1.0
    %v1731 = vrcp.pop %v1730
    %v1732 = vmul.f32 1.0, %v1731
    %v1733 = vxor.u32 %v1724, 2147483648
    %v1734 = vmul.f32 %v1733, 1.442695
    %v1735 = vpow.pop %v1734
    %v1736 = vadd.f32 %v1735, 1.0
    %v1737 = vrcp.pop %v1736
    %v1738 = vmul.f32 1.0, %v1737
    %v1739 = vtanh.pop %v1725
    %v1740 = vxor.u32 %v1726, 2147483648
    %v1741 = vmul.f32 %v1740, 1.442695
    %v1742 = vpow.pop %v1741
    %v1743 = vadd.f32 %v1742, 1.0
    %v1744 = vrcp.pop %v1743
    %v1745 = vmul.f32 1.0, %v1744
    %v1746 = vmul.f32 %v1738, %v1632
    %v1747 = vmul.f32 %v1732, %v1739
    %v1748 = vadd.f32 %v1746, %v1747
    %v1749 = vtanh.pop %v1748
    %v1750 = vmul.f32 %v1745, %v1749
    %vm1751 = vcmp.gt.s32.totalorder %v85, 11
    %v1752 = vsel %vm1751, 1, 0
    %1753 = vset.pattern.permute.xlu0 0
    %1754 = vperm.xlu0 %1753, %v1752
    %v1755 = vpop.permute.xlu0 %1754
    %vm1756 = vcmp.eq.s32.totalorder %v1755, 1
    %v1757 = vsel %vm1756, %v1750, %v1631
    %v1758 = vsel %vm1756, %v1748, %v1632
    %s1759 = scalar_lea.vmem [#allocation4], 192
    %v1760 = vld [vmem:[%s1759] sm:$0xff]
    %v1761 = vld [vmem:[%s1759 + $0x8] sm:$0xff]
    %v1762 = vunpack.c.l.bf16 %v1760
    %v1763 = vunpack.c.h.bf16 %v1760
    %v1764 = vunpack.c.l.bf16 %v1761
    %v1765 = vunpack.c.h.bf16 %v1761
    %v1766 = vpack.c.bf16 %v1757, %v1757
    %1767 = vmatprep.subr.bf16.mxu0 %v220
    %1768 = vmatpush1.bf16.msra.mxu0 %v219
    %1769 = vmatprep.subr.bf16.mxu0 %v216
    %1770 = vmatpush1.bf16.msra.mxu0 %v215
    %1771 = vmatprep.subr.bf16.mxu0 %v212
    %1772 = vmatpush1.bf16.msra.mxu0 %v211
    %1773 = vmatprep.subr.bf16.mxu0 %v208
    %1774 = vmatpush1.bf16.msra.mxu0 %v207
    %1775 = vmatprep.subr.bf16.mxu0 %v204
    %1776 = vmatpush1.bf16.msra.mxu0 %v203
    %1777 = vmatprep.subr.bf16.mxu0 %v200
    %1778 = vmatpush1.bf16.msra.mxu0 %v199
    %1779 = vmatprep.subr.bf16.mxu0 %v196
    %1780 = vmatpush1.bf16.msra.mxu0 %v195
    %1781 = vmatprep.subr.bf16.mxu0 %v192
    %1782 = vmatpush1.bf16.msra.mxu0 %v191
    %1783 = vmatprep.subr.bf16.mxu0 0
    %1784 = vmatpush2.bf16.msra.mxu0 0
    %1785 = vmatprep.subr.bf16.mxu0 0
    %1786 = vmatpush2.bf16.msra.mxu0 0
    %1787 = vmatprep.subr.bf16.mxu0 0
    %1788 = vmatpush2.bf16.msra.mxu0 0
    %1789 = vmatprep.subr.bf16.mxu0 0
    %1790 = vmatpush2.bf16.msra.mxu0 0
    %1791 = vmatprep.subr.bf16.mxu0 0
    %1792 = vmatpush2.bf16.msra.mxu0 0
    %1793 = vmatprep.subr.bf16.mxu0 0
    %1794 = vmatpush2.bf16.msra.mxu0 0
    %1795 = vmatprep.subr.bf16.mxu0 0
    %1796 = vmatpush2.bf16.msra.mxu0 0
    %1797 = vmatprep.subr.bf16.mxu0 0
    %1798 = vmatpush2.bf16.msra.mxu0 0
    %1799 = vmatprep.mubr.bf16.mxu0 0
    %1800 = vmatmul.mubr.bf16.gmra.mxu0 %v1766
    %v1801 = vpop.f32.mrf.mxu0
    %v1802 = vadd.f32 0.0, %v1801
    %v1803 = vpop.f32.mrf.mxu0
    %v1804 = vadd.f32 0.0, %v1803
    %v1805 = vpop.f32.mrf.mxu0
    %v1806 = vpop.f32.mrf.mxu0
    %1807 = vdwg.mxu0
    %1808 = vmatprep.subr.bf16.mxu0 %v222
    %1809 = vmatpush1.bf16.msra.mxu0 %v221
    %1810 = vmatprep.subr.bf16.mxu0 %v218
    %1811 = vmatpush1.bf16.msra.mxu0 %v217
    %1812 = vmatprep.subr.bf16.mxu0 %v214
    %1813 = vmatpush1.bf16.msra.mxu0 %v213
    %1814 = vmatprep.subr.bf16.mxu0 %v210
    %1815 = vmatpush1.bf16.msra.mxu0 %v209
    %1816 = vmatprep.subr.bf16.mxu0 %v206
    %1817 = vmatpush1.bf16.msra.mxu0 %v205
    %1818 = vmatprep.subr.bf16.mxu0 %v202
    %1819 = vmatpush1.bf16.msra.mxu0 %v201
    %1820 = vmatprep.subr.bf16.mxu0 %v198
    %1821 = vmatpush1.bf16.msra.mxu0 %v197
    %1822 = vmatprep.subr.bf16.mxu0 %v194
    %1823 = vmatpush1.bf16.msra.mxu0 %v193
    %1824 = vmatprep.subr.bf16.mxu0 0
    %1825 = vmatpush2.bf16.msra.mxu0 0
    %1826 = vmatprep.subr.bf16.mxu0 0
    %1827 = vmatpush2.bf16.msra.mxu0 0
    %1828 = vmatprep.subr.bf16.mxu0 0
    %1829 = vmatpush2.bf16.msra.mxu0 0
    %1830 = vmatprep.subr.bf16.mxu0 0
    %1831 = vmatpush2.bf16.msra.mxu0 0
    %1832 = vmatprep.subr.bf16.mxu0 0
    %1833 = vmatpush2.bf16.msra.mxu0 0
    %1834 = vmatprep.subr.bf16.mxu0 0
    %1835 = vmatpush2.bf16.msra.mxu0 0
    %1836 = vmatprep.subr.bf16.mxu0 0
    %1837 = vmatpush2.bf16.msra.mxu0 0
    %1838 = vmatprep.subr.bf16.mxu0 0
    %1839 = vmatpush2.bf16.msra.mxu0 0
    %1840 = vmatprep.mubr.bf16.mxu0 0
    %1841 = vmatmul.mubr.bf16.gmra.mxu0 %v1766
    %v1842 = vpop.f32.mrf.mxu0
    %v1843 = vadd.f32 0.0, %v1842
    %v1844 = vpop.f32.mrf.mxu0
    %v1845 = vadd.f32 0.0, %v1844
    %v1846 = vpop.f32.mrf.mxu0
    %v1847 = vpop.f32.mrf.mxu0
    %1848 = vdwg.mxu0
    %v1849 = vadd.f32 %v1762, %v1802
    %v1850 = vadd.f32 %v1763, %v1804
    %v1851 = vadd.f32 %v1764, %v1843
    %v1852 = vadd.f32 %v1765, %v1845
    %v1853 = vxor.u32 %v1849, 2147483648
    %v1854 = vmul.f32 %v1853, 1.442695
    %v1855 = vpow.pop %v1854
    %v1856 = vadd.f32 %v1855, 1.0
    %v1857 = vrcp.pop %v1856
    %v1858 = vmul.f32 1.0, %v1857
    %v1859 = vxor.u32 %v1850, 2147483648
    %v1860 = vmul.f32 %v1859, 1.442695
    %v1861 = vpow.pop %v1860
    %v1862 = vadd.f32 %v1861, 1.0
    %v1863 = vrcp.pop %v1862
    %v1864 = vmul.f32 1.0, %v1863
    %v1865 = vtanh.pop %v1851
    %v1866 = vxor.u32 %v1852, 2147483648
    %v1867 = vmul.f32 %v1866, 1.442695
    %v1868 = vpow.pop %v1867
    %v1869 = vadd.f32 %v1868, 1.0
    %v1870 = vrcp.pop %v1869
    %v1871 = vmul.f32 1.0, %v1870
    %v1872 = vmul.f32 %v1864, %v1758
    %v1873 = vmul.f32 %v1858, %v1865
    %v1874 = vadd.f32 %v1872, %v1873
    %v1875 = vtanh.pop %v1874
    %v1876 = vmul.f32 %v1871, %v1875
    %vm1877 = vcmp.gt.s32.totalorder %v85, 12
    %v1878 = vsel %vm1877, 1, 0
    %1879 = vset.pattern.permute.xlu0 0
    %1880 = vperm.xlu0 %1879, %v1878
    %v1881 = vpop.permute.xlu0 %1880
    %vm1882 = vcmp.eq.s32.totalorder %v1881, 1
    %v1883 = vsel %vm1882, %v1876, %v1757
    %v1884 = vsel %vm1882, %v1874, %v1758
    %s1885 = scalar_lea.vmem [#allocation4], 208
    %v1886 = vld [vmem:[%s1885] sm:$0xff]
    %v1887 = vld [vmem:[%s1885 + $0x8] sm:$0xff]
    %v1888 = vunpack.c.l.bf16 %v1886
    %v1889 = vunpack.c.h.bf16 %v1886
    %v1890 = vunpack.c.l.bf16 %v1887
    %v1891 = vunpack.c.h.bf16 %v1887
    %v1892 = vpack.c.bf16 %v1883, %v1883
    %1893 = vmatprep.subr.bf16.mxu0 %v220
    %1894 = vmatpush1.bf16.msra.mxu0 %v219
    %1895 = vmatprep.subr.bf16.mxu0 %v216
    %1896 = vmatpush1.bf16.msra.mxu0 %v215
    %1897 = vmatprep.subr.bf16.mxu0 %v212
    %1898 = vmatpush1.bf16.msra.mxu0 %v211
    %1899 = vmatprep.subr.bf16.mxu0 %v208
    %1900 = vmatpush1.bf16.msra.mxu0 %v207
    %1901 = vmatprep.subr.bf16.mxu0 %v204
    %1902 = vmatpush1.bf16.msra.mxu0 %v203
    %1903 = vmatprep.subr.bf16.mxu0 %v200
    %1904 = vmatpush1.bf16.msra.mxu0 %v199
    %1905 = vmatprep.subr.bf16.mxu0 %v196
    %1906 = vmatpush1.bf16.msra.mxu0 %v195
    %1907 = vmatprep.subr.bf16.mxu0 %v192
    %1908 = vmatpush1.bf16.msra.mxu0 %v191
    %1909 = vmatprep.subr.bf16.mxu0 0
    %1910 = vmatpush2.bf16.msra.mxu0 0
    %1911 = vmatprep.subr.bf16.mxu0 0
    %1912 = vmatpush2.bf16.msra.mxu0 0
    %1913 = vmatprep.subr.bf16.mxu0 0
    %1914 = vmatpush2.bf16.msra.mxu0 0
    %1915 = vmatprep.subr.bf16.mxu0 0
    %1916 = vmatpush2.bf16.msra.mxu0 0
    %1917 = vmatprep.subr.bf16.mxu0 0
    %1918 = vmatpush2.bf16.msra.mxu0 0
    %1919 = vmatprep.subr.bf16.mxu0 0
    %1920 = vmatpush2.bf16.msra.mxu0 0
    %1921 = vmatprep.subr.bf16.mxu0 0
    %1922 = vmatpush2.bf16.msra.mxu0 0
    %1923 = vmatprep.subr.bf16.mxu0 0
    %1924 = vmatpush2.bf16.msra.mxu0 0
    %1925 = vmatprep.mubr.bf16.mxu0 0
    %1926 = vmatmul.mubr.bf16.gmra.mxu0 %v1892
    %v1927 = vpop.f32.mrf.mxu0
    %v1928 = vadd.f32 0.0, %v1927
    %v1929 = vpop.f32.mrf.mxu0
    %v1930 = vadd.f32 0.0, %v1929
    %v1931 = vpop.f32.mrf.mxu0
    %v1932 = vpop.f32.mrf.mxu0
    %1933 = vdwg.mxu0
    %1934 = vmatprep.subr.bf16.mxu0 %v222
    %1935 = vmatpush1.bf16.msra.mxu0 %v221
    %1936 = vmatprep.subr.bf16.mxu0 %v218
    %1937 = vmatpush1.bf16.msra.mxu0 %v217
    %1938 = vmatprep.subr.bf16.mxu0 %v214
    %1939 = vmatpush1.bf16.msra.mxu0 %v213
    %1940 = vmatprep.subr.bf16.mxu0 %v210
    %1941 = vmatpush1.bf16.msra.mxu0 %v209
    %1942 = vmatprep.subr.bf16.mxu0 %v206
    %1943 = vmatpush1.bf16.msra.mxu0 %v205
    %1944 = vmatprep.subr.bf16.mxu0 %v202
    %1945 = vmatpush1.bf16.msra.mxu0 %v201
    %1946 = vmatprep.subr.bf16.mxu0 %v198
    %1947 = vmatpush1.bf16.msra.mxu0 %v197
    %1948 = vmatprep.subr.bf16.mxu0 %v194
    %1949 = vmatpush1.bf16.msra.mxu0 %v193
    %1950 = vmatprep.subr.bf16.mxu0 0
    %1951 = vmatpush2.bf16.msra.mxu0 0
    %1952 = vmatprep.subr.bf16.mxu0 0
    %1953 = vmatpush2.bf16.msra.mxu0 0
    %1954 = vmatprep.subr.bf16.mxu0 0
    %1955 = vmatpush2.bf16.msra.mxu0 0
    %1956 = vmatprep.subr.bf16.mxu0 0
    %1957 = vmatpush2.bf16.msra.mxu0 0
    %1958 = vmatprep.subr.bf16.mxu0 0
    %1959 = vmatpush2.bf16.msra.mxu0 0
    %1960 = vmatprep.subr.bf16.mxu0 0
    %1961 = vmatpush2.bf16.msra.mxu0 0
    %1962 = vmatprep.subr.bf16.mxu0 0
    %1963 = vmatpush2.bf16.msra.mxu0 0
    %1964 = vmatprep.subr.bf16.mxu0 0
    %1965 = vmatpush2.bf16.msra.mxu0 0
    %1966 = vmatprep.mubr.bf16.mxu0 0
    %1967 = vmatmul.mubr.bf16.gmra.mxu0 %v1892
    %v1968 = vpop.f32.mrf.mxu0
    %v1969 = vadd.f32 0.0, %v1968
    %v1970 = vpop.f32.mrf.mxu0
    %v1971 = vadd.f32 0.0, %v1970
    %v1972 = vpop.f32.mrf.mxu0
    %v1973 = vpop.f32.mrf.mxu0
    %1974 = vdwg.mxu0
    %v1975 = vadd.f32 %v1888, %v1928
    %v1976 = vadd.f32 %v1889, %v1930
    %v1977 = vadd.f32 %v1890, %v1969
    %v1978 = vadd.f32 %v1891, %v1971
    %v1979 = vxor.u32 %v1975, 2147483648
    %v1980 = vmul.f32 %v1979, 1.442695
    %v1981 = vpow.pop %v1980
    %v1982 = vadd.f32 %v1981, 1.0
    %v1983 = vrcp.pop %v1982
    %v1984 = vmul.f32 1.0, %v1983
    %v1985 = vxor.u32 %v1976, 2147483648
    %v1986 = vmul.f32 %v1985, 1.442695
    %v1987 = vpow.pop %v1986
    %v1988 = vadd.f32 %v1987, 1.0
    %v1989 = vrcp.pop %v1988
    %v1990 = vmul.f32 1.0, %v1989
    %v1991 = vtanh.pop %v1977
    %v1992 = vxor.u32 %v1978, 2147483648
    %v1993 = vmul.f32 %v1992, 1.442695
    %v1994 = vpow.pop %v1993
    %v1995 = vadd.f32 %v1994, 1.0
    %v1996 = vrcp.pop %v1995
    %v1997 = vmul.f32 1.0, %v1996
    %v1998 = vmul.f32 %v1990, %v1884
    %v1999 = vmul.f32 %v1984, %v1991
    %v2000 = vadd.f32 %v1998, %v1999
    %v2001 = vtanh.pop %v2000
    %v2002 = vmul.f32 %v1997, %v2001
    %vm2003 = vcmp.gt.s32.totalorder %v85, 13
    %v2004 = vsel %vm2003, 1, 0
    %2005 = vset.pattern.permute.xlu0 0
    %2006 = vperm.xlu0 %2005, %v2004
    %v2007 = vpop.permute.xlu0 %2006
    %vm2008 = vcmp.eq.s32.totalorder %v2007, 1
    %v2009 = vsel %vm2008, %v2002, %v1883
    %v2010 = vsel %vm2008, %v2000, %v1884
    %s2011 = scalar_lea.vmem [#allocation4], 224
    %v2012 = vld [vmem:[%s2011] sm:$0xff]
    %v2013 = vld [vmem:[%s2011 + $0x8] sm:$0xff]
    %v2014 = vunpack.c.l.bf16 %v2012
    %v2015 = vunpack.c.h.bf16 %v2012
    %v2016 = vunpack.c.l.bf16 %v2013
    %v2017 = vunpack.c.h.bf16 %v2013
    %v2018 = vpack.c.bf16 %v2009, %v2009
    %2019 = vmatprep.subr.bf16.mxu0 %v220
    %2020 = vmatpush1.bf16.msra.mxu0 %v219
    %2021 = vmatprep.subr.bf16.mxu0 %v216
    %2022 = vmatpush1.bf16.msra.mxu0 %v215
    %2023 = vmatprep.subr.bf16.mxu0 %v212
    %2024 = vmatpush1.bf16.msra.mxu0 %v211
    %2025 = vmatprep.subr.bf16.mxu0 %v208
    %2026 = vmatpush1.bf16.msra.mxu0 %v207
    %2027 = vmatprep.subr.bf16.mxu0 %v204
    %2028 = vmatpush1.bf16.msra.mxu0 %v203
    %2029 = vmatprep.subr.bf16.mxu0 %v200
    %2030 = vmatpush1.bf16.msra.mxu0 %v199
    %2031 = vmatprep.subr.bf16.mxu0 %v196
    %2032 = vmatpush1.bf16.msra.mxu0 %v195
    %2033 = vmatprep.subr.bf16.mxu0 %v192
    %2034 = vmatpush1.bf16.msra.mxu0 %v191
    %2035 = vmatprep.subr.bf16.mxu0 0
    %2036 = vmatpush2.bf16.msra.mxu0 0
    %2037 = vmatprep.subr.bf16.mxu0 0
    %2038 = vmatpush2.bf16.msra.mxu0 0
    %2039 = vmatprep.subr.bf16.mxu0 0
    %2040 = vmatpush2.bf16.msra.mxu0 0
    %2041 = vmatprep.subr.bf16.mxu0 0
    %2042 = vmatpush2.bf16.msra.mxu0 0
    %2043 = vmatprep.subr.bf16.mxu0 0
    %2044 = vmatpush2.bf16.msra.mxu0 0
    %2045 = vmatprep.subr.bf16.mxu0 0
    %2046 = vmatpush2.bf16.msra.mxu0 0
    %2047 = vmatprep.subr.bf16.mxu0 0
    %2048 = vmatpush2.bf16.msra.mxu0 0
    %2049 = vmatprep.subr.bf16.mxu0 0
    %2050 = vmatpush2.bf16.msra.mxu0 0
    %2051 = vmatprep.mubr.bf16.mxu0 0
    %2052 = vmatmul.mubr.bf16.gmra.mxu0 %v2018
    %v2053 = vpop.f32.mrf.mxu0
    %v2054 = vadd.f32 0.0, %v2053
    %v2055 = vpop.f32.mrf.mxu0
    %v2056 = vadd.f32 0.0, %v2055
    %v2057 = vpop.f32.mrf.mxu0
    %v2058 = vpop.f32.mrf.mxu0
    %2059 = vdwg.mxu0
    %2060 = vmatprep.subr.bf16.mxu0 %v222
    %2061 = vmatpush1.bf16.msra.mxu0 %v221
    %2062 = vmatprep.subr.bf16.mxu0 %v218
    %2063 = vmatpush1.bf16.msra.mxu0 %v217
    %2064 = vmatprep.subr.bf16.mxu0 %v214
    %2065 = vmatpush1.bf16.msra.mxu0 %v213
    %2066 = vmatprep.subr.bf16.mxu0 %v210
    %2067 = vmatpush1.bf16.msra.mxu0 %v209
    %2068 = vmatprep.subr.bf16.mxu0 %v206
    %2069 = vmatpush1.bf16.msra.mxu0 %v205
    %2070 = vmatprep.subr.bf16.mxu0 %v202
    %2071 = vmatpush1.bf16.msra.mxu0 %v201
    %2072 = vmatprep.subr.bf16.mxu0 %v198
    %2073 = vmatpush1.bf16.msra.mxu0 %v197
    %2074 = vmatprep.subr.bf16.mxu0 %v194
    %2075 = vmatpush1.bf16.msra.mxu0 %v193
    %2076 = vmatprep.subr.bf16.mxu0 0
    %2077 = vmatpush2.bf16.msra.mxu0 0
    %2078 = vmatprep.subr.bf16.mxu0 0
    %2079 = vmatpush2.bf16.msra.mxu0 0
    %2080 = vmatprep.subr.bf16.mxu0 0
    %2081 = vmatpush2.bf16.msra.mxu0 0
    %2082 = vmatprep.subr.bf16.mxu0 0
    %2083 = vmatpush2.bf16.msra.mxu0 0
    %2084 = vmatprep.subr.bf16.mxu0 0
    %2085 = vmatpush2.bf16.msra.mxu0 0
    %2086 = vmatprep.subr.bf16.mxu0 0
    %2087 = vmatpush2.bf16.msra.mxu0 0
    %2088 = vmatprep.subr.bf16.mxu0 0
    %2089 = vmatpush2.bf16.msra.mxu0 0
    %2090 = vmatprep.subr.bf16.mxu0 0
    %2091 = vmatpush2.bf16.msra.mxu0 0
    %2092 = vmatprep.mubr.bf16.mxu0 0
    %2093 = vmatmul.mubr.bf16.gmra.mxu0 %v2018
    %v2094 = vpop.f32.mrf.mxu0
    %v2095 = vadd.f32 0.0, %v2094
    %v2096 = vpop.f32.mrf.mxu0
    %v2097 = vadd.f32 0.0, %v2096
    %v2098 = vpop.f32.mrf.mxu0
    %v2099 = vpop.f32.mrf.mxu0
    %2100 = vdwg.mxu0
    %v2101 = vadd.f32 %v2014, %v2054
    %v2102 = vadd.f32 %v2015, %v2056
    %v2103 = vadd.f32 %v2016, %v2095
    %v2104 = vadd.f32 %v2017, %v2097
    %v2105 = vxor.u32 %v2101, 2147483648
    %v2106 = vmul.f32 %v2105, 1.442695
    %v2107 = vpow.pop %v2106
    %v2108 = vadd.f32 %v2107, 1.0
    %v2109 = vrcp.pop %v2108
    %v2110 = vmul.f32 1.0, %v2109
    %v2111 = vxor.u32 %v2102, 2147483648
    %v2112 = vmul.f32 %v2111, 1.442695
    %v2113 = vpow.pop %v2112
    %v2114 = vadd.f32 %v2113, 1.0
    %v2115 = vrcp.pop %v2114
    %v2116 = vmul.f32 1.0, %v2115
    %v2117 = vtanh.pop %v2103
    %v2118 = vxor.u32 %v2104, 2147483648
    %v2119 = vmul.f32 %v2118, 1.442695
    %v2120 = vpow.pop %v2119
    %v2121 = vadd.f32 %v2120, 1.0
    %v2122 = vrcp.pop %v2121
    %v2123 = vmul.f32 1.0, %v2122
    %v2124 = vmul.f32 %v2116, %v2010
    %v2125 = vmul.f32 %v2110, %v2117
    %v2126 = vadd.f32 %v2124, %v2125
    %v2127 = vtanh.pop %v2126
    %v2128 = vmul.f32 %v2123, %v2127
    %vm2129 = vcmp.gt.s32.totalorder %v85, 14
    %v2130 = vsel %vm2129, 1, 0
    %2131 = vset.pattern.permute.xlu0 0
    %2132 = vperm.xlu0 %2131, %v2130
    %v2133 = vpop.permute.xlu0 %2132
    %vm2134 = vcmp.eq.s32.totalorder %v2133, 1
    %v2135 = vsel %vm2134, %v2128, %v2009
    %v2136 = vsel %vm2134, %v2126, %v2010
    %s2137 = scalar_lea.vmem [#allocation4], 240
    %v2138 = vld [vmem:[%s2137] sm:$0xff]
    %v2139 = vld [vmem:[%s2137 + $0x8] sm:$0xff]
    %v2140 = vunpack.c.l.bf16 %v2138
    %v2141 = vunpack.c.h.bf16 %v2138
    %v2142 = vunpack.c.l.bf16 %v2139
    %v2143 = vunpack.c.h.bf16 %v2139
    %v2144 = vpack.c.bf16 %v2135, %v2135
    %2145 = vmatprep.subr.bf16.mxu0 %v220
    %2146 = vmatpush1.bf16.msra.mxu0 %v219
    %2147 = vmatprep.subr.bf16.mxu0 %v216
    %2148 = vmatpush1.bf16.msra.mxu0 %v215
    %2149 = vmatprep.subr.bf16.mxu0 %v212
    %2150 = vmatpush1.bf16.msra.mxu0 %v211
    %2151 = vmatprep.subr.bf16.mxu0 %v208
    %2152 = vmatpush1.bf16.msra.mxu0 %v207
    %2153 = vmatprep.subr.bf16.mxu0 %v204
    %2154 = vmatpush1.bf16.msra.mxu0 %v203
    %2155 = vmatprep.subr.bf16.mxu0 %v200
    %2156 = vmatpush1.bf16.msra.mxu0 %v199
    %2157 = vmatprep.subr.bf16.mxu0 %v196
    %2158 = vmatpush1.bf16.msra.mxu0 %v195
    %2159 = vmatprep.subr.bf16.mxu0 %v192
    %2160 = vmatpush1.bf16.msra.mxu0 %v191
    %2161 = vmatprep.subr.bf16.mxu0 0
    %2162 = vmatpush2.bf16.msra.mxu0 0
    %2163 = vmatprep.subr.bf16.mxu0 0
    %2164 = vmatpush2.bf16.msra.mxu0 0
    %2165 = vmatprep.subr.bf16.mxu0 0
    %2166 = vmatpush2.bf16.msra.mxu0 0
    %2167 = vmatprep.subr.bf16.mxu0 0
    %2168 = vmatpush2.bf16.msra.mxu0 0
    %2169 = vmatprep.subr.bf16.mxu0 0
    %2170 = vmatpush2.bf16.msra.mxu0 0
    %2171 = vmatprep.subr.bf16.mxu0 0
    %2172 = vmatpush2.bf16.msra.mxu0 0
    %2173 = vmatprep.subr.bf16.mxu0 0
    %2174 = vmatpush2.bf16.msra.mxu0 0
    %2175 = vmatprep.subr.bf16.mxu0 0
    %2176 = vmatpush2.bf16.msra.mxu0 0
    %2177 = vmatprep.mubr.bf16.mxu0 0
    %2178 = vmatmul.mubr.bf16.gmra.mxu0 %v2144
    %v2179 = vpop.f32.mrf.mxu0
    %v2180 = vadd.f32 0.0, %v2179
    %v2181 = vpop.f32.mrf.mxu0
    %v2182 = vadd.f32 0.0, %v2181
    %v2183 = vpop.f32.mrf.mxu0
    %v2184 = vpop.f32.mrf.mxu0
    %2185 = vdwg.mxu0
    %2186 = vmatprep.subr.bf16.mxu0 %v222
    %2187 = vmatpush1.bf16.msra.mxu0 %v221
    %2188 = vmatprep.subr.bf16.mxu0 %v218
    %2189 = vmatpush1.bf16.msra.mxu0 %v217
    %2190 = vmatprep.subr.bf16.mxu0 %v214
    %2191 = vmatpush1.bf16.msra.mxu0 %v213
    %2192 = vmatprep.subr.bf16.mxu0 %v210
    %2193 = vmatpush1.bf16.msra.mxu0 %v209
    %2194 = vmatprep.subr.bf16.mxu0 %v206
    %2195 = vmatpush1.bf16.msra.mxu0 %v205
    %2196 = vmatprep.subr.bf16.mxu0 %v202
    %2197 = vmatpush1.bf16.msra.mxu0 %v201
    %2198 = vmatprep.subr.bf16.mxu0 %v198
    %2199 = vmatpush1.bf16.msra.mxu0 %v197
    %2200 = vmatprep.subr.bf16.mxu0 %v194
    %2201 = vmatpush1.bf16.msra.mxu0 %v193
    %2202 = vmatprep.subr.bf16.mxu0 0
    %2203 = vmatpush2.bf16.msra.mxu0 0
    %2204 = vmatprep.subr.bf16.mxu0 0
    %2205 = vmatpush2.bf16.msra.mxu0 0
    %2206 = vmatprep.subr.bf16.mxu0 0
    %2207 = vmatpush2.bf16.msra.mxu0 0
    %2208 = vmatprep.subr.bf16.mxu0 0
    %2209 = vmatpush2.bf16.msra.mxu0 0
    %2210 = vmatprep.subr.bf16.mxu0 0
    %2211 = vmatpush2.bf16.msra.mxu0 0
    %2212 = vmatprep.subr.bf16.mxu0 0
    %2213 = vmatpush2.bf16.msra.mxu0 0
    %2214 = vmatprep.subr.bf16.mxu0 0
    %2215 = vmatpush2.bf16.msra.mxu0 0
    %2216 = vmatprep.subr.bf16.mxu0 0
    %2217 = vmatpush2.bf16.msra.mxu0 0
    %2218 = vmatprep.mubr.bf16.mxu0 0
    %2219 = vmatmul.mubr.bf16.gmra.mxu0 %v2144
    %v2220 = vpop.f32.mrf.mxu0
    %v2221 = vadd.f32 0.0, %v2220
    %v2222 = vpop.f32.mrf.mxu0
    %v2223 = vadd.f32 0.0, %v2222
    %v2224 = vpop.f32.mrf.mxu0
    %v2225 = vpop.f32.mrf.mxu0
    %2226 = vdwg.mxu0
    %v2227 = vadd.f32 %v2140, %v2180
    %v2228 = vadd.f32 %v2141, %v2182
    %v2229 = vadd.f32 %v2142, %v2221
    %v2230 = vadd.f32 %v2143, %v2223
    %v2231 = vxor.u32 %v2227, 2147483648
    %v2232 = vmul.f32 %v2231, 1.442695
    %v2233 = vpow.pop %v2232
    %v2234 = vadd.f32 %v2233, 1.0
    %v2235 = vrcp.pop %v2234
    %v2236 = vmul.f32 1.0, %v2235
    %v2237 = vxor.u32 %v2228, 2147483648
    %v2238 = vmul.f32 %v2237, 1.442695
    %v2239 = vpow.pop %v2238
    %v2240 = vadd.f32 %v2239, 1.0
    %v2241 = vrcp.pop %v2240
    %v2242 = vmul.f32 1.0, %v2241
    %v2243 = vtanh.pop %v2229
    %v2244 = vxor.u32 %v2230, 2147483648
    %v2245 = vmul.f32 %v2244, 1.442695
    %v2246 = vpow.pop %v2245
    %v2247 = vadd.f32 %v2246, 1.0
    %v2248 = vrcp.pop %v2247
    %v2249 = vmul.f32 1.0, %v2248
    %v2250 = vmul.f32 %v2242, %v2136
    %v2251 = vmul.f32 %v2236, %v2243
    %v2252 = vadd.f32 %v2250, %v2251
    %v2253 = vtanh.pop %v2252
    %v2254 = vmul.f32 %v2249, %v2253
    %vm2255 = vcmp.gt.s32.totalorder %v85, 15
    %v2256 = vsel %vm2255, 1, 0
    %2257 = vset.pattern.permute.xlu0 0
    %2258 = vperm.xlu0 %2257, %v2256
    %v2259 = vpop.permute.xlu0 %2258
    %vm2260 = vcmp.eq.s32.totalorder %v2259, 1
    %v2261 = vsel %vm2260, %v2254, %v2135
    %v2262 = vsel %vm2260, %v2252, %v2136
    %2263 = vst [vmem:[#allocation2] sm:$0xff] %v2261
    %2264 = vst [vmem:[#allocation3] sm:$0xff] %v2262
    // Predicated region
    $region26: #{tpu_custom_call.1} parent=1 // pred_check
      %p2265 = pneg %p44
    $region27: #{tpu_custom_call.1} parent=1 // pred_check_branch
      %2267 = sbr.rel (%p2265) target = $region29
    $region28: #{tpu_custom_call.1} parent=1 // pred_region
      %2268 = vst [vmem:[#allocation9] sm:$0xff] %v2261
    $region29: #{tpu_custom_call.1} parent=1 // pred_fallthru
      _
    // Predicated region
    $region30: #{tpu_custom_call.1} parent=1 // pred_check
      _
    $region31: #{tpu_custom_call.1} parent=1 // pred_check_branch
      %2270 = sbr.rel (0) target = $region33
    $region32: #{tpu_custom_call.1} parent=1 // pred_region
      %s2272 = ssub.s32 128, 128
      %2273 = vsyncadd [#allocation6], %s2272
      %s2275 = sshll.u32 [#allocation9], 4
      %s2276 = int_to_ptr.vmem [resolvable:$true] %s2275
      %2278 = dma.vmem_to_hbm [thread:$0]  %s2276, 128, %s3, [#allocation6]
    $region33: #{tpu_custom_call.1} parent=1 // pred_fallthru
      _
    // Predicated region
    $region34: #{tpu_custom_call.1} parent=1 // pred_check
      _
    $region35: #{tpu_custom_call.1} parent=1 // pred_check_branch
      %2280 = sbr.rel (0) target = $region37
    $region36: #{tpu_custom_call.1} parent=1 // pred_region
      %2281 = dma.done [#allocation6], 128
    $region37: #{tpu_custom_call.1} parent=1 // pred_fallthru
      _
    %2282 = vsyncpa [#allocation5], 1
    %2283 = vsyncpa [#allocation8], 1
    %2284 = vsyncpa [#allocation6], 1

</llo_original>
